<compile_context>
chip_gen: v7x
topology: tpu7x:2x2x1
jax: 0.10.0
libtpu: 0.0.40
codegen_flags: <defaults>
</compile_context>

<pallas_src>
import functools

import jax
import jax.numpy as jnp
from jax.experimental import pallas as pl
from jax.experimental.pallas import tpu as pltpu


def _round_up(x, m):
    return ((x + m - 1) // m) * m


def _vae_kernel(
    x_ref, eps_ref,
    w1_ref, b1_ref,
    w2_ref, b2_ref,
    w3132_ref, b3132_ref,
    w4_ref, b4_ref,
    w5_ref, b5_ref,
    w6_ref, b6_ref,
    w7_ref, b7_ref,
    out_ref,
    *, latent_dim, output_dim,
):
    x = x_ref[...]
    eps = eps_ref[...]

    def mxu_linear(a, w_ref, b_ref):
        # Hidden-sized layers: MXU matmul, f32 accumulate.
        return jnp.dot(a, w_ref[...], preferred_element_type=jnp.float32) + b_ref[...]

    def vpu_linear(a, w_ref, b_ref):
        # Tiny-K layers (K = 2 or 8): unrolled broadcast multiply-add on the
        # VPU, keeping them off the MXU critical path.
        w = w_ref[...]
        acc = b_ref[...]                       # (1, H) -> broadcasts on first add
        for k in range(w.shape[0]):
            acc = acc + a[:, k:k + 1] * w[k:k + 1, :]
        return acc

    # ---- encode ----
    h1 = jnp.maximum(vpu_linear(x, w1_ref, b1_ref), 0.0)           # K=2  -> VPU
    h2 = jnp.maximum(mxu_linear(h1, w2_ref, b2_ref), 0.0)
    # NB: the PyTorch module applies fc2 again here (fc3 is unused in forward).
    h3 = jnp.maximum(mxu_linear(h2, w2_ref, b2_ref), 0.0)
    # Fused mu || logvar projection: single (hidden, 2*latent) matmul.
    ml = mxu_linear(h3, w3132_ref, b3132_ref)
    mu = ml[:, :latent_dim]
    logvar = jnp.clip(ml[:, latent_dim:], -10.0, 10.0)

    # ---- reparameterize (f32 elementwise; exp goes to the EUP slot) ----
    std = jnp.exp(0.5 * logvar)
    z = mu + eps * std

    # ---- decode ----
    h4 = jnp.maximum(vpu_linear(z, w4_ref, b4_ref), 0.0)           # K=8  -> VPU
    h5 = jnp.maximum(mxu_linear(h4, w5_ref, b5_ref), 0.0)
    h6 = jnp.maximum(mxu_linear(h5, w6_ref, b6_ref), 0.0)
    recon = mxu_linear(h6, w7_ref, b7_ref)

    # ---- pack outputs into one lane-dense slab: [recon | mu | logvar | 0-pad] ----
    used = output_dim + 2 * latent_dim
    packed = jnp.concatenate([recon, mu, logvar], axis=-1)
    pad_w = out_ref.shape[1] - used
    if pad_w > 0:
        packed = jnp.concatenate(
            [packed, jnp.zeros((packed.shape[0], pad_w), packed.dtype)], axis=-1)
    out_ref[...] = packed


def vae_moon_unlab_forward(x, eps, params, *, block_batch=512):
    """Full VAE forward pass in one batch-tiled Pallas kernel.

    x:   (B, input_dim)  float32
    eps: (B, latent_dim) float32   (standard-normal noise)
    params: dict of pre-transposed weights (in, out) and biases (1, out).
    Returns (recon, mu, logvar).
    """
    B, input_dim = x.shape
    latent_dim = params["w31"].shape[1]
    output_dim = params["w7"].shape[1]

    # Fuse mu/logvar projection weights once, outside the kernel.
    w3132 = jnp.concatenate([params["w31"], params["w32"]], axis=1)   # (H, 2L)
    b3132 = jnp.concatenate([params["b31"], params["b32"]], axis=1)   # (1, 2L)

    # Batch tiling: pick the tile, pad B up to a multiple of it.
    Bt = min(block_batch, _round_up(B, 8))
    Bp = _round_up(B, Bt)
    if Bp != B:
        x = jnp.pad(x, ((0, Bp - B), (0, 0)))
        eps = jnp.pad(eps, ((0, Bp - B), (0, 0)))

    # Lane-dense packed output slab width (multiple of 128 lanes).
    used = output_dim + 2 * latent_dim
    slab_w = _round_up(used, 128)

    grid = (Bp // Bt,)

    def row_spec(width):
        return pl.BlockSpec((Bt, width), lambda i: (i, 0))

    def resident_spec(arr):
        # Full-array block, same block every step -> stays VMEM-resident.
        return pl.BlockSpec(arr.shape, lambda i: (0, 0))

    weight_args = (
        params["w1"], params["b1"],
        params["w2"], params["b2"],
        w3132, b3132,
        params["w4"], params["b4"],
        params["w5"], params["b5"],
        params["w6"], params["b6"],
        params["w7"], params["b7"],
    )

    in_specs = [row_spec(input_dim), row_spec(latent_dim)] + [
        resident_spec(a) for a in weight_args
    ]

    kernel = functools.partial(
        _vae_kernel, latent_dim=latent_dim, output_dim=output_dim)

    out = pl.pallas_call(
        kernel,
        grid=grid,
        out_shape=jax.ShapeDtypeStruct((Bp, slab_w), jnp.float32),
        in_specs=in_specs,
        out_specs=row_spec(slab_w),
        compiler_params=pltpu.CompilerParams(
            dimension_semantics=("parallel",)),
    )(x, eps, *weight_args)

    out = out[:B]
    recon = out[:, :output_dim]
    mu = out[:, output_dim:output_dim + latent_dim]
    logvar = out[:, output_dim + latent_dim:output_dim + 2 * latent_dim]
    return recon, mu, logvar


def init_params(key, hidden_dim, latent_dim, input_dim=2, output_dim=2):
    """Deterministic synthetic parameters.  Weights stored as (in, out)."""
    dims = {
        "1": (input_dim, hidden_dim),
        "2": (hidden_dim, hidden_dim),
        "3": (hidden_dim, hidden_dim),    # fc3 exists in __init__ but is unused in forward
        "31": (hidden_dim, latent_dim),
        "32": (hidden_dim, latent_dim),
        "4": (latent_dim, hidden_dim),
        "5": (hidden_dim, hidden_dim),
        "6": (hidden_dim, hidden_dim),
        "7": (hidden_dim, output_dim),
    }
    params = {}
    for name, (fin, fout) in dims.items():
        key, kw, kb = jax.random.split(key, 3)
        bound = 1.0 / jnp.sqrt(jnp.float32(fin))
        params["w" + name] = jax.random.uniform(
            kw, (fin, fout), jnp.float32, -bound, bound)
        params["b" + name] = jax.random.uniform(
            kb, (1, fout), jnp.float32, -bound, bound)
    return params


def reference_forward(x, eps, p):
    """Pure-JAX reference (identical math) for correctness checking."""
    def lin(a, w, b):
        return a @ w + b
    h1 = jax.nn.relu(lin(x, p["w1"], p["b1"]))
    h2 = jax.nn.relu(lin(h1, p["w2"], p["b2"]))
    h3 = jax.nn.relu(lin(h2, p["w2"], p["b2"]))      # fc2 applied twice (module quirk)
    mu = lin(h3, p["w31"], p["b31"])
    logvar = jnp.clip(lin(h3, p["w32"], p["b32"]), -10.0, 10.0)
    z = mu + eps * jnp.exp(0.5 * logvar)
    h4 = jax.nn.relu(lin(z, p["w4"], p["b4"]))
    h5 = jax.nn.relu(lin(h4, p["w5"], p["b5"]))
    h6 = jax.nn.relu(lin(h5, p["w6"], p["b6"]))
    return lin(h6, p["w7"], p["b7"]), mu, logvar


if __name__ == "__main__":
    # Small but grid-exercising shapes: 2 batch tiles of 128 rows.
    B = 256
    input_dim = 2
    hidden_dim = 32
    latent_dim = 8
    output_dim = 2

    key = jax.random.PRNGKey(0)
    k_params, k_x, k_eps = jax.random.split(key, 3)

    params = init_params(k_params, hidden_dim, latent_dim, input_dim, output_dim)
    x = jax.random.normal(k_x, (B, input_dim), jnp.float32)
    # TODO(synk): torch.randn_like noise is generated here in plain JAX and fed
    # to the kernel as an input so the kernel is deterministic.
    eps = jax.random.normal(k_eps, (B, latent_dim), jnp.float32)

    recon, mu, logvar = jax.block_until_ready(
        vae_moon_unlab_forward(x, eps, params, block_batch=128))

    # Correctness check against pure-JAX reference.
    recon_r, mu_r, logvar_r = reference_forward(x, eps, params)
    assert recon.shape == (B, output_dim)
    assert mu.shape == (B, latent_dim)
    assert logvar.shape == (B, latent_dim)
    assert jnp.allclose(recon, recon_r, atol=1e-5, rtol=1e-5)
    assert jnp.allclose(mu, mu_r, atol=1e-5, rtol=1e-5)
    assert jnp.allclose(logvar, logvar_r, atol=1e-5, rtol=1e-5)

    print("KERNEL_OK")
</pallas_src>

<mosaic_0001>
module attributes {stable_mosaic.version = 11 : i64} {
  func.func @_vae_kernel(%arg0: i32, %arg1: memref<128x2xf32, #tpu.memory_space<vmem>>, %arg2: memref<128x8xf32, #tpu.memory_space<vmem>>, %arg3: memref<2x32xf32, #tpu.memory_space<vmem>>, %arg4: memref<1x32xf32, #tpu.memory_space<vmem>>, %arg5: memref<32x32xf32, #tpu.memory_space<vmem>>, %arg6: memref<1x32xf32, #tpu.memory_space<vmem>>, %arg7: memref<32x16xf32, #tpu.memory_space<vmem>>, %arg8: memref<1x16xf32, #tpu.memory_space<vmem>>, %arg9: memref<8x32xf32, #tpu.memory_space<vmem>>, %arg10: memref<1x32xf32, #tpu.memory_space<vmem>>, %arg11: memref<32x32xf32, #tpu.memory_space<vmem>>, %arg12: memref<1x32xf32, #tpu.memory_space<vmem>>, %arg13: memref<32x32xf32, #tpu.memory_space<vmem>>, %arg14: memref<1x32xf32, #tpu.memory_space<vmem>>, %arg15: memref<32x2xf32, #tpu.memory_space<vmem>>, %arg16: memref<1x2xf32, #tpu.memory_space<vmem>>, %arg17: memref<128x128xf32, #tpu.memory_space<vmem>>) attributes {dimension_semantics = [#tpu.dimension_semantics<parallel>], iteration_bounds = array<i64: 2>, scalar_prefetch = 0 : i64, scratch_operands = 0 : i64, tpu.core_type = #tpu.core_type<tc>, window_params = [{transform_indices = @transform_0, window_bounds = array<i64: 128, 2>}, {transform_indices = @transform_1, window_bounds = array<i64: 128, 8>}, {pipeline_mode = #tpu.pipeline_mode<synchronous>, transform_indices = @transform_2, window_bounds = array<i64: 2, 32>}, {pipeline_mode = #tpu.pipeline_mode<synchronous>, transform_indices = @transform_3, window_bounds = array<i64: 1, 32>}, {pipeline_mode = #tpu.pipeline_mode<synchronous>, transform_indices = @transform_4, window_bounds = array<i64: 32, 32>}, {pipeline_mode = #tpu.pipeline_mode<synchronous>, transform_indices = @transform_5, window_bounds = array<i64: 1, 32>}, {pipeline_mode = #tpu.pipeline_mode<synchronous>, transform_indices = @transform_6, window_bounds = array<i64: 32, 16>}, {pipeline_mode = #tpu.pipeline_mode<synchronous>, transform_indices = @transform_7, window_bounds = array<i64: 1, 16>}, {pipeline_mode = #tpu.pipeline_mode<synchronous>, transform_indices = @transform_8, window_bounds = array<i64: 8, 32>}, {pipeline_mode = #tpu.pipeline_mode<synchronous>, transform_indices = @transform_9, window_bounds = array<i64: 1, 32>}, {pipeline_mode = #tpu.pipeline_mode<synchronous>, transform_indices = @transform_10, window_bounds = array<i64: 32, 32>}, {pipeline_mode = #tpu.pipeline_mode<synchronous>, transform_indices = @transform_11, window_bounds = array<i64: 1, 32>}, {pipeline_mode = #tpu.pipeline_mode<synchronous>, transform_indices = @transform_12, window_bounds = array<i64: 32, 32>}, {pipeline_mode = #tpu.pipeline_mode<synchronous>, transform_indices = @transform_13, window_bounds = array<i64: 1, 32>}, {pipeline_mode = #tpu.pipeline_mode<synchronous>, transform_indices = @transform_14, window_bounds = array<i64: 32, 2>}, {pipeline_mode = #tpu.pipeline_mode<synchronous>, transform_indices = @transform_15, window_bounds = array<i64: 1, 2>}, {transform_indices = @transform_16, window_bounds = array<i64: 128, 128>}]} {
    %c0 = arith.constant 0 : index
    %c0_0 = arith.constant 0 : index
    %0 = vector.load %arg1[%c0, %c0_0] : memref<128x2xf32, #tpu.memory_space<vmem>>, vector<128x2xf32>
    %c0_1 = arith.constant 0 : index
    %c0_2 = arith.constant 0 : index
    %1 = vector.load %arg2[%c0_1, %c0_2] : memref<128x8xf32, #tpu.memory_space<vmem>>, vector<128x8xf32>
    %c0_3 = arith.constant 0 : index
    %c0_4 = arith.constant 0 : index
    %2 = vector.load %arg3[%c0_3, %c0_4] : memref<2x32xf32, #tpu.memory_space<vmem>>, vector<2x32xf32>
    %c0_5 = arith.constant 0 : index
    %c0_6 = arith.constant 0 : index
    %3 = vector.load %arg4[%c0_5, %c0_6] : memref<1x32xf32, #tpu.memory_space<vmem>>, vector<1x32xf32>
    %4 = vector.extract_strided_slice %0 {offsets = [0, 0], sizes = [128, 1], strides = [1, 1]} : vector<128x2xf32> to vector<128x1xf32>
    %5 = vector.extract_strided_slice %2 {offsets = [0, 0], sizes = [1, 32], strides = [1, 1]} : vector<2x32xf32> to vector<1x32xf32>
    %6 = vector.broadcast %4 : vector<128x1xf32> to vector<128x32xf32>
    %7 = vector.broadcast %5 : vector<1x32xf32> to vector<128x32xf32>
    %8 = arith.mulf %6, %7 : vector<128x32xf32>
    %9 = vector.broadcast %3 : vector<1x32xf32> to vector<128x32xf32>
    %10 = arith.addf %9, %8 : vector<128x32xf32>
    %11 = vector.extract_strided_slice %0 {offsets = [0, 1], sizes = [128, 1], strides = [1, 1]} : vector<128x2xf32> to vector<128x1xf32>
    %12 = vector.extract_strided_slice %2 {offsets = [1, 0], sizes = [1, 32], strides = [1, 1]} : vector<2x32xf32> to vector<1x32xf32>
    %13 = vector.broadcast %11 : vector<128x1xf32> to vector<128x32xf32>
    %14 = vector.broadcast %12 : vector<1x32xf32> to vector<128x32xf32>
    %15 = arith.mulf %13, %14 : vector<128x32xf32>
    %16 = arith.addf %10, %15 : vector<128x32xf32>
    %cst = arith.constant 0.000000e+00 : f32
    %17 = vector.broadcast %cst : f32 to vector<128x32xf32>
    %18 = arith.maximumf %16, %17 : vector<128x32xf32>
    %c0_7 = arith.constant 0 : index
    %c0_8 = arith.constant 0 : index
    %19 = vector.load %arg5[%c0_7, %c0_8] : memref<32x32xf32, #tpu.memory_space<vmem>>, vector<32x32xf32>
    %cst_9 = arith.constant dense<0.000000e+00> : vector<128x32xf32>
    %20 = tpu.matmul %18, %19, %cst_9 {dimension_numbers = #tpu.dot_dimension_numbers<[1], [0], [0], [1], [0, 0, 1, 1], [], []>} : vector<128x32xf32>, vector<32x32xf32>, vector<128x32xf32> -> vector<128x32xf32>
    %c0_10 = arith.constant 0 : index
    %c0_11 = arith.constant 0 : index
    %21 = vector.load %arg6[%c0_10, %c0_11] : memref<1x32xf32, #tpu.memory_space<vmem>>, vector<1x32xf32>
    %22 = vector.broadcast %21 : vector<1x32xf32> to vector<128x32xf32>
    %23 = arith.addf %20, %22 : vector<128x32xf32>
    %cst_12 = arith.constant 0.000000e+00 : f32
    %24 = vector.broadcast %cst_12 : f32 to vector<128x32xf32>
    %25 = arith.maximumf %23, %24 : vector<128x32xf32>
    %c0_13 = arith.constant 0 : index
    %c0_14 = arith.constant 0 : index
    %26 = vector.load %arg5[%c0_13, %c0_14] : memref<32x32xf32, #tpu.memory_space<vmem>>, vector<32x32xf32>
    %cst_15 = arith.constant dense<0.000000e+00> : vector<128x32xf32>
    %27 = tpu.matmul %25, %26, %cst_15 {dimension_numbers = #tpu.dot_dimension_numbers<[1], [0], [0], [1], [0, 0, 1, 1], [], []>} : vector<128x32xf32>, vector<32x32xf32>, vector<128x32xf32> -> vector<128x32xf32>
    %c0_16 = arith.constant 0 : index
    %c0_17 = arith.constant 0 : index
    %28 = vector.load %arg6[%c0_16, %c0_17] : memref<1x32xf32, #tpu.memory_space<vmem>>, vector<1x32xf32>
    %29 = vector.broadcast %28 : vector<1x32xf32> to vector<128x32xf32>
    %30 = arith.addf %27, %29 : vector<128x32xf32>
    %cst_18 = arith.constant 0.000000e+00 : f32
    %31 = vector.broadcast %cst_18 : f32 to vector<128x32xf32>
    %32 = arith.maximumf %30, %31 : vector<128x32xf32>
    %c0_19 = arith.constant 0 : index
    %c0_20 = arith.constant 0 : index
    %33 = vector.load %arg7[%c0_19, %c0_20] : memref<32x16xf32, #tpu.memory_space<vmem>>, vector<32x16xf32>
    %cst_21 = arith.constant dense<0.000000e+00> : vector<128x16xf32>
    %34 = tpu.matmul %32, %33, %cst_21 {dimension_numbers = #tpu.dot_dimension_numbers<[1], [0], [0], [1], [0, 0, 1, 1], [], []>} : vector<128x32xf32>, vector<32x16xf32>, vector<128x16xf32> -> vector<128x16xf32>
    %c0_22 = arith.constant 0 : index
    %c0_23 = arith.constant 0 : index
    %35 = vector.load %arg8[%c0_22, %c0_23] : memref<1x16xf32, #tpu.memory_space<vmem>>, vector<1x16xf32>
    %36 = vector.broadcast %35 : vector<1x16xf32> to vector<128x16xf32>
    %37 = arith.addf %34, %36 : vector<128x16xf32>
    %38 = vector.extract_strided_slice %37 {offsets = [0, 0], sizes = [128, 8], strides = [1, 1]} : vector<128x16xf32> to vector<128x8xf32>
    %39 = vector.extract_strided_slice %37 {offsets = [0, 8], sizes = [128, 8], strides = [1, 1]} : vector<128x16xf32> to vector<128x8xf32>
    %cst_24 = arith.constant -1.000000e+01 : f32
    %cst_25 = arith.constant 1.000000e+01 : f32
    %40 = vector.broadcast %cst_24 : f32 to vector<128x8xf32>
    %41 = arith.maximumf %40, %39 : vector<128x8xf32>
    %42 = vector.broadcast %cst_25 : f32 to vector<128x8xf32>
    %43 = arith.minimumf %42, %41 : vector<128x8xf32>
    %cst_26 = arith.constant 5.000000e-01 : f32
    %44 = vector.broadcast %cst_26 : f32 to vector<128x8xf32>
    %45 = arith.mulf %44, %43 : vector<128x8xf32>
    %46 = math.exp %45 : vector<128x8xf32>
    %47 = arith.mulf %1, %46 : vector<128x8xf32>
    %48 = arith.addf %38, %47 : vector<128x8xf32>
    %c0_27 = arith.constant 0 : index
    %c0_28 = arith.constant 0 : index
    %49 = vector.load %arg9[%c0_27, %c0_28] : memref<8x32xf32, #tpu.memory_space<vmem>>, vector<8x32xf32>
    %c0_29 = arith.constant 0 : index
    %c0_30 = arith.constant 0 : index
    %50 = vector.load %arg10[%c0_29, %c0_30] : memref<1x32xf32, #tpu.memory_space<vmem>>, vector<1x32xf32>
    %51 = vector.extract_strided_slice %48 {offsets = [0, 0], sizes = [128, 1], strides = [1, 1]} : vector<128x8xf32> to vector<128x1xf32>
    %52 = vector.extract_strided_slice %49 {offsets = [0, 0], sizes = [1, 32], strides = [1, 1]} : vector<8x32xf32> to vector<1x32xf32>
    %53 = vector.broadcast %51 : vector<128x1xf32> to vector<128x32xf32>
    %54 = vector.broadcast %52 : vector<1x32xf32> to vector<128x32xf32>
    %55 = arith.mulf %53, %54 : vector<128x32xf32>
    %56 = vector.broadcast %50 : vector<1x32xf32> to vector<128x32xf32>
    %57 = arith.addf %56, %55 : vector<128x32xf32>
    %58 = vector.extract_strided_slice %48 {offsets = [0, 1], sizes = [128, 1], strides = [1, 1]} : vector<128x8xf32> to vector<128x1xf32>
    %59 = vector.extract_strided_slice %49 {offsets = [1, 0], sizes = [1, 32], strides = [1, 1]} : vector<8x32xf32> to vector<1x32xf32>
    %60 = vector.broadcast %58 : vector<128x1xf32> to vector<128x32xf32>
    %61 = vector.broadcast %59 : vector<1x32xf32> to vector<128x32xf32>
    %62 = arith.mulf %60, %61 : vector<128x32xf32>
    %63 = arith.addf %57, %62 : vector<128x32xf32>
    %64 = vector.extract_strided_slice %48 {offsets = [0, 2], sizes = [128, 1], strides = [1, 1]} : vector<128x8xf32> to vector<128x1xf32>
    %65 = vector.extract_strided_slice %49 {offsets = [2, 0], sizes = [1, 32], strides = [1, 1]} : vector<8x32xf32> to vector<1x32xf32>
    %66 = vector.broadcast %64 : vector<128x1xf32> to vector<128x32xf32>
    %67 = vector.broadcast %65 : vector<1x32xf32> to vector<128x32xf32>
    %68 = arith.mulf %66, %67 : vector<128x32xf32>
    %69 = arith.addf %63, %68 : vector<128x32xf32>
    %70 = vector.extract_strided_slice %48 {offsets = [0, 3], sizes = [128, 1], strides = [1, 1]} : vector<128x8xf32> to vector<128x1xf32>
    %71 = vector.extract_strided_slice %49 {offsets = [3, 0], sizes = [1, 32], strides = [1, 1]} : vector<8x32xf32> to vector<1x32xf32>
    %72 = vector.broadcast %70 : vector<128x1xf32> to vector<128x32xf32>
    %73 = vector.broadcast %71 : vector<1x32xf32> to vector<128x32xf32>
    %74 = arith.mulf %72, %73 : vector<128x32xf32>
    %75 = arith.addf %69, %74 : vector<128x32xf32>
    %76 = vector.extract_strided_slice %48 {offsets = [0, 4], sizes = [128, 1], strides = [1, 1]} : vector<128x8xf32> to vector<128x1xf32>
    %77 = vector.extract_strided_slice %49 {offsets = [4, 0], sizes = [1, 32], strides = [1, 1]} : vector<8x32xf32> to vector<1x32xf32>
    %78 = vector.broadcast %76 : vector<128x1xf32> to vector<128x32xf32>
    %79 = vector.broadcast %77 : vector<1x32xf32> to vector<128x32xf32>
    %80 = arith.mulf %78, %79 : vector<128x32xf32>
    %81 = arith.addf %75, %80 : vector<128x32xf32>
    %82 = vector.extract_strided_slice %48 {offsets = [0, 5], sizes = [128, 1], strides = [1, 1]} : vector<128x8xf32> to vector<128x1xf32>
    %83 = vector.extract_strided_slice %49 {offsets = [5, 0], sizes = [1, 32], strides = [1, 1]} : vector<8x32xf32> to vector<1x32xf32>
    %84 = vector.broadcast %82 : vector<128x1xf32> to vector<128x32xf32>
    %85 = vector.broadcast %83 : vector<1x32xf32> to vector<128x32xf32>
    %86 = arith.mulf %84, %85 : vector<128x32xf32>
    %87 = arith.addf %81, %86 : vector<128x32xf32>
    %88 = vector.extract_strided_slice %48 {offsets = [0, 6], sizes = [128, 1], strides = [1, 1]} : vector<128x8xf32> to vector<128x1xf32>
    %89 = vector.extract_strided_slice %49 {offsets = [6, 0], sizes = [1, 32], strides = [1, 1]} : vector<8x32xf32> to vector<1x32xf32>
    %90 = vector.broadcast %88 : vector<128x1xf32> to vector<128x32xf32>
    %91 = vector.broadcast %89 : vector<1x32xf32> to vector<128x32xf32>
    %92 = arith.mulf %90, %91 : vector<128x32xf32>
    %93 = arith.addf %87, %92 : vector<128x32xf32>
    %94 = vector.extract_strided_slice %48 {offsets = [0, 7], sizes = [128, 1], strides = [1, 1]} : vector<128x8xf32> to vector<128x1xf32>
    %95 = vector.extract_strided_slice %49 {offsets = [7, 0], sizes = [1, 32], strides = [1, 1]} : vector<8x32xf32> to vector<1x32xf32>
    %96 = vector.broadcast %94 : vector<128x1xf32> to vector<128x32xf32>
    %97 = vector.broadcast %95 : vector<1x32xf32> to vector<128x32xf32>
    %98 = arith.mulf %96, %97 : vector<128x32xf32>
    %99 = arith.addf %93, %98 : vector<128x32xf32>
    %cst_31 = arith.constant 0.000000e+00 : f32
    %100 = vector.broadcast %cst_31 : f32 to vector<128x32xf32>
    %101 = arith.maximumf %99, %100 : vector<128x32xf32>
    %c0_32 = arith.constant 0 : index
    %c0_33 = arith.constant 0 : index
    %102 = vector.load %arg11[%c0_32, %c0_33] : memref<32x32xf32, #tpu.memory_space<vmem>>, vector<32x32xf32>
    %cst_34 = arith.constant dense<0.000000e+00> : vector<128x32xf32>
    %103 = tpu.matmul %101, %102, %cst_34 {dimension_numbers = #tpu.dot_dimension_numbers<[1], [0], [0], [1], [0, 0, 1, 1], [], []>} : vector<128x32xf32>, vector<32x32xf32>, vector<128x32xf32> -> vector<128x32xf32>
    %c0_35 = arith.constant 0 : index
    %c0_36 = arith.constant 0 : index
    %104 = vector.load %arg12[%c0_35, %c0_36] : memref<1x32xf32, #tpu.memory_space<vmem>>, vector<1x32xf32>
    %105 = vector.broadcast %104 : vector<1x32xf32> to vector<128x32xf32>
    %106 = arith.addf %103, %105 : vector<128x32xf32>
    %cst_37 = arith.constant 0.000000e+00 : f32
    %107 = vector.broadcast %cst_37 : f32 to vector<128x32xf32>
    %108 = arith.maximumf %106, %107 : vector<128x32xf32>
    %c0_38 = arith.constant 0 : index
    %c0_39 = arith.constant 0 : index
    %109 = vector.load %arg13[%c0_38, %c0_39] : memref<32x32xf32, #tpu.memory_space<vmem>>, vector<32x32xf32>
    %cst_40 = arith.constant dense<0.000000e+00> : vector<128x32xf32>
    %110 = tpu.matmul %108, %109, %cst_40 {dimension_numbers = #tpu.dot_dimension_numbers<[1], [0], [0], [1], [0, 0, 1, 1], [], []>} : vector<128x32xf32>, vector<32x32xf32>, vector<128x32xf32> -> vector<128x32xf32>
    %c0_41 = arith.constant 0 : index
    %c0_42 = arith.constant 0 : index
    %111 = vector.load %arg14[%c0_41, %c0_42] : memref<1x32xf32, #tpu.memory_space<vmem>>, vector<1x32xf32>
    %112 = vector.broadcast %111 : vector<1x32xf32> to vector<128x32xf32>
    %113 = arith.addf %110, %112 : vector<128x32xf32>
    %cst_43 = arith.constant 0.000000e+00 : f32
    %114 = vector.broadcast %cst_43 : f32 to vector<128x32xf32>
    %115 = arith.maximumf %113, %114 : vector<128x32xf32>
    %c0_44 = arith.constant 0 : index
    %c0_45 = arith.constant 0 : index
    %116 = vector.load %arg15[%c0_44, %c0_45] : memref<32x2xf32, #tpu.memory_space<vmem>>, vector<32x2xf32>
    %cst_46 = arith.constant dense<0.000000e+00> : vector<128x2xf32>
    %117 = tpu.matmul %115, %116, %cst_46 {dimension_numbers = #tpu.dot_dimension_numbers<[1], [0], [0], [1], [0, 0, 1, 1], [], []>} : vector<128x32xf32>, vector<32x2xf32>, vector<128x2xf32> -> vector<128x2xf32>
    %c0_47 = arith.constant 0 : index
    %c0_48 = arith.constant 0 : index
    %118 = vector.load %arg16[%c0_47, %c0_48] : memref<1x2xf32, #tpu.memory_space<vmem>>, vector<1x2xf32>
    %119 = vector.broadcast %118 : vector<1x2xf32> to vector<128x2xf32>
    %120 = arith.addf %117, %119 : vector<128x2xf32>
    %121 = tpu.concatenate %120, %38, %43 in 1 : vector<128x2xf32>, vector<128x8xf32>, vector<128x8xf32> -> vector<128x18xf32>
    %cst_49 = arith.constant 0.000000e+00 : f32
    %122 = vector.broadcast %cst_49 : f32 to vector<128x110xf32>
    %123 = tpu.concatenate %121, %122 in 1 : vector<128x18xf32>, vector<128x110xf32> -> vector<128x128xf32>
    %c0_50 = arith.constant 0 : index
    %c0_51 = arith.constant 0 : index
    %124 = vector.load %arg17[%c0_50, %c0_51] : memref<128x128xf32, #tpu.memory_space<vmem>>, vector<128x128xf32>
    tpu.vector_store %arg17[%c0_50, %c0_51], %123 {strides = array<i32>} : memref<128x128xf32, #tpu.memory_space<vmem>>, vector<128x128xf32>,
    return
  }
  func.func @transform_0(%arg0: i32) -> (i32, i32) {
    %c0_i32 = arith.constant 0 : i32
    %c0_i32_0 = arith.constant 0 : i32
    return %arg0, %c0_i32 : i32, i32
  }
  func.func @transform_1(%arg0: i32) -> (i32, i32) {
    %c0_i32 = arith.constant 0 : i32
    %c0_i32_0 = arith.constant 0 : i32
    return %arg0, %c0_i32 : i32, i32
  }
  func.func @transform_2(%arg0: i32) -> (i32, i32) {
    %c0_i32 = arith.constant 0 : i32
    %c0_i32_0 = arith.constant 0 : i32
    %c0_i32_1 = arith.constant 0 : i32
    return %c0_i32, %c0_i32_0 : i32, i32
  }
  func.func @transform_3(%arg0: i32) -> (i32, i32) {
    %c0_i32 = arith.constant 0 : i32
    %c0_i32_0 = arith.constant 0 : i32
    %c0_i32_1 = arith.constant 0 : i32
    return %c0_i32, %c0_i32_0 : i32, i32
  }
  func.func @transform_4(%arg0: i32) -> (i32, i32) {
    %c0_i32 = arith.constant 0 : i32
    %c0_i32_0 = arith.constant 0 : i32
    %c0_i32_1 = arith.constant 0 : i32
    return %c0_i32, %c0_i32_0 : i32, i32
  }
  func.func @transform_5(%arg0: i32) -> (i32, i32) {
    %c0_i32 = arith.constant 0 : i32
    %c0_i32_0 = arith.constant 0 : i32
    %c0_i32_1 = arith.constant 0 : i32
    return %c0_i32, %c0_i32_0 : i32, i32
  }
  func.func @transform_6(%arg0: i32) -> (i32, i32) {
    %c0_i32 = arith.constant 0 : i32
    %c0_i32_0 = arith.constant 0 : i32
    %c0_i32_1 = arith.constant 0 : i32
    return %c0_i32, %c0_i32_0 : i32, i32
  }
  func.func @transform_7(%arg0: i32) -> (i32, i32) {
    %c0_i32 = arith.constant 0 : i32
    %c0_i32_0 = arith.constant 0 : i32
    %c0_i32_1 = arith.constant 0 : i32
    return %c0_i32, %c0_i32_0 : i32, i32
  }
  func.func @transform_8(%arg0: i32) -> (i32, i32) {
    %c0_i32 = arith.constant 0 : i32
    %c0_i32_0 = arith.constant 0 : i32
    %c0_i32_1 = arith.constant 0 : i32
    return %c0_i32, %c0_i32_0 : i32, i32
  }
  func.func @transform_9(%arg0: i32) -> (i32, i32) {
    %c0_i32 = arith.constant 0 : i32
    %c0_i32_0 = arith.constant 0 : i32
    %c0_i32_1 = arith.constant 0 : i32
    return %c0_i32, %c0_i32_0 : i32, i32
  }
  func.func @transform_10(%arg0: i32) -> (i32, i32) {
    %c0_i32 = arith.constant 0 : i32
    %c0_i32_0 = arith.constant 0 : i32
    %c0_i32_1 = arith.constant 0 : i32
    return %c0_i32, %c0_i32_0 : i32, i32
  }
  func.func @transform_11(%arg0: i32) -> (i32, i32) {
    %c0_i32 = arith.constant 0 : i32
    %c0_i32_0 = arith.constant 0 : i32
    %c0_i32_1 = arith.constant 0 : i32
    return %c0_i32, %c0_i32_0 : i32, i32
  }
  func.func @transform_12(%arg0: i32) -> (i32, i32) {
    %c0_i32 = arith.constant 0 : i32
    %c0_i32_0 = arith.constant 0 : i32
    %c0_i32_1 = arith.constant 0 : i32
    return %c0_i32, %c0_i32_0 : i32, i32
  }
  func.func @transform_13(%arg0: i32) -> (i32, i32) {
    %c0_i32 = arith.constant 0 : i32
    %c0_i32_0 = arith.constant 0 : i32
    %c0_i32_1 = arith.constant 0 : i32
    return %c0_i32, %c0_i32_0 : i32, i32
  }
  func.func @transform_14(%arg0: i32) -> (i32, i32) {
    %c0_i32 = arith.constant 0 : i32
    %c0_i32_0 = arith.constant 0 : i32
    %c0_i32_1 = arith.constant 0 : i32
    return %c0_i32, %c0_i32_0 : i32, i32
  }
  func.func @transform_15(%arg0: i32) -> (i32, i32) {
    %c0_i32 = arith.constant 0 : i32
    %c0_i32_0 = arith.constant 0 : i32
    %c0_i32_1 = arith.constant 0 : i32
    return %c0_i32, %c0_i32_0 : i32, i32
  }
  func.func @transform_16(%arg0: i32) -> (i32, i32) {
    %c0_i32 = arith.constant 0 : i32
    %c0_i32_0 = arith.constant 0 : i32
    return %arg0, %c0_i32 : i32, i32
  }
}

</mosaic_0001>

<llo_original>
// kernel: tpu_custom_call.1
$region0: #{tpu_custom_call.1}
  #allocation0 [shape = 'u32[]', space=smem, size = 0x4, offset = 0x4, fixed_abs, tag = 'smem constant byte address 0x4 - core index']
  #allocation1 [shape = 'u32[144,128]{1,0:T(1,128)}', space=vmem, size = 0x12000, scoped, tag = 'internal scratch']
  %s0 = inlined_call_operand.vmem [shape: f32[256,2], index: 0, kind: input, shape index: {}]
  %s1 = inlined_call_operand.vmem [shape: f32[256,8], index: 1, kind: input, shape index: {}]
  %s2 = inlined_call_operand.vmem [shape: f32[2,32], index: 2, kind: input, shape index: {}]
  %s3 = inlined_call_operand.vmem [shape: f32[1,32], index: 3, kind: input, shape index: {}]
  %s4 = inlined_call_operand.vmem [shape: f32[32,32], index: 4, kind: input, shape index: {}]
  %s5 = inlined_call_operand.vmem [shape: f32[1,32], index: 5, kind: input, shape index: {}]
  %s6 = inlined_call_operand.vmem [shape: f32[32,16], index: 6, kind: input, shape index: {}]
  %s7 = inlined_call_operand.vmem [shape: f32[1,16], index: 7, kind: input, shape index: {}]
  %s8 = inlined_call_operand.vmem [shape: f32[8,32], index: 8, kind: input, shape index: {}]
  %s9 = inlined_call_operand.vmem [shape: f32[1,32], index: 9, kind: input, shape index: {}]
  %s10 = inlined_call_operand.vmem [shape: f32[32,32], index: 10, kind: input, shape index: {}]
  %s11 = inlined_call_operand.vmem [shape: f32[1,32], index: 11, kind: input, shape index: {}]
  %s12 = inlined_call_operand.vmem [shape: f32[32,32], index: 12, kind: input, shape index: {}]
  %s13 = inlined_call_operand.vmem [shape: f32[1,32], index: 13, kind: input, shape index: {}]
  %s14 = inlined_call_operand.vmem [shape: f32[32,2], index: 14, kind: input, shape index: {}]
  %s15 = inlined_call_operand.vmem [shape: f32[1,2], index: 15, kind: input, shape index: {}]
  %s16 = inlined_call_operand.hbm [shape: f32[256,128], index: 16, kind: output, shape index: {}]
  %s17 = sld [smem:[#allocation0]]
  $region97: #{tpu_custom_call.1} parent=0
    _
  %s19 = ssub.s32 1, %s17
  %s20 = scalar_select 0, %s19, %s17
  $region1: #{tpu_custom_call.1} parent=0
    #allocation2 [shape = 'u8[131072]{0}', space=vmem, size = 0x20000, scoped, tag = 'output window, operand 0']
    #allocation3 [shape = 's32[2]{0}', space=sflag, size = 0x8, scoped, tag = 'scoped memory for tpu_custom_call.1']
    %21 = vsyncpa [#allocation3], 0
    %s22 = scalar_lea.sflag [#allocation3], 1
    %23 = vsyncpa %s22, 0
    loop: start=0, step=1, limit=4
    $region2: #{tpu_custom_call.1} parent=1 // loop_pre_header
      _
    $region3: #{tpu_custom_call.1} parent=1 // loop_header
      %s25 = sphi 0, %s29
      %p26 = scmp.ge.s32.totalorder %s25, 4
      %s35 = sphi 0, %s37
      %s38 = sphi 0, %s35
      %s39 = sphi 0, %s38
      %s55 = sphi 0, %s39
      %s61 = sphi 0, %s63
      %s64 = sphi 0, %s61
      %s65 = sphi 0, %s64
      %s81 = sphi 0, %s65
      %s85 = sphi 0, %s85
      %s87 = sphi 0, %s85
      %s88 = sphi 0, %s87
      %s102 = sphi 0, %s88
      %s106 = sphi 0, %s106
      %s108 = sphi 0, %s106
      %s109 = sphi 0, %s108
      %s123 = sphi 0, %s109
      %s127 = sphi 0, %s127
      %s129 = sphi 0, %s127
      %s130 = sphi 0, %s129
      %s144 = sphi 0, %s130
      %s148 = sphi 0, %s148
      %s150 = sphi 0, %s148
      %s151 = sphi 0, %s150
      %s165 = sphi 0, %s151
      %s169 = sphi 0, %s169
      %s171 = sphi 0, %s169
      %s172 = sphi 0, %s171
      %s186 = sphi 0, %s172
      %s190 = sphi 0, %s190
      %s192 = sphi 0, %s190
      %s193 = sphi 0, %s192
      %s207 = sphi 0, %s193
      %s211 = sphi 0, %s211
      %s213 = sphi 0, %s211
      %s214 = sphi 0, %s213
      %s228 = sphi 0, %s214
      %s232 = sphi 0, %s232
      %s234 = sphi 0, %s232
      %s235 = sphi 0, %s234
      %s249 = sphi 0, %s235
      %s253 = sphi 0, %s253
      %s255 = sphi 0, %s253
      %s256 = sphi 0, %s255
      %s270 = sphi 0, %s256
      %s274 = sphi 0, %s274
      %s276 = sphi 0, %s274
      %s277 = sphi 0, %s276
      %s291 = sphi 0, %s277
      %s295 = sphi 0, %s295
      %s297 = sphi 0, %s295
      %s298 = sphi 0, %s297
      %s312 = sphi 0, %s298
      %s316 = sphi 0, %s316
      %s318 = sphi 0, %s316
      %s319 = sphi 0, %s318
      %s333 = sphi 0, %s319
      %s337 = sphi 0, %s337
      %s339 = sphi 0, %s337
      %s340 = sphi 0, %s339
      %s354 = sphi 0, %s340
      %s358 = sphi 0, %s358
      %s360 = sphi 0, %s358
      %s361 = sphi 0, %s360
      %s375 = sphi 0, %s361
      %s381 = sphi 0, %s383
      %s384 = sphi 0, %s381
      %s385 = sphi 0, %s384
      %s401 = sphi 0, %s385
    $region4: #{tpu_custom_call.1} parent=1 // loop_header_branch
      %28 = sbr.rel (%p26) target = $region8
    $region5: #{tpu_custom_call.1} parent=1 // loop_body
      %s30 = ssub.s32 %s25, 1
      %s31 = ssub.s32 %s25, 2
      %s32 = sadd.s32 %s25, 1
      %s33 = ssub.s32 %s25, %s32
      %p34 = scmp.eq.s32.totalorder %s33, 0
      %s36 = sadd.s32 %s35, 1
      %s37 = scalar_select %p34, %s35, %s36
      %p40 = pneg %p34
      %p41 = scmp.eq.s32.totalorder %s25, 1
      %p42 = por %p40, %p41
      %p43 = scmp.ne.s32.totalorder %s35, %s38
      %p44 = scmp.eq.s32.totalorder %s25, 0
      %p45 = por %p43, %p44
      %p46 = scmp.ne.s32.totalorder %s35, %s38
      %p47 = scmp.eq.s32.totalorder %s30, 1
      %p48 = por %p46, %p47
      %p49 = scmp.ne.s32.totalorder %s38, %s39
      %p50 = scmp.eq.s32.totalorder %s30, 0
      %p51 = por %p49, %p50
      %p52 = scmp.ne.s32.totalorder %s38, %s39
      %p53 = scmp.eq.s32.totalorder %s31, 1
      %p54 = por %p52, %p53
      %p56 = scmp.ne.s32.totalorder %s39, %s55
      %p57 = scmp.eq.s32.totalorder %s31, 0
      %p58 = por %p56, %p57
      %s59 = ssub.s32 %s25, %s32
      %p60 = scmp.eq.s32.totalorder %s59, 0
      %s62 = sadd.s32 %s61, 1
      %s63 = scalar_select %p60, %s61, %s62
      %p66 = pneg %p60
      %p67 = scmp.eq.s32.totalorder %s25, 1
      %p68 = por %p66, %p67
      %p69 = scmp.ne.s32.totalorder %s61, %s64
      %p70 = scmp.eq.s32.totalorder %s25, 0
      %p71 = por %p69, %p70
      %p72 = scmp.ne.s32.totalorder %s61, %s64
      %p73 = scmp.eq.s32.totalorder %s30, 1
      %p74 = por %p72, %p73
      %p75 = scmp.ne.s32.totalorder %s64, %s65
      %p76 = scmp.eq.s32.totalorder %s30, 0
      %p77 = por %p75, %p76
      %p78 = scmp.ne.s32.totalorder %s64, %s65
      %p79 = scmp.eq.s32.totalorder %s31, 1
      %p80 = por %p78, %p79
      %p82 = scmp.ne.s32.totalorder %s65, %s81
      %p83 = scmp.eq.s32.totalorder %s31, 0
      %p84 = por %p82, %p83
      %s86 = sadd.s32 %s85, 1
      %p89 = scmp.eq.s32.totalorder %s25, 1
      %p90 = scmp.ne.s32.totalorder %s85, %s87
      %p91 = scmp.eq.s32.totalorder %s25, 0
      %p92 = por %p90, %p91
      %p93 = scmp.ne.s32.totalorder %s85, %s87
      %p94 = scmp.eq.s32.totalorder %s30, 1
      %p95 = por %p93, %p94
      %p96 = scmp.ne.s32.totalorder %s87, %s88
      %p97 = scmp.eq.s32.totalorder %s30, 0
      %p98 = por %p96, %p97
      %p99 = scmp.ne.s32.totalorder %s87, %s88
      %p100 = scmp.eq.s32.totalorder %s31, 1
      %p101 = por %p99, %p100
      %p103 = scmp.ne.s32.totalorder %s88, %s102
      %p104 = scmp.eq.s32.totalorder %s31, 0
      %p105 = por %p103, %p104
      %s107 = sadd.s32 %s106, 1
      %p110 = scmp.eq.s32.totalorder %s25, 1
      %p111 = scmp.ne.s32.totalorder %s106, %s108
      %p112 = scmp.eq.s32.totalorder %s25, 0
      %p113 = por %p111, %p112
      %p114 = scmp.ne.s32.totalorder %s106, %s108
      %p115 = scmp.eq.s32.totalorder %s30, 1
      %p116 = por %p114, %p115
      %p117 = scmp.ne.s32.totalorder %s108, %s109
      %p118 = scmp.eq.s32.totalorder %s30, 0
      %p119 = por %p117, %p118
      %p120 = scmp.ne.s32.totalorder %s108, %s109
      %p121 = scmp.eq.s32.totalorder %s31, 1
      %p122 = por %p120, %p121
      %p124 = scmp.ne.s32.totalorder %s109, %s123
      %p125 = scmp.eq.s32.totalorder %s31, 0
      %p126 = por %p124, %p125
      %s128 = sadd.s32 %s127, 1
      %p131 = scmp.eq.s32.totalorder %s25, 1
      %p132 = scmp.ne.s32.totalorder %s127, %s129
      %p133 = scmp.eq.s32.totalorder %s25, 0
      %p134 = por %p132, %p133
      %p135 = scmp.ne.s32.totalorder %s127, %s129
      %p136 = scmp.eq.s32.totalorder %s30, 1
      %p137 = por %p135, %p136
      %p138 = scmp.ne.s32.totalorder %s129, %s130
      %p139 = scmp.eq.s32.totalorder %s30, 0
      %p140 = por %p138, %p139
      %p141 = scmp.ne.s32.totalorder %s129, %s130
      %p142 = scmp.eq.s32.totalorder %s31, 1
      %p143 = por %p141, %p142
      %p145 = scmp.ne.s32.totalorder %s130, %s144
      %p146 = scmp.eq.s32.totalorder %s31, 0
      %p147 = por %p145, %p146
      %s149 = sadd.s32 %s148, 1
      %p152 = scmp.eq.s32.totalorder %s25, 1
      %p153 = scmp.ne.s32.totalorder %s148, %s150
      %p154 = scmp.eq.s32.totalorder %s25, 0
      %p155 = por %p153, %p154
      %p156 = scmp.ne.s32.totalorder %s148, %s150
      %p157 = scmp.eq.s32.totalorder %s30, 1
      %p158 = por %p156, %p157
      %p159 = scmp.ne.s32.totalorder %s150, %s151
      %p160 = scmp.eq.s32.totalorder %s30, 0
      %p161 = por %p159, %p160
      %p162 = scmp.ne.s32.totalorder %s150, %s151
      %p163 = scmp.eq.s32.totalorder %s31, 1
      %p164 = por %p162, %p163
      %p166 = scmp.ne.s32.totalorder %s151, %s165
      %p167 = scmp.eq.s32.totalorder %s31, 0
      %p168 = por %p166, %p167
      %s170 = sadd.s32 %s169, 1
      %p173 = scmp.eq.s32.totalorder %s25, 1
      %p174 = scmp.ne.s32.totalorder %s169, %s171
      %p175 = scmp.eq.s32.totalorder %s25, 0
      %p176 = por %p174, %p175
      %p177 = scmp.ne.s32.totalorder %s169, %s171
      %p178 = scmp.eq.s32.totalorder %s30, 1
      %p179 = por %p177, %p178
      %p180 = scmp.ne.s32.totalorder %s171, %s172
      %p181 = scmp.eq.s32.totalorder %s30, 0
      %p182 = por %p180, %p181
      %p183 = scmp.ne.s32.totalorder %s171, %s172
      %p184 = scmp.eq.s32.totalorder %s31, 1
      %p185 = por %p183, %p184
      %p187 = scmp.ne.s32.totalorder %s172, %s186
      %p188 = scmp.eq.s32.totalorder %s31, 0
      %p189 = por %p187, %p188
      %s191 = sadd.s32 %s190, 1
      %p194 = scmp.eq.s32.totalorder %s25, 1
      %p195 = scmp.ne.s32.totalorder %s190, %s192
      %p196 = scmp.eq.s32.totalorder %s25, 0
      %p197 = por %p195, %p196
      %p198 = scmp.ne.s32.totalorder %s190, %s192
      %p199 = scmp.eq.s32.totalorder %s30, 1
      %p200 = por %p198, %p199
      %p201 = scmp.ne.s32.totalorder %s192, %s193
      %p202 = scmp.eq.s32.totalorder %s30, 0
      %p203 = por %p201, %p202
      %p204 = scmp.ne.s32.totalorder %s192, %s193
      %p205 = scmp.eq.s32.totalorder %s31, 1
      %p206 = por %p204, %p205
      %p208 = scmp.ne.s32.totalorder %s193, %s207
      %p209 = scmp.eq.s32.totalorder %s31, 0
      %p210 = por %p208, %p209
      %s212 = sadd.s32 %s211, 1
      %p215 = scmp.eq.s32.totalorder %s25, 1
      %p216 = scmp.ne.s32.totalorder %s211, %s213
      %p217 = scmp.eq.s32.totalorder %s25, 0
      %p218 = por %p216, %p217
      %p219 = scmp.ne.s32.totalorder %s211, %s213
      %p220 = scmp.eq.s32.totalorder %s30, 1
      %p221 = por %p219, %p220
      %p222 = scmp.ne.s32.totalorder %s213, %s214
      %p223 = scmp.eq.s32.totalorder %s30, 0
      %p224 = por %p222, %p223
      %p225 = scmp.ne.s32.totalorder %s213, %s214
      %p226 = scmp.eq.s32.totalorder %s31, 1
      %p227 = por %p225, %p226
      %p229 = scmp.ne.s32.totalorder %s214, %s228
      %p230 = scmp.eq.s32.totalorder %s31, 0
      %p231 = por %p229, %p230
      %s233 = sadd.s32 %s232, 1
      %p236 = scmp.eq.s32.totalorder %s25, 1
      %p237 = scmp.ne.s32.totalorder %s232, %s234
      %p238 = scmp.eq.s32.totalorder %s25, 0
      %p239 = por %p237, %p238
      %p240 = scmp.ne.s32.totalorder %s232, %s234
      %p241 = scmp.eq.s32.totalorder %s30, 1
      %p242 = por %p240, %p241
      %p243 = scmp.ne.s32.totalorder %s234, %s235
      %p244 = scmp.eq.s32.totalorder %s30, 0
      %p245 = por %p243, %p244
      %p246 = scmp.ne.s32.totalorder %s234, %s235
      %p247 = scmp.eq.s32.totalorder %s31, 1
      %p248 = por %p246, %p247
      %p250 = scmp.ne.s32.totalorder %s235, %s249
      %p251 = scmp.eq.s32.totalorder %s31, 0
      %p252 = por %p250, %p251
      %s254 = sadd.s32 %s253, 1
      %p257 = scmp.eq.s32.totalorder %s25, 1
      %p258 = scmp.ne.s32.totalorder %s253, %s255
      %p259 = scmp.eq.s32.totalorder %s25, 0
      %p260 = por %p258, %p259
      %p261 = scmp.ne.s32.totalorder %s253, %s255
      %p262 = scmp.eq.s32.totalorder %s30, 1
      %p263 = por %p261, %p262
      %p264 = scmp.ne.s32.totalorder %s255, %s256
      %p265 = scmp.eq.s32.totalorder %s30, 0
      %p266 = por %p264, %p265
      %p267 = scmp.ne.s32.totalorder %s255, %s256
      %p268 = scmp.eq.s32.totalorder %s31, 1
      %p269 = por %p267, %p268
      %p271 = scmp.ne.s32.totalorder %s256, %s270
      %p272 = scmp.eq.s32.totalorder %s31, 0
      %p273 = por %p271, %p272
      %s275 = sadd.s32 %s274, 1
      %p278 = scmp.eq.s32.totalorder %s25, 1
      %p279 = scmp.ne.s32.totalorder %s274, %s276
      %p280 = scmp.eq.s32.totalorder %s25, 0
      %p281 = por %p279, %p280
      %p282 = scmp.ne.s32.totalorder %s274, %s276
      %p283 = scmp.eq.s32.totalorder %s30, 1
      %p284 = por %p282, %p283
      %p285 = scmp.ne.s32.totalorder %s276, %s277
      %p286 = scmp.eq.s32.totalorder %s30, 0
      %p287 = por %p285, %p286
      %p288 = scmp.ne.s32.totalorder %s276, %s277
      %p289 = scmp.eq.s32.totalorder %s31, 1
      %p290 = por %p288, %p289
      %p292 = scmp.ne.s32.totalorder %s277, %s291
      %p293 = scmp.eq.s32.totalorder %s31, 0
      %p294 = por %p292, %p293
      %s296 = sadd.s32 %s295, 1
      %p299 = scmp.eq.s32.totalorder %s25, 1
      %p300 = scmp.ne.s32.totalorder %s295, %s297
      %p301 = scmp.eq.s32.totalorder %s25, 0
      %p302 = por %p300, %p301
      %p303 = scmp.ne.s32.totalorder %s295, %s297
      %p304 = scmp.eq.s32.totalorder %s30, 1
      %p305 = por %p303, %p304
      %p306 = scmp.ne.s32.totalorder %s297, %s298
      %p307 = scmp.eq.s32.totalorder %s30, 0
      %p308 = por %p306, %p307
      %p309 = scmp.ne.s32.totalorder %s297, %s298
      %p310 = scmp.eq.s32.totalorder %s31, 1
      %p311 = por %p309, %p310
      %p313 = scmp.ne.s32.totalorder %s298, %s312
      %p314 = scmp.eq.s32.totalorder %s31, 0
      %p315 = por %p313, %p314
      %s317 = sadd.s32 %s316, 1
      %p320 = scmp.eq.s32.totalorder %s25, 1
      %p321 = scmp.ne.s32.totalorder %s316, %s318
      %p322 = scmp.eq.s32.totalorder %s25, 0
      %p323 = por %p321, %p322
      %p324 = scmp.ne.s32.totalorder %s316, %s318
      %p325 = scmp.eq.s32.totalorder %s30, 1
      %p326 = por %p324, %p325
      %p327 = scmp.ne.s32.totalorder %s318, %s319
      %p328 = scmp.eq.s32.totalorder %s30, 0
      %p329 = por %p327, %p328
      %p330 = scmp.ne.s32.totalorder %s318, %s319
      %p331 = scmp.eq.s32.totalorder %s31, 1
      %p332 = por %p330, %p331
      %p334 = scmp.ne.s32.totalorder %s319, %s333
      %p335 = scmp.eq.s32.totalorder %s31, 0
      %p336 = por %p334, %p335
      %s338 = sadd.s32 %s337, 1
      %p341 = scmp.eq.s32.totalorder %s25, 1
      %p342 = scmp.ne.s32.totalorder %s337, %s339
      %p343 = scmp.eq.s32.totalorder %s25, 0
      %p344 = por %p342, %p343
      %p345 = scmp.ne.s32.totalorder %s337, %s339
      %p346 = scmp.eq.s32.totalorder %s30, 1
      %p347 = por %p345, %p346
      %p348 = scmp.ne.s32.totalorder %s339, %s340
      %p349 = scmp.eq.s32.totalorder %s30, 0
      %p350 = por %p348, %p349
      %p351 = scmp.ne.s32.totalorder %s339, %s340
      %p352 = scmp.eq.s32.totalorder %s31, 1
      %p353 = por %p351, %p352
      %p355 = scmp.ne.s32.totalorder %s340, %s354
      %p356 = scmp.eq.s32.totalorder %s31, 0
      %p357 = por %p355, %p356
      %s359 = sadd.s32 %s358, 1
      %p362 = scmp.eq.s32.totalorder %s25, 1
      %p363 = scmp.ne.s32.totalorder %s358, %s360
      %p364 = scmp.eq.s32.totalorder %s25, 0
      %p365 = por %p363, %p364
      %p366 = scmp.ne.s32.totalorder %s358, %s360
      %p367 = scmp.eq.s32.totalorder %s30, 1
      %p368 = por %p366, %p367
      %p369 = scmp.ne.s32.totalorder %s360, %s361
      %p370 = scmp.eq.s32.totalorder %s30, 0
      %p371 = por %p369, %p370
      %p372 = scmp.ne.s32.totalorder %s360, %s361
      %p373 = scmp.eq.s32.totalorder %s31, 1
      %p374 = por %p372, %p373
      %p376 = scmp.ne.s32.totalorder %s361, %s375
      %p377 = scmp.eq.s32.totalorder %s31, 0
      %p378 = por %p376, %p377
      %s379 = ssub.s32 %s25, %s32
      %p380 = scmp.eq.s32.totalorder %s379, 0
      %s382 = sadd.s32 %s381, 1
      %s383 = scalar_select %p380, %s381, %s382
      %p386 = pneg %p380
      %p387 = scmp.eq.s32.totalorder %s25, 1
      %p388 = por %p386, %p387
      %p389 = scmp.ne.s32.totalorder %s381, %s384
      %p390 = scmp.eq.s32.totalorder %s25, 0
      %p391 = por %p389, %p390
      %p392 = scmp.ne.s32.totalorder %s381, %s384
      %p393 = scmp.eq.s32.totalorder %s30, 1
      %p394 = por %p392, %p393
      %p395 = scmp.ne.s32.totalorder %s384, %s385
      %p396 = scmp.eq.s32.totalorder %s30, 0
      %p397 = por %p395, %p396
      %p398 = scmp.ne.s32.totalorder %s384, %s385
      %p399 = scmp.eq.s32.totalorder %s31, 1
      %p400 = por %p398, %p399
      %p402 = scmp.ne.s32.totalorder %s385, %s401
      %p403 = scmp.eq.s32.totalorder %s31, 0
      %p404 = por %p402, %p403
      %p405 = scmp.le.s32.totalorder 1, %s25
      %p406 = scmp.lt.s32.totalorder %s25, 3
      %p407 = pnand %p405, %p406
      %p408 = pneg %p407
      // Predicated region
      $region9: #{tpu_custom_call.1} parent=5 // pred_check
        _
      $region10: #{tpu_custom_call.1} parent=5 // pred_check_branch
        %410 = sbr.rel (%p407) target = $region12
      $region11: #{tpu_custom_call.1} parent=5 // pred_region
        %s411 = ssub.s32 %s25, 1
        // Predicated region
        $region13: #{tpu_custom_call.1} parent=11 // pred_check
          %p412 = pneg %p98
        $region14: #{tpu_custom_call.1} parent=11 // pred_check_branch
          %414 = sbr.rel (%p412) target = $region16
        $region15: #{tpu_custom_call.1} parent=11 // pred_region
          _
        $region16: #{tpu_custom_call.1} parent=11 // pred_fallthru
          _
        // Predicated region
        $region17: #{tpu_custom_call.1} parent=11 // pred_check
          %p415 = pneg %p119
        $region18: #{tpu_custom_call.1} parent=11 // pred_check_branch
          %417 = sbr.rel (%p415) target = $region20
        $region19: #{tpu_custom_call.1} parent=11 // pred_region
          _
        $region20: #{tpu_custom_call.1} parent=11 // pred_fallthru
          _
        // Predicated region
        $region21: #{tpu_custom_call.1} parent=11 // pred_check
          %p418 = pneg %p140
        $region22: #{tpu_custom_call.1} parent=11 // pred_check_branch
          %420 = sbr.rel (%p418) target = $region24
        $region23: #{tpu_custom_call.1} parent=11 // pred_region
          _
        $region24: #{tpu_custom_call.1} parent=11 // pred_fallthru
          _
        // Predicated region
        $region25: #{tpu_custom_call.1} parent=11 // pred_check
          %p421 = pneg %p161
        $region26: #{tpu_custom_call.1} parent=11 // pred_check_branch
          %423 = sbr.rel (%p421) target = $region28
        $region27: #{tpu_custom_call.1} parent=11 // pred_region
          _
        $region28: #{tpu_custom_call.1} parent=11 // pred_fallthru
          _
        // Predicated region
        $region29: #{tpu_custom_call.1} parent=11 // pred_check
          %p424 = pneg %p182
        $region30: #{tpu_custom_call.1} parent=11 // pred_check_branch
          %426 = sbr.rel (%p424) target = $region32
        $region31: #{tpu_custom_call.1} parent=11 // pred_region
          _
        $region32: #{tpu_custom_call.1} parent=11 // pred_fallthru
          _
        // Predicated region
        $region33: #{tpu_custom_call.1} parent=11 // pred_check
          %p427 = pneg %p203
        $region34: #{tpu_custom_call.1} parent=11 // pred_check_branch
          %429 = sbr.rel (%p427) target = $region36
        $region35: #{tpu_custom_call.1} parent=11 // pred_region
          _
        $region36: #{tpu_custom_call.1} parent=11 // pred_fallthru
          _
        // Predicated region
        $region37: #{tpu_custom_call.1} parent=11 // pred_check
          %p430 = pneg %p224
        $region38: #{tpu_custom_call.1} parent=11 // pred_check_branch
          %432 = sbr.rel (%p430) target = $region40
        $region39: #{tpu_custom_call.1} parent=11 // pred_region
          _
        $region40: #{tpu_custom_call.1} parent=11 // pred_fallthru
          _
        // Predicated region
        $region41: #{tpu_custom_call.1} parent=11 // pred_check
          %p433 = pneg %p245
        $region42: #{tpu_custom_call.1} parent=11 // pred_check_branch
          %435 = sbr.rel (%p433) target = $region44
        $region43: #{tpu_custom_call.1} parent=11 // pred_region
          _
        $region44: #{tpu_custom_call.1} parent=11 // pred_fallthru
          _
        // Predicated region
        $region45: #{tpu_custom_call.1} parent=11 // pred_check
          %p436 = pneg %p266
        $region46: #{tpu_custom_call.1} parent=11 // pred_check_branch
          %438 = sbr.rel (%p436) target = $region48
        $region47: #{tpu_custom_call.1} parent=11 // pred_region
          _
        $region48: #{tpu_custom_call.1} parent=11 // pred_fallthru
          _
        // Predicated region
        $region49: #{tpu_custom_call.1} parent=11 // pred_check
          %p439 = pneg %p287
        $region50: #{tpu_custom_call.1} parent=11 // pred_check_branch
          %441 = sbr.rel (%p439) target = $region52
        $region51: #{tpu_custom_call.1} parent=11 // pred_region
          _
        $region52: #{tpu_custom_call.1} parent=11 // pred_fallthru
          _
        // Predicated region
        $region53: #{tpu_custom_call.1} parent=11 // pred_check
          %p442 = pneg %p308
        $region54: #{tpu_custom_call.1} parent=11 // pred_check_branch
          %444 = sbr.rel (%p442) target = $region56
        $region55: #{tpu_custom_call.1} parent=11 // pred_region
          _
        $region56: #{tpu_custom_call.1} parent=11 // pred_fallthru
          _
        // Predicated region
        $region57: #{tpu_custom_call.1} parent=11 // pred_check
          %p445 = pneg %p329
        $region58: #{tpu_custom_call.1} parent=11 // pred_check_branch
          %447 = sbr.rel (%p445) target = $region60
        $region59: #{tpu_custom_call.1} parent=11 // pred_region
          _
        $region60: #{tpu_custom_call.1} parent=11 // pred_fallthru
          _
        // Predicated region
        $region61: #{tpu_custom_call.1} parent=11 // pred_check
          %p448 = pneg %p350
        $region62: #{tpu_custom_call.1} parent=11 // pred_check_branch
          %450 = sbr.rel (%p448) target = $region64
        $region63: #{tpu_custom_call.1} parent=11 // pred_region
          _
        $region64: #{tpu_custom_call.1} parent=11 // pred_fallthru
          _
        // Predicated region
        $region65: #{tpu_custom_call.1} parent=11 // pred_check
          %p451 = pneg %p371
        $region66: #{tpu_custom_call.1} parent=11 // pred_check_branch
          %453 = sbr.rel (%p451) target = $region68
        $region67: #{tpu_custom_call.1} parent=11 // pred_region
          _
        $region68: #{tpu_custom_call.1} parent=11 // pred_fallthru
          _
      $region12: #{tpu_custom_call.1} parent=5 // pred_fallthru
        _
      %p454 = scmp.lt.s32.totalorder %s25, 2
      // Predicated region
      $region69: #{tpu_custom_call.1} parent=5 // pred_check
        %p455 = pneg %p454
      $region70: #{tpu_custom_call.1} parent=5 // pred_check_branch
        %457 = sbr.rel (%p455) target = $region72
      $region71: #{tpu_custom_call.1} parent=5 // pred_region
        // Predicated region
        $region73: #{tpu_custom_call.1} parent=71 // pred_check
          %p458 = pneg %p45
        $region74: #{tpu_custom_call.1} parent=71 // pred_check_branch
          %460 = sbr.rel (%p458) target = $region76
        $region75: #{tpu_custom_call.1} parent=71 // pred_region
          %s461 = smul.u32 16, %s25
          %p462 = scmp.lt.s32.totalorder %s461, 31
          %s463 = scalar_select %p462, %s461, 31
          %s464 = smul.addr %s463, 8
          %s465 = scalar_lea.vmem %s0, %s464
          %s466 = smul.u32 16, %s25
        $region76: #{tpu_custom_call.1} parent=71 // pred_fallthru
          _
        // Predicated region
        $region77: #{tpu_custom_call.1} parent=71 // pred_check
          %p467 = pneg %p71
        $region78: #{tpu_custom_call.1} parent=71 // pred_check_branch
          %469 = sbr.rel (%p467) target = $region80
        $region79: #{tpu_custom_call.1} parent=71 // pred_region
          %s470 = smul.u32 16, %s25
          %p471 = scmp.lt.s32.totalorder %s470, 31
          %s472 = scalar_select %p471, %s470, 31
          %s473 = smul.addr %s472, 8
          %s474 = scalar_lea.vmem %s1, %s473
          %s475 = smul.u32 16, %s25
        $region80: #{tpu_custom_call.1} parent=71 // pred_fallthru
          _
      $region72: #{tpu_custom_call.1} parent=5 // pred_fallthru
        _
      %p476 = scmp.le.s32.totalorder 1, %s25
      %p477 = scmp.lt.s32.totalorder %s25, 3
      %p478 = pnand %p476, %p477
      %p479 = pneg %p478
      // Predicated region
      $region81: #{tpu_custom_call.1} parent=5 // pred_check
        _
      $region82: #{tpu_custom_call.1} parent=5 // pred_check_branch
        %481 = sbr.rel (%p478) target = $region84
      $region83: #{tpu_custom_call.1} parent=5 // pred_region
        %s482 = ssub.s32 %s25, 1
        %s483 = smul.u32 16, %s30
        %p484 = scmp.lt.s32.totalorder %s483, 31
        %s485 = scalar_select %p484, %s483, 31
        %s486 = smul.addr %s485, 8
        %s487 = scalar_lea.vmem %s0, %s486
        %p488 = pneg %p51
        %p489 = pneg %p48
        %s490 = smul.u32 16, %s30
        %p491 = scmp.lt.s32.totalorder %s490, 31
        %s492 = scalar_select %p491, %s490, 31
        %s493 = smul.addr %s492, 8
        %s494 = scalar_lea.vmem %s1, %s493
        %p495 = pneg %p77
        %p496 = pneg %p74
        %p497 = pneg %p98
        %p498 = pneg %p95
        %p499 = pneg %p119
        %p500 = pneg %p116
        %p501 = pneg %p140
        %p502 = pneg %p137
        %p503 = pneg %p161
        %p504 = pneg %p158
        %p505 = pneg %p182
        %p506 = pneg %p179
        %p507 = pneg %p203
        %p508 = pneg %p200
        %p509 = pneg %p224
        %p510 = pneg %p221
        %p511 = pneg %p245
        %p512 = pneg %p242
        %p513 = pneg %p266
        %p514 = pneg %p263
        %p515 = pneg %p287
        %p516 = pneg %p284
        %p517 = pneg %p308
        %p518 = pneg %p305
        %p519 = pneg %p329
        %p520 = pneg %p326
        %p521 = pneg %p350
        %p522 = pneg %p347
        %p523 = pneg %p371
        %p524 = pneg %p368
        %p525 = pneg %p397
        %p526 = pneg %p394
        %s527 = sand.u32 %s384, 1
        %s528 = scalar_lea.sflag [#allocation3], %s527
        %s529 = sand.u32 %s384, 1
        %s530 = smul.addr %s529, 128
        %s531 = scalar_lea.vmem [#allocation2], %s530
        %s532 = smul.u32 16, %s30
        %p533 = scmp.lt.s32.totalorder %s532, 31
        %s534 = scalar_select %p533, %s532, 31
        %s535 = smul.addr %s534, 8
        %s536 = scalar_lea.vmem %s0, %s535
        %s537 = smul.u32 16, %s30
        %s538 = smul.u32 16, %s30
        %p539 = scmp.lt.s32.totalorder %s538, 31
        %s540 = scalar_select %p539, %s538, 31
        %s541 = smul.addr %s540, 8
        %s542 = scalar_lea.vmem %s1, %s541
        %s543 = smul.u32 16, %s30
        %s544 = smul.u32 16, %s30
        %v545 = vld [vmem:[%s536] sm:$0xff]
        %v546 = vld [vmem:[%s536 + $0x8] sm:$0xff]
        %v547 = vld [vmem:[%s536 + $0x10] sm:$0xff]
        %v548 = vld [vmem:[%s536 + $0x18] sm:$0xff]
        %v549 = vld [vmem:[%s536 + $0x20] sm:$0xff]
        %v550 = vld [vmem:[%s536 + $0x28] sm:$0xff]
        %v551 = vld [vmem:[%s536 + $0x30] sm:$0xff]
        %v552 = vld [vmem:[%s536 + $0x38] sm:$0xff]
        %v553 = vld [vmem:[%s536 + $0x40] sm:$0xff]
        %v554 = vld [vmem:[%s536 + $0x48] sm:$0xff]
        %v555 = vld [vmem:[%s536 + $0x50] sm:$0xff]
        %v556 = vld [vmem:[%s536 + $0x58] sm:$0xff]
        %v557 = vld [vmem:[%s536 + $0x60] sm:$0xff]
        %v558 = vld [vmem:[%s536 + $0x68] sm:$0xff]
        %v559 = vld [vmem:[%s536 + $0x70] sm:$0xff]
        %v560 = vld [vmem:[%s536 + $0x78] sm:$0xff]
        %v561 = vld [vmem:[%s542] sm:$0xff]
        %v562 = vld [vmem:[%s542 + $0x8] sm:$0xff]
        %v563 = vld [vmem:[%s542 + $0x10] sm:$0xff]
        %v564 = vld [vmem:[%s542 + $0x18] sm:$0xff]
        %v565 = vld [vmem:[%s542 + $0x20] sm:$0xff]
        %v566 = vld [vmem:[%s542 + $0x28] sm:$0xff]
        %v567 = vld [vmem:[%s542 + $0x30] sm:$0xff]
        %v568 = vld [vmem:[%s542 + $0x38] sm:$0xff]
        %v569 = vld [vmem:[%s542 + $0x40] sm:$0xff]
        %v570 = vld [vmem:[%s542 + $0x48] sm:$0xff]
        %v571 = vld [vmem:[%s542 + $0x50] sm:$0xff]
        %v572 = vld [vmem:[%s542 + $0x58] sm:$0xff]
        %v573 = vld [vmem:[%s542 + $0x60] sm:$0xff]
        %v574 = vld [vmem:[%s542 + $0x68] sm:$0xff]
        %v575 = vld [vmem:[%s542 + $0x70] sm:$0xff]
        %v576 = vld [vmem:[%s542 + $0x78] sm:$0xff]
        %v577 = vld [vmem:[%s2] sm:$0x3]
        %v578 = vld [vmem:[%s3] sm:$0x1]
        %580 = vset.pattern.permute.xlu0 0
        %581 = vperm.xlu0 %580, %v545
        %v582 = vpop.permute.xlu0 %581
        %585 = vset.pattern.permute.xlu0 0
        %586 = vperm.xlu0 %585, %v546
        %v587 = vpop.permute.xlu0 %586
        %590 = vset.pattern.permute.xlu0 0
        %591 = vperm.xlu0 %590, %v547
        %v592 = vpop.permute.xlu0 %591
        %595 = vset.pattern.permute.xlu0 0
        %596 = vperm.xlu0 %595, %v548
        %v597 = vpop.permute.xlu0 %596
        %600 = vset.pattern.permute.xlu0 0
        %601 = vperm.xlu0 %600, %v549
        %v602 = vpop.permute.xlu0 %601
        %605 = vset.pattern.permute.xlu0 0
        %606 = vperm.xlu0 %605, %v550
        %v607 = vpop.permute.xlu0 %606
        %610 = vset.pattern.permute.xlu0 0
        %611 = vperm.xlu0 %610, %v551
        %v612 = vpop.permute.xlu0 %611
        %615 = vset.pattern.permute.xlu0 0
        %616 = vperm.xlu0 %615, %v552
        %v617 = vpop.permute.xlu0 %616
        %620 = vset.pattern.permute.xlu0 0
        %621 = vperm.xlu0 %620, %v553
        %v622 = vpop.permute.xlu0 %621
        %625 = vset.pattern.permute.xlu0 0
        %626 = vperm.xlu0 %625, %v554
        %v627 = vpop.permute.xlu0 %626
        %630 = vset.pattern.permute.xlu0 0
        %631 = vperm.xlu0 %630, %v555
        %v632 = vpop.permute.xlu0 %631
        %635 = vset.pattern.permute.xlu0 0
        %636 = vperm.xlu0 %635, %v556
        %v637 = vpop.permute.xlu0 %636
        %640 = vset.pattern.permute.xlu0 0
        %641 = vperm.xlu0 %640, %v557
        %v642 = vpop.permute.xlu0 %641
        %645 = vset.pattern.permute.xlu0 0
        %646 = vperm.xlu0 %645, %v558
        %v647 = vpop.permute.xlu0 %646
        %650 = vset.pattern.permute.xlu0 0
        %651 = vperm.xlu0 %650, %v559
        %v652 = vpop.permute.xlu0 %651
        %655 = vset.pattern.permute.xlu0 0
        %656 = vperm.xlu0 %655, %v560
        %v657 = vpop.permute.xlu0 %656
        %v659 = vlaneseq
        %v660 = vshrl.u32 %v659, 7
        %v661 = vsub.s32 0, %v660
        %v662 = vrot.slane %v577, %v661
        %v663 = vmul.f32 %v582, %v662
        %v664 = vmul.f32 %v587, %v662
        %v665 = vmul.f32 %v592, %v662
        %v666 = vmul.f32 %v597, %v662
        %v667 = vmul.f32 %v602, %v662
        %v668 = vmul.f32 %v607, %v662
        %v669 = vmul.f32 %v612, %v662
        %v670 = vmul.f32 %v617, %v662
        %v671 = vmul.f32 %v622, %v662
        %v672 = vmul.f32 %v627, %v662
        %v673 = vmul.f32 %v632, %v662
        %v674 = vmul.f32 %v637, %v662
        %v675 = vmul.f32 %v642, %v662
        %v676 = vmul.f32 %v647, %v662
        %v677 = vmul.f32 %v652, %v662
        %v678 = vmul.f32 %v657, %v662
        %v680 = vlaneseq
        %v681 = vshrl.u32 %v680, 7
        %v682 = vsub.s32 0, %v681
        %v683 = vrot.slane %v578, %v682
        %v685 = vadd.f32 %v683, %v663
        %v686 = vadd.f32 %v683, %v664
        %v687 = vadd.f32 %v683, %v665
        %v688 = vadd.f32 %v683, %v666
        %v689 = vadd.f32 %v683, %v667
        %v690 = vadd.f32 %v683, %v668
        %v691 = vadd.f32 %v683, %v669
        %v692 = vadd.f32 %v683, %v670
        %v693 = vadd.f32 %v683, %v671
        %v694 = vadd.f32 %v683, %v672
        %v695 = vadd.f32 %v683, %v673
        %v696 = vadd.f32 %v683, %v674
        %v697 = vadd.f32 %v683, %v675
        %v698 = vadd.f32 %v683, %v676
        %v699 = vadd.f32 %v683, %v677
        %v700 = vadd.f32 %v683, %v678
        %701 = vset.pattern.permute.xlu0 1
        %702 = vperm.xlu0 %701, %v545
        %v703 = vpop.permute.xlu0 %702
        %705 = vset.pattern.permute.xlu0 1
        %706 = vperm.xlu0 %705, %v546
        %v707 = vpop.permute.xlu0 %706
        %709 = vset.pattern.permute.xlu0 1
        %710 = vperm.xlu0 %709, %v547
        %v711 = vpop.permute.xlu0 %710
        %713 = vset.pattern.permute.xlu0 1
        %714 = vperm.xlu0 %713, %v548
        %v715 = vpop.permute.xlu0 %714
        %717 = vset.pattern.permute.xlu0 1
        %718 = vperm.xlu0 %717, %v549
        %v719 = vpop.permute.xlu0 %718
        %721 = vset.pattern.permute.xlu0 1
        %722 = vperm.xlu0 %721, %v550
        %v723 = vpop.permute.xlu0 %722
        %725 = vset.pattern.permute.xlu0 1
        %726 = vperm.xlu0 %725, %v551
        %v727 = vpop.permute.xlu0 %726
        %729 = vset.pattern.permute.xlu0 1
        %730 = vperm.xlu0 %729, %v552
        %v731 = vpop.permute.xlu0 %730
        %733 = vset.pattern.permute.xlu0 1
        %734 = vperm.xlu0 %733, %v553
        %v735 = vpop.permute.xlu0 %734
        %737 = vset.pattern.permute.xlu0 1
        %738 = vperm.xlu0 %737, %v554
        %v739 = vpop.permute.xlu0 %738
        %741 = vset.pattern.permute.xlu0 1
        %742 = vperm.xlu0 %741, %v555
        %v743 = vpop.permute.xlu0 %742
        %745 = vset.pattern.permute.xlu0 1
        %746 = vperm.xlu0 %745, %v556
        %v747 = vpop.permute.xlu0 %746
        %749 = vset.pattern.permute.xlu0 1
        %750 = vperm.xlu0 %749, %v557
        %v751 = vpop.permute.xlu0 %750
        %753 = vset.pattern.permute.xlu0 1
        %754 = vperm.xlu0 %753, %v558
        %v755 = vpop.permute.xlu0 %754
        %757 = vset.pattern.permute.xlu0 1
        %758 = vperm.xlu0 %757, %v559
        %v759 = vpop.permute.xlu0 %758
        %761 = vset.pattern.permute.xlu0 1
        %762 = vperm.xlu0 %761, %v560
        %v763 = vpop.permute.xlu0 %762
        %v765 = vlaneseq
        %v766 = vshrl.u32 %v765, 7
        %v767 = vsub.s32 1, %v766
        %v768 = vrot.slane %v577, %v767
        %v769 = vmul.f32 %v703, %v768
        %v770 = vmul.f32 %v707, %v768
        %v771 = vmul.f32 %v711, %v768
        %v772 = vmul.f32 %v715, %v768
        %v773 = vmul.f32 %v719, %v768
        %v774 = vmul.f32 %v723, %v768
        %v775 = vmul.f32 %v727, %v768
        %v776 = vmul.f32 %v731, %v768
        %v777 = vmul.f32 %v735, %v768
        %v778 = vmul.f32 %v739, %v768
        %v779 = vmul.f32 %v743, %v768
        %v780 = vmul.f32 %v747, %v768
        %v781 = vmul.f32 %v751, %v768
        %v782 = vmul.f32 %v755, %v768
        %v783 = vmul.f32 %v759, %v768
        %v784 = vmul.f32 %v763, %v768
        %v785 = vadd.f32 %v685, %v769
        %v786 = vadd.f32 %v686, %v770
        %v787 = vadd.f32 %v687, %v771
        %v788 = vadd.f32 %v688, %v772
        %v789 = vadd.f32 %v689, %v773
        %v790 = vadd.f32 %v690, %v774
        %v791 = vadd.f32 %v691, %v775
        %v792 = vadd.f32 %v692, %v776
        %v793 = vadd.f32 %v693, %v777
        %v794 = vadd.f32 %v694, %v778
        %v795 = vadd.f32 %v695, %v779
        %v796 = vadd.f32 %v696, %v780
        %v797 = vadd.f32 %v697, %v781
        %v798 = vadd.f32 %v698, %v782
        %v799 = vadd.f32 %v699, %v783
        %v800 = vadd.f32 %v700, %v784
        %v801 = vmax.f32 %v785, 0.0
        %v802 = vmax.f32 %v786, 0.0
        %v803 = vmax.f32 %v787, 0.0
        %v804 = vmax.f32 %v788, 0.0
        %v805 = vmax.f32 %v789, 0.0
        %v806 = vmax.f32 %v790, 0.0
        %v807 = vmax.f32 %v791, 0.0
        %v808 = vmax.f32 %v792, 0.0
        %v809 = vmax.f32 %v793, 0.0
        %v810 = vmax.f32 %v794, 0.0
        %v811 = vmax.f32 %v795, 0.0
        %v812 = vmax.f32 %v796, 0.0
        %v813 = vmax.f32 %v797, 0.0
        %v814 = vmax.f32 %v798, 0.0
        %v815 = vmax.f32 %v799, 0.0
        %v816 = vmax.f32 %v800, 0.0
        %v817 = vld [vmem:[%s4] sm:$0xff]
        %v818 = vld [vmem:[%s4 + $0x8] sm:$0xff]
        %v819 = vld [vmem:[%s4 + $0x10] sm:$0xff]
        %v820 = vld [vmem:[%s4 + $0x18] sm:$0xff]
        %v821 = vld [vmem:[%s5] sm:$0x1]
        %v823 = vlaneseq
        %v824 = vshrl.u32 %v823, 7
        %v825 = vsub.s32 0, %v824
        %v826 = vrot.slane %v821, %v825
        %vm828 = vcmask 261120
        %v830 = vsel %vm828, %v801, 0
        %v833 = vsel %vm828, %v802, 0
        %v836 = vsel %vm828, %v803, 0
        %v839 = vsel %vm828, %v804, 0
        %v842 = vsel %vm828, %v805, 0
        %v845 = vsel %vm828, %v806, 0
        %v848 = vsel %vm828, %v807, 0
        %v851 = vsel %vm828, %v808, 0
        %v854 = vsel %vm828, %v809, 0
        %v857 = vsel %vm828, %v810, 0
        %v860 = vsel %vm828, %v811, 0
        %v863 = vsel %vm828, %v812, 0
        %v866 = vsel %vm828, %v813, 0
        %v869 = vsel %vm828, %v814, 0
        %v872 = vsel %vm828, %v815, 0
        %v875 = vsel %vm828, %v816, 0
        %877 = vmatprep.subr.mxu0 0.0
        %878 = vmatpush1.msra.mxu0 %v817
        %879 = vmatprep.subr.mxu0 0.0
        %880 = vmatpush1.msra.mxu0 %v818
        %881 = vmatprep.subr.mxu0 0.0
        %882 = vmatpush1.msra.mxu0 %v819
        %883 = vmatprep.subr.mxu0 0.0
        %884 = vmatpush1.msra.mxu0 %v820
        %885 = vmatprep.subr.mxu0 0.0
        %886 = vmatpush1.msra.mxu0 0.0
        %887 = vmatprep.subr.mxu0 0.0
        %888 = vmatpush1.msra.mxu0 0.0
        %889 = vmatprep.subr.mxu0 0.0
        %890 = vmatpush1.msra.mxu0 0.0
        %891 = vmatprep.subr.mxu0 0.0
        %892 = vmatpush1.msra.mxu0 0.0
        %893 = vmatprep.subr.mxu0 0.0
        %894 = vmatpush1.msra.mxu0 0.0
        %895 = vmatprep.subr.mxu0 0.0
        %896 = vmatpush1.msra.mxu0 0.0
        %897 = vmatprep.subr.mxu0 0.0
        %898 = vmatpush1.msra.mxu0 0.0
        %899 = vmatprep.subr.mxu0 0.0
        %900 = vmatpush1.msra.mxu0 0.0
        %901 = vmatprep.subr.mxu0 0.0
        %902 = vmatpush1.msra.mxu0 0.0
        %903 = vmatprep.subr.mxu0 0.0
        %904 = vmatpush1.msra.mxu0 0.0
        %905 = vmatprep.subr.mxu0 0.0
        %906 = vmatpush1.msra.mxu0 0.0
        %907 = vmatprep.subr.mxu0 0.0
        %908 = vmatpush1.msra.mxu0 0.0
        %909 = vmatprep.subr.mxu0 0.0
        %910 = vmatpush1.msra.mxu0 0.0
        %911 = vmatprep.subr.mxu0 0.0
        %912 = vmatpush1.msra.mxu0 0.0
        %913 = vmatprep.subr.mxu0 0.0
        %914 = vmatpush1.msra.mxu0 0.0
        %915 = vmatprep.subr.mxu0 0.0
        %916 = vmatpush1.msra.mxu0 0.0
        %917 = vmatprep.subr.mxu0 0.0
        %918 = vmatpush1.msra.mxu0 0.0
        %919 = vmatprep.subr.mxu0 0.0
        %920 = vmatpush1.msra.mxu0 0.0
        %921 = vmatprep.subr.mxu0 0.0
        %922 = vmatpush1.msra.mxu0 0.0
        %923 = vmatprep.subr.mxu0 0.0
        %924 = vmatpush1.msra.mxu0 0.0
        %925 = vmatprep.subr.mxu0 0.0
        %926 = vmatpush1.msra.mxu0 0.0
        %927 = vmatprep.subr.mxu0 0.0
        %928 = vmatpush1.msra.mxu0 0.0
        %929 = vmatprep.subr.mxu0 0.0
        %930 = vmatpush1.msra.mxu0 0.0
        %931 = vmatprep.subr.mxu0 0.0
        %932 = vmatpush1.msra.mxu0 0.0
        %933 = vmatprep.subr.mxu0 0.0
        %934 = vmatpush1.msra.mxu0 0.0
        %935 = vmatprep.subr.mxu0 0.0
        %936 = vmatpush1.msra.mxu0 0.0
        %937 = vmatprep.subr.mxu0 0.0
        %938 = vmatpush1.msra.mxu0 0.0
        %939 = vmatprep.subr.mxu0 0.0
        %940 = vmatpush1.msra.mxu0 0.0
        %941 = vmatprep.mubr.f32.mxu0 0.0
        %942 = vmatmul.mubr.f32.gmra.mrb[0].mxu0 %v830
        %v943 = vpop.f32.mrb[0].mxu0
        %v944 = vadd.f32 %v826, %v943
        %v945 = vpop.f32.mrb[0].mxu0
        %946 = vmatprep.mubr.f32.mxu0 0.0
        %947 = vmatmul.mubr.f32.gmra.mrb[0].mxu0 %v833
        %v948 = vpop.f32.mrb[0].mxu0
        %v949 = vadd.f32 %v826, %v948
        %v950 = vpop.f32.mrb[0].mxu0
        %951 = vmatprep.mubr.f32.mxu0 0.0
        %952 = vmatmul.mubr.f32.gmra.mrb[0].mxu0 %v836
        %v953 = vpop.f32.mrb[0].mxu0
        %v954 = vadd.f32 %v826, %v953
        %v955 = vpop.f32.mrb[0].mxu0
        %956 = vmatprep.mubr.f32.mxu0 0.0
        %957 = vmatmul.mubr.f32.gmra.mrb[0].mxu0 %v839
        %v958 = vpop.f32.mrb[0].mxu0
        %v959 = vadd.f32 %v826, %v958
        %v960 = vpop.f32.mrb[0].mxu0
        %961 = vmatprep.mubr.f32.mxu0 0.0
        %962 = vmatmul.mubr.f32.gmra.mrb[0].mxu0 %v842
        %v963 = vpop.f32.mrb[0].mxu0
        %v964 = vadd.f32 %v826, %v963
        %v965 = vpop.f32.mrb[0].mxu0
        %966 = vmatprep.mubr.f32.mxu0 0.0
        %967 = vmatmul.mubr.f32.gmra.mrb[0].mxu0 %v845
        %v968 = vpop.f32.mrb[0].mxu0
        %v969 = vadd.f32 %v826, %v968
        %v970 = vpop.f32.mrb[0].mxu0
        %971 = vmatprep.mubr.f32.mxu0 0.0
        %972 = vmatmul.mubr.f32.gmra.mrb[0].mxu0 %v848
        %v973 = vpop.f32.mrb[0].mxu0
        %v974 = vadd.f32 %v826, %v973
        %v975 = vpop.f32.mrb[0].mxu0
        %976 = vmatprep.mubr.f32.mxu0 0.0
        %977 = vmatmul.mubr.f32.gmra.mrb[0].mxu0 %v851
        %v978 = vpop.f32.mrb[0].mxu0
        %v979 = vadd.f32 %v826, %v978
        %v980 = vpop.f32.mrb[0].mxu0
        %981 = vmatprep.mubr.f32.mxu0 0.0
        %982 = vmatmul.mubr.f32.gmra.mrb[0].mxu0 %v854
        %v983 = vpop.f32.mrb[0].mxu0
        %v984 = vadd.f32 %v826, %v983
        %v985 = vpop.f32.mrb[0].mxu0
        %986 = vmatprep.mubr.f32.mxu0 0.0
        %987 = vmatmul.mubr.f32.gmra.mrb[0].mxu0 %v857
        %v988 = vpop.f32.mrb[0].mxu0
        %v989 = vadd.f32 %v826, %v988
        %v990 = vpop.f32.mrb[0].mxu0
        %991 = vmatprep.mubr.f32.mxu0 0.0
        %992 = vmatmul.mubr.f32.gmra.mrb[0].mxu0 %v860
        %v993 = vpop.f32.mrb[0].mxu0
        %v994 = vadd.f32 %v826, %v993
        %v995 = vpop.f32.mrb[0].mxu0
        %996 = vmatprep.mubr.f32.mxu0 0.0
        %997 = vmatmul.mubr.f32.gmra.mrb[0].mxu0 %v863
        %v998 = vpop.f32.mrb[0].mxu0
        %v999 = vadd.f32 %v826, %v998
        %v1000 = vpop.f32.mrb[0].mxu0
        %1001 = vmatprep.mubr.f32.mxu0 0.0
        %1002 = vmatmul.mubr.f32.gmra.mrb[0].mxu0 %v866
        %v1003 = vpop.f32.mrb[0].mxu0
        %v1004 = vadd.f32 %v826, %v1003
        %v1005 = vpop.f32.mrb[0].mxu0
        %1006 = vmatprep.mubr.f32.mxu0 0.0
        %1007 = vmatmul.mubr.f32.gmra.mrb[0].mxu0 %v869
        %v1008 = vpop.f32.mrb[0].mxu0
        %v1009 = vadd.f32 %v826, %v1008
        %v1010 = vpop.f32.mrb[0].mxu0
        %1011 = vmatprep.mubr.f32.mxu0 0.0
        %1012 = vmatmul.mubr.f32.gmra.mrb[0].mxu0 %v872
        %v1013 = vpop.f32.mrb[0].mxu0
        %v1014 = vadd.f32 %v826, %v1013
        %v1015 = vpop.f32.mrb[0].mxu0
        %1016 = vmatprep.mubr.f32.mxu0 0.0
        %1017 = vmatmul.mubr.f32.gmra.mrb[0].mxu0 %v875
        %v1018 = vpop.f32.mrb[0].mxu0
        %v1019 = vadd.f32 %v826, %v1018
        %v1020 = vpop.f32.mrb[0].mxu0
        %1021 = vdwg.mxu0
        %v1022 = vmax.f32 %v944, 0.0
        %v1023 = vmax.f32 %v949, 0.0
        %v1024 = vmax.f32 %v954, 0.0
        %v1025 = vmax.f32 %v959, 0.0
        %v1026 = vmax.f32 %v964, 0.0
        %v1027 = vmax.f32 %v969, 0.0
        %v1028 = vmax.f32 %v974, 0.0
        %v1029 = vmax.f32 %v979, 0.0
        %v1030 = vmax.f32 %v984, 0.0
        %v1031 = vmax.f32 %v989, 0.0
        %v1032 = vmax.f32 %v994, 0.0
        %v1033 = vmax.f32 %v999, 0.0
        %v1034 = vmax.f32 %v1004, 0.0
        %v1035 = vmax.f32 %v1009, 0.0
        %v1036 = vmax.f32 %v1014, 0.0
        %v1037 = vmax.f32 %v1019, 0.0
        %v1039 = vsel %vm828, %v1022, 0
        %v1042 = vsel %vm828, %v1023, 0
        %v1045 = vsel %vm828, %v1024, 0
        %v1048 = vsel %vm828, %v1025, 0
        %v1051 = vsel %vm828, %v1026, 0
        %v1054 = vsel %vm828, %v1027, 0
        %v1057 = vsel %vm828, %v1028, 0
        %v1060 = vsel %vm828, %v1029, 0
        %v1063 = vsel %vm828, %v1030, 0
        %v1066 = vsel %vm828, %v1031, 0
        %v1069 = vsel %vm828, %v1032, 0
        %v1072 = vsel %vm828, %v1033, 0
        %v1075 = vsel %vm828, %v1034, 0
        %v1078 = vsel %vm828, %v1035, 0
        %v1081 = vsel %vm828, %v1036, 0
        %v1084 = vsel %vm828, %v1037, 0
        %1086 = vmatprep.subr.mxu0 0.0
        %1087 = vmatpush1.msra.mxu0 %v817
        %1088 = vmatprep.subr.mxu0 0.0
        %1089 = vmatpush1.msra.mxu0 %v818
        %1090 = vmatprep.subr.mxu0 0.0
        %1091 = vmatpush1.msra.mxu0 %v819
        %1092 = vmatprep.subr.mxu0 0.0
        %1093 = vmatpush1.msra.mxu0 %v820
        %1094 = vmatprep.subr.mxu0 0.0
        %1095 = vmatpush1.msra.mxu0 0.0
        %1096 = vmatprep.subr.mxu0 0.0
        %1097 = vmatpush1.msra.mxu0 0.0
        %1098 = vmatprep.subr.mxu0 0.0
        %1099 = vmatpush1.msra.mxu0 0.0
        %1100 = vmatprep.subr.mxu0 0.0
        %1101 = vmatpush1.msra.mxu0 0.0
        %1102 = vmatprep.subr.mxu0 0.0
        %1103 = vmatpush1.msra.mxu0 0.0
        %1104 = vmatprep.subr.mxu0 0.0
        %1105 = vmatpush1.msra.mxu0 0.0
        %1106 = vmatprep.subr.mxu0 0.0
        %1107 = vmatpush1.msra.mxu0 0.0
        %1108 = vmatprep.subr.mxu0 0.0
        %1109 = vmatpush1.msra.mxu0 0.0
        %1110 = vmatprep.subr.mxu0 0.0
        %1111 = vmatpush1.msra.mxu0 0.0
        %1112 = vmatprep.subr.mxu0 0.0
        %1113 = vmatpush1.msra.mxu0 0.0
        %1114 = vmatprep.subr.mxu0 0.0
        %1115 = vmatpush1.msra.mxu0 0.0
        %1116 = vmatprep.subr.mxu0 0.0
        %1117 = vmatpush1.msra.mxu0 0.0
        %1118 = vmatprep.subr.mxu0 0.0
        %1119 = vmatpush1.msra.mxu0 0.0
        %1120 = vmatprep.subr.mxu0 0.0
        %1121 = vmatpush1.msra.mxu0 0.0
        %1122 = vmatprep.subr.mxu0 0.0
        %1123 = vmatpush1.msra.mxu0 0.0
        %1124 = vmatprep.subr.mxu0 0.0
        %1125 = vmatpush1.msra.mxu0 0.0
        %1126 = vmatprep.subr.mxu0 0.0
        %1127 = vmatpush1.msra.mxu0 0.0
        %1128 = vmatprep.subr.mxu0 0.0
        %1129 = vmatpush1.msra.mxu0 0.0
        %1130 = vmatprep.subr.mxu0 0.0
        %1131 = vmatpush1.msra.mxu0 0.0
        %1132 = vmatprep.subr.mxu0 0.0
        %1133 = vmatpush1.msra.mxu0 0.0
        %1134 = vmatprep.subr.mxu0 0.0
        %1135 = vmatpush1.msra.mxu0 0.0
        %1136 = vmatprep.subr.mxu0 0.0
        %1137 = vmatpush1.msra.mxu0 0.0
        %1138 = vmatprep.subr.mxu0 0.0
        %1139 = vmatpush1.msra.mxu0 0.0
        %1140 = vmatprep.subr.mxu0 0.0
        %1141 = vmatpush1.msra.mxu0 0.0
        %1142 = vmatprep.subr.mxu0 0.0
        %1143 = vmatpush1.msra.mxu0 0.0
        %1144 = vmatprep.subr.mxu0 0.0
        %1145 = vmatpush1.msra.mxu0 0.0
        %1146 = vmatprep.subr.mxu0 0.0
        %1147 = vmatpush1.msra.mxu0 0.0
        %1148 = vmatprep.subr.mxu0 0.0
        %1149 = vmatpush1.msra.mxu0 0.0
        %1150 = vmatprep.mubr.f32.mxu0 0.0
        %1151 = vmatmul.mubr.f32.gmra.mrb[0].mxu0 %v1039
        %v1152 = vpop.f32.mrb[0].mxu0
        %v1153 = vadd.f32 %v826, %v1152
        %v1154 = vpop.f32.mrb[0].mxu0
        %1155 = vmatprep.mubr.f32.mxu0 0.0
        %1156 = vmatmul.mubr.f32.gmra.mrb[0].mxu0 %v1042
        %v1157 = vpop.f32.mrb[0].mxu0
        %v1158 = vadd.f32 %v826, %v1157
        %v1159 = vpop.f32.mrb[0].mxu0
        %1160 = vmatprep.mubr.f32.mxu0 0.0
        %1161 = vmatmul.mubr.f32.gmra.mrb[0].mxu0 %v1045
        %v1162 = vpop.f32.mrb[0].mxu0
        %v1163 = vadd.f32 %v826, %v1162
        %v1164 = vpop.f32.mrb[0].mxu0
        %1165 = vmatprep.mubr.f32.mxu0 0.0
        %1166 = vmatmul.mubr.f32.gmra.mrb[0].mxu0 %v1048
        %v1167 = vpop.f32.mrb[0].mxu0
        %v1168 = vadd.f32 %v826, %v1167
        %v1169 = vpop.f32.mrb[0].mxu0
        %1170 = vmatprep.mubr.f32.mxu0 0.0
        %1171 = vmatmul.mubr.f32.gmra.mrb[0].mxu0 %v1051
        %v1172 = vpop.f32.mrb[0].mxu0
        %v1173 = vadd.f32 %v826, %v1172
        %v1174 = vpop.f32.mrb[0].mxu0
        %1175 = vmatprep.mubr.f32.mxu0 0.0
        %1176 = vmatmul.mubr.f32.gmra.mrb[0].mxu0 %v1054
        %v1177 = vpop.f32.mrb[0].mxu0
        %v1178 = vadd.f32 %v826, %v1177
        %v1179 = vpop.f32.mrb[0].mxu0
        %1180 = vmatprep.mubr.f32.mxu0 0.0
        %1181 = vmatmul.mubr.f32.gmra.mrb[0].mxu0 %v1057
        %v1182 = vpop.f32.mrb[0].mxu0
        %v1183 = vadd.f32 %v826, %v1182
        %v1184 = vpop.f32.mrb[0].mxu0
        %1185 = vmatprep.mubr.f32.mxu0 0.0
        %1186 = vmatmul.mubr.f32.gmra.mrb[0].mxu0 %v1060
        %v1187 = vpop.f32.mrb[0].mxu0
        %v1188 = vadd.f32 %v826, %v1187
        %v1189 = vpop.f32.mrb[0].mxu0
        %1190 = vmatprep.mubr.f32.mxu0 0.0
        %1191 = vmatmul.mubr.f32.gmra.mrb[0].mxu0 %v1063
        %v1192 = vpop.f32.mrb[0].mxu0
        %v1193 = vadd.f32 %v826, %v1192
        %v1194 = vpop.f32.mrb[0].mxu0
        %1195 = vmatprep.mubr.f32.mxu0 0.0
        %1196 = vmatmul.mubr.f32.gmra.mrb[0].mxu0 %v1066
        %v1197 = vpop.f32.mrb[0].mxu0
        %v1198 = vadd.f32 %v826, %v1197
        %v1199 = vpop.f32.mrb[0].mxu0
        %1200 = vmatprep.mubr.f32.mxu0 0.0
        %1201 = vmatmul.mubr.f32.gmra.mrb[0].mxu0 %v1069
        %v1202 = vpop.f32.mrb[0].mxu0
        %v1203 = vadd.f32 %v826, %v1202
        %v1204 = vpop.f32.mrb[0].mxu0
        %1205 = vmatprep.mubr.f32.mxu0 0.0
        %1206 = vmatmul.mubr.f32.gmra.mrb[0].mxu0 %v1072
        %v1207 = vpop.f32.mrb[0].mxu0
        %v1208 = vadd.f32 %v826, %v1207
        %v1209 = vpop.f32.mrb[0].mxu0
        %1210 = vmatprep.mubr.f32.mxu0 0.0
        %1211 = vmatmul.mubr.f32.gmra.mrb[0].mxu0 %v1075
        %v1212 = vpop.f32.mrb[0].mxu0
        %v1213 = vadd.f32 %v826, %v1212
        %v1214 = vpop.f32.mrb[0].mxu0
        %1215 = vmatprep.mubr.f32.mxu0 0.0
        %1216 = vmatmul.mubr.f32.gmra.mrb[0].mxu0 %v1078
        %v1217 = vpop.f32.mrb[0].mxu0
        %v1218 = vadd.f32 %v826, %v1217
        %v1219 = vpop.f32.mrb[0].mxu0
        %1220 = vmatprep.mubr.f32.mxu0 0.0
        %1221 = vmatmul.mubr.f32.gmra.mrb[0].mxu0 %v1081
        %v1222 = vpop.f32.mrb[0].mxu0
        %v1223 = vadd.f32 %v826, %v1222
        %v1224 = vpop.f32.mrb[0].mxu0
        %1225 = vmatprep.mubr.f32.mxu0 0.0
        %1226 = vmatmul.mubr.f32.gmra.mrb[0].mxu0 %v1084
        %v1227 = vpop.f32.mrb[0].mxu0
        %v1228 = vadd.f32 %v826, %v1227
        %v1229 = vpop.f32.mrb[0].mxu0
        %1230 = vdwg.mxu0
        %v1231 = vmax.f32 %v1153, 0.0
        %v1232 = vmax.f32 %v1158, 0.0
        %v1233 = vmax.f32 %v1163, 0.0
        %v1234 = vmax.f32 %v1168, 0.0
        %v1235 = vmax.f32 %v1173, 0.0
        %v1236 = vmax.f32 %v1178, 0.0
        %v1237 = vmax.f32 %v1183, 0.0
        %v1238 = vmax.f32 %v1188, 0.0
        %v1239 = vmax.f32 %v1193, 0.0
        %v1240 = vmax.f32 %v1198, 0.0
        %v1241 = vmax.f32 %v1203, 0.0
        %v1242 = vmax.f32 %v1208, 0.0
        %v1243 = vmax.f32 %v1213, 0.0
        %v1244 = vmax.f32 %v1218, 0.0
        %v1245 = vmax.f32 %v1223, 0.0
        %v1246 = vmax.f32 %v1228, 0.0
        %v1247 = vld [vmem:[%s6] sm:$0xff]
        %v1248 = vld [vmem:[%s6 + $0x8] sm:$0xff]
        %v1249 = vld [vmem:[%s6 + $0x10] sm:$0xff]
        %v1250 = vld [vmem:[%s6 + $0x18] sm:$0xff]
        %v1251 = vld [vmem:[%s7] sm:$0x1]
        %v1253 = vlaneseq
        %v1254 = vshrl.u32 %v1253, 7
        %v1255 = vsub.s32 0, %v1254
        %v1256 = vrot.slane %v1251, %v1255
        %v1259 = vsel %vm828, %v1231, 0
        %v1262 = vsel %vm828, %v1232, 0
        %v1265 = vsel %vm828, %v1233, 0
        %v1268 = vsel %vm828, %v1234, 0
        %v1271 = vsel %vm828, %v1235, 0
        %v1274 = vsel %vm828, %v1236, 0
        %v1277 = vsel %vm828, %v1237, 0
        %v1280 = vsel %vm828, %v1238, 0
        %v1283 = vsel %vm828, %v1239, 0
        %v1286 = vsel %vm828, %v1240, 0
        %v1289 = vsel %vm828, %v1241, 0
        %v1292 = vsel %vm828, %v1242, 0
        %v1295 = vsel %vm828, %v1243, 0
        %v1298 = vsel %vm828, %v1244, 0
        %v1301 = vsel %vm828, %v1245, 0
        %v1304 = vsel %vm828, %v1246, 0
        %1306 = vmatprep.subr.mxu0 0.0
        %1307 = vmatpush1.msra.mxu0 %v1247
        %1308 = vmatprep.subr.mxu0 0.0
        %1309 = vmatpush1.msra.mxu0 %v1248
        %1310 = vmatprep.subr.mxu0 0.0
        %1311 = vmatpush1.msra.mxu0 %v1249
        %1312 = vmatprep.subr.mxu0 0.0
        %1313 = vmatpush1.msra.mxu0 %v1250
        %1314 = vmatprep.subr.mxu0 0.0
        %1315 = vmatpush1.msra.mxu0 0.0
        %1316 = vmatprep.subr.mxu0 0.0
        %1317 = vmatpush1.msra.mxu0 0.0
        %1318 = vmatprep.subr.mxu0 0.0
        %1319 = vmatpush1.msra.mxu0 0.0
        %1320 = vmatprep.subr.mxu0 0.0
        %1321 = vmatpush1.msra.mxu0 0.0
        %1322 = vmatprep.subr.mxu0 0.0
        %1323 = vmatpush1.msra.mxu0 0.0
        %1324 = vmatprep.subr.mxu0 0.0
        %1325 = vmatpush1.msra.mxu0 0.0
        %1326 = vmatprep.subr.mxu0 0.0
        %1327 = vmatpush1.msra.mxu0 0.0
        %1328 = vmatprep.subr.mxu0 0.0
        %1329 = vmatpush1.msra.mxu0 0.0
        %1330 = vmatprep.subr.mxu0 0.0
        %1331 = vmatpush1.msra.mxu0 0.0
        %1332 = vmatprep.subr.mxu0 0.0
        %1333 = vmatpush1.msra.mxu0 0.0
        %1334 = vmatprep.subr.mxu0 0.0
        %1335 = vmatpush1.msra.mxu0 0.0
        %1336 = vmatprep.subr.mxu0 0.0
        %1337 = vmatpush1.msra.mxu0 0.0
        %1338 = vmatprep.subr.mxu0 0.0
        %1339 = vmatpush1.msra.mxu0 0.0
        %1340 = vmatprep.subr.mxu0 0.0
        %1341 = vmatpush1.msra.mxu0 0.0
        %1342 = vmatprep.subr.mxu0 0.0
        %1343 = vmatpush1.msra.mxu0 0.0
        %1344 = vmatprep.subr.mxu0 0.0
        %1345 = vmatpush1.msra.mxu0 0.0
        %1346 = vmatprep.subr.mxu0 0.0
        %1347 = vmatpush1.msra.mxu0 0.0
        %1348 = vmatprep.subr.mxu0 0.0
        %1349 = vmatpush1.msra.mxu0 0.0
        %1350 = vmatprep.subr.mxu0 0.0
        %1351 = vmatpush1.msra.mxu0 0.0
        %1352 = vmatprep.subr.mxu0 0.0
        %1353 = vmatpush1.msra.mxu0 0.0
        %1354 = vmatprep.subr.mxu0 0.0
        %1355 = vmatpush1.msra.mxu0 0.0
        %1356 = vmatprep.subr.mxu0 0.0
        %1357 = vmatpush1.msra.mxu0 0.0
        %1358 = vmatprep.subr.mxu0 0.0
        %1359 = vmatpush1.msra.mxu0 0.0
        %1360 = vmatprep.subr.mxu0 0.0
        %1361 = vmatpush1.msra.mxu0 0.0
        %1362 = vmatprep.subr.mxu0 0.0
        %1363 = vmatpush1.msra.mxu0 0.0
        %1364 = vmatprep.subr.mxu0 0.0
        %1365 = vmatpush1.msra.mxu0 0.0
        %1366 = vmatprep.subr.mxu0 0.0
        %1367 = vmatpush1.msra.mxu0 0.0
        %1368 = vmatprep.subr.mxu0 0.0
        %1369 = vmatpush1.msra.mxu0 0.0
        %1370 = vmatprep.mubr.f32.mxu0 0.0
        %1371 = vmatmul.mubr.f32.gmra.mrb[0].mxu0 %v1259
        %v1372 = vpop.f32.mrb[0].mxu0
        %v1373 = vadd.f32 %v1256, %v1372
        %v1374 = vpop.f32.mrb[0].mxu0
        %1375 = vmatprep.mubr.f32.mxu0 0.0
        %1376 = vmatmul.mubr.f32.gmra.mrb[0].mxu0 %v1262
        %v1377 = vpop.f32.mrb[0].mxu0
        %v1378 = vadd.f32 %v1256, %v1377
        %v1379 = vpop.f32.mrb[0].mxu0
        %1380 = vmatprep.mubr.f32.mxu0 0.0
        %1381 = vmatmul.mubr.f32.gmra.mrb[0].mxu0 %v1265
        %v1382 = vpop.f32.mrb[0].mxu0
        %v1383 = vadd.f32 %v1256, %v1382
        %v1384 = vpop.f32.mrb[0].mxu0
        %1385 = vmatprep.mubr.f32.mxu0 0.0
        %1386 = vmatmul.mubr.f32.gmra.mrb[0].mxu0 %v1268
        %v1387 = vpop.f32.mrb[0].mxu0
        %v1388 = vadd.f32 %v1256, %v1387
        %v1389 = vpop.f32.mrb[0].mxu0
        %1390 = vmatprep.mubr.f32.mxu0 0.0
        %1391 = vmatmul.mubr.f32.gmra.mrb[0].mxu0 %v1271
        %v1392 = vpop.f32.mrb[0].mxu0
        %v1393 = vadd.f32 %v1256, %v1392
        %v1394 = vpop.f32.mrb[0].mxu0
        %1395 = vmatprep.mubr.f32.mxu0 0.0
        %1396 = vmatmul.mubr.f32.gmra.mrb[0].mxu0 %v1274
        %v1397 = vpop.f32.mrb[0].mxu0
        %v1398 = vadd.f32 %v1256, %v1397
        %v1399 = vpop.f32.mrb[0].mxu0
        %1400 = vmatprep.mubr.f32.mxu0 0.0
        %1401 = vmatmul.mubr.f32.gmra.mrb[0].mxu0 %v1277
        %v1402 = vpop.f32.mrb[0].mxu0
        %v1403 = vadd.f32 %v1256, %v1402
        %v1404 = vpop.f32.mrb[0].mxu0
        %1405 = vmatprep.mubr.f32.mxu0 0.0
        %1406 = vmatmul.mubr.f32.gmra.mrb[0].mxu0 %v1280
        %v1407 = vpop.f32.mrb[0].mxu0
        %v1408 = vadd.f32 %v1256, %v1407
        %v1409 = vpop.f32.mrb[0].mxu0
        %1410 = vmatprep.mubr.f32.mxu0 0.0
        %1411 = vmatmul.mubr.f32.gmra.mrb[0].mxu0 %v1283
        %v1412 = vpop.f32.mrb[0].mxu0
        %v1413 = vadd.f32 %v1256, %v1412
        %v1414 = vpop.f32.mrb[0].mxu0
        %1415 = vmatprep.mubr.f32.mxu0 0.0
        %1416 = vmatmul.mubr.f32.gmra.mrb[0].mxu0 %v1286
        %v1417 = vpop.f32.mrb[0].mxu0
        %v1418 = vadd.f32 %v1256, %v1417
        %v1419 = vpop.f32.mrb[0].mxu0
        %1420 = vmatprep.mubr.f32.mxu0 0.0
        %1421 = vmatmul.mubr.f32.gmra.mrb[0].mxu0 %v1289
        %v1422 = vpop.f32.mrb[0].mxu0
        %v1423 = vadd.f32 %v1256, %v1422
        %v1424 = vpop.f32.mrb[0].mxu0
        %1425 = vmatprep.mubr.f32.mxu0 0.0
        %1426 = vmatmul.mubr.f32.gmra.mrb[0].mxu0 %v1292
        %v1427 = vpop.f32.mrb[0].mxu0
        %v1428 = vadd.f32 %v1256, %v1427
        %v1429 = vpop.f32.mrb[0].mxu0
        %1430 = vmatprep.mubr.f32.mxu0 0.0
        %1431 = vmatmul.mubr.f32.gmra.mrb[0].mxu0 %v1295
        %v1432 = vpop.f32.mrb[0].mxu0
        %v1433 = vadd.f32 %v1256, %v1432
        %v1434 = vpop.f32.mrb[0].mxu0
        %1435 = vmatprep.mubr.f32.mxu0 0.0
        %1436 = vmatmul.mubr.f32.gmra.mrb[0].mxu0 %v1298
        %v1437 = vpop.f32.mrb[0].mxu0
        %v1438 = vadd.f32 %v1256, %v1437
        %v1439 = vpop.f32.mrb[0].mxu0
        %1440 = vmatprep.mubr.f32.mxu0 0.0
        %1441 = vmatmul.mubr.f32.gmra.mrb[0].mxu0 %v1301
        %v1442 = vpop.f32.mrb[0].mxu0
        %v1443 = vadd.f32 %v1256, %v1442
        %v1444 = vpop.f32.mrb[0].mxu0
        %1445 = vmatprep.mubr.f32.mxu0 0.0
        %1446 = vmatmul.mubr.f32.gmra.mrb[0].mxu0 %v1304
        %v1447 = vpop.f32.mrb[0].mxu0
        %v1448 = vadd.f32 %v1256, %v1447
        %v1449 = vpop.f32.mrb[0].mxu0
        %1450 = vdwg.mxu0
        %v1451 = vmax.f32 %v1373, -10.0
        %v1452 = vmax.f32 %v1378, -10.0
        %v1453 = vmax.f32 %v1383, -10.0
        %v1454 = vmax.f32 %v1388, -10.0
        %v1455 = vmax.f32 %v1393, -10.0
        %v1456 = vmax.f32 %v1398, -10.0
        %v1457 = vmax.f32 %v1403, -10.0
        %v1458 = vmax.f32 %v1408, -10.0
        %v1459 = vmax.f32 %v1413, -10.0
        %v1460 = vmax.f32 %v1418, -10.0
        %v1461 = vmax.f32 %v1423, -10.0
        %v1462 = vmax.f32 %v1428, -10.0
        %v1463 = vmax.f32 %v1433, -10.0
        %v1464 = vmax.f32 %v1438, -10.0
        %v1465 = vmax.f32 %v1443, -10.0
        %v1466 = vmax.f32 %v1448, -10.0
        %v1467 = vmin.f32 %v1451, 10.0
        %v1468 = vmin.f32 %v1452, 10.0
        %v1469 = vmin.f32 %v1453, 10.0
        %v1470 = vmin.f32 %v1454, 10.0
        %v1471 = vmin.f32 %v1455, 10.0
        %v1472 = vmin.f32 %v1456, 10.0
        %v1473 = vmin.f32 %v1457, 10.0
        %v1474 = vmin.f32 %v1458, 10.0
        %v1475 = vmin.f32 %v1459, 10.0
        %v1476 = vmin.f32 %v1460, 10.0
        %v1477 = vmin.f32 %v1461, 10.0
        %v1478 = vmin.f32 %v1462, 10.0
        %v1479 = vmin.f32 %v1463, 10.0
        %v1480 = vmin.f32 %v1464, 10.0
        %v1481 = vmin.f32 %v1465, 10.0
        %v1482 = vmin.f32 %v1466, 10.0
        %v1483 = vmul.f32 %v1467, 0.5
        %v1484 = vmul.f32 %v1468, 0.5
        %v1485 = vmul.f32 %v1469, 0.5
        %v1486 = vmul.f32 %v1470, 0.5
        %v1487 = vmul.f32 %v1471, 0.5
        %v1488 = vmul.f32 %v1472, 0.5
        %v1489 = vmul.f32 %v1473, 0.5
        %v1490 = vmul.f32 %v1474, 0.5
        %v1491 = vmul.f32 %v1475, 0.5
        %v1492 = vmul.f32 %v1476, 0.5
        %v1493 = vmul.f32 %v1477, 0.5
        %v1494 = vmul.f32 %v1478, 0.5
        %v1495 = vmul.f32 %v1479, 0.5
        %v1496 = vmul.f32 %v1480, 0.5
        %v1497 = vmul.f32 %v1481, 0.5
        %v1498 = vmul.f32 %v1482, 0.5
        %v1499 = vmul.f32 %v1483, 1.442695
        %v1500 = vpow.pop %v1499
        %v1501 = vmul.f32 %v1484, 1.442695
        %v1502 = vpow.pop %v1501
        %v1503 = vmul.f32 %v1485, 1.442695
        %v1504 = vpow.pop %v1503
        %v1505 = vmul.f32 %v1486, 1.442695
        %v1506 = vpow.pop %v1505
        %v1507 = vmul.f32 %v1487, 1.442695
        %v1508 = vpow.pop %v1507
        %v1509 = vmul.f32 %v1488, 1.442695
        %v1510 = vpow.pop %v1509
        %v1511 = vmul.f32 %v1489, 1.442695
        %v1512 = vpow.pop %v1511
        %v1513 = vmul.f32 %v1490, 1.442695
        %v1514 = vpow.pop %v1513
        %v1515 = vmul.f32 %v1491, 1.442695
        %v1516 = vpow.pop %v1515
        %v1517 = vmul.f32 %v1492, 1.442695
        %v1518 = vpow.pop %v1517
        %v1519 = vmul.f32 %v1493, 1.442695
        %v1520 = vpow.pop %v1519
        %v1521 = vmul.f32 %v1494, 1.442695
        %v1522 = vpow.pop %v1521
        %v1523 = vmul.f32 %v1495, 1.442695
        %v1524 = vpow.pop %v1523
        %v1525 = vmul.f32 %v1496, 1.442695
        %v1526 = vpow.pop %v1525
        %v1527 = vmul.f32 %v1497, 1.442695
        %v1528 = vpow.pop %v1527
        %v1529 = vmul.f32 %v1498, 1.442695
        %v1530 = vpow.pop %v1529
        %1547 = vrot.lane.b32.xlu0 %v1500, 120
        %v1548 = vpop.permute.xlu0 %1547
        %1549 = vrot.lane.b32.xlu0 %v1502, 120
        %v1550 = vpop.permute.xlu0 %1549
        %1551 = vrot.lane.b32.xlu0 %v1504, 120
        %v1552 = vpop.permute.xlu0 %1551
        %1553 = vrot.lane.b32.xlu0 %v1506, 120
        %v1554 = vpop.permute.xlu0 %1553
        %1555 = vrot.lane.b32.xlu0 %v1508, 120
        %v1556 = vpop.permute.xlu0 %1555
        %1557 = vrot.lane.b32.xlu0 %v1510, 120
        %v1558 = vpop.permute.xlu0 %1557
        %1559 = vrot.lane.b32.xlu0 %v1512, 120
        %v1560 = vpop.permute.xlu0 %1559
        %1561 = vrot.lane.b32.xlu0 %v1514, 120
        %v1562 = vpop.permute.xlu0 %1561
        %1563 = vrot.lane.b32.xlu0 %v1516, 120
        %v1564 = vpop.permute.xlu0 %1563
        %1565 = vrot.lane.b32.xlu0 %v1518, 120
        %v1566 = vpop.permute.xlu0 %1565
        %1567 = vrot.lane.b32.xlu0 %v1520, 120
        %v1568 = vpop.permute.xlu0 %1567
        %1569 = vrot.lane.b32.xlu0 %v1522, 120
        %v1570 = vpop.permute.xlu0 %1569
        %1571 = vrot.lane.b32.xlu0 %v1524, 120
        %v1572 = vpop.permute.xlu0 %1571
        %1573 = vrot.lane.b32.xlu0 %v1526, 120
        %v1574 = vpop.permute.xlu0 %1573
        %1575 = vrot.lane.b32.xlu0 %v1528, 120
        %v1576 = vpop.permute.xlu0 %1575
        %1577 = vrot.lane.b32.xlu0 %v1530, 120
        %v1578 = vpop.permute.xlu0 %1577
        %v1595 = vmul.f32 %v561, %v1548
        %v1596 = vmul.f32 %v562, %v1550
        %v1597 = vmul.f32 %v563, %v1552
        %v1598 = vmul.f32 %v564, %v1554
        %v1599 = vmul.f32 %v565, %v1556
        %v1600 = vmul.f32 %v566, %v1558
        %v1601 = vmul.f32 %v567, %v1560
        %v1602 = vmul.f32 %v568, %v1562
        %v1603 = vmul.f32 %v569, %v1564
        %v1604 = vmul.f32 %v570, %v1566
        %v1605 = vmul.f32 %v571, %v1568
        %v1606 = vmul.f32 %v572, %v1570
        %v1607 = vmul.f32 %v573, %v1572
        %v1608 = vmul.f32 %v574, %v1574
        %v1609 = vmul.f32 %v575, %v1576
        %v1610 = vmul.f32 %v576, %v1578
        %v1611 = vadd.f32 %v1373, %v1595
        %v1612 = vadd.f32 %v1378, %v1596
        %v1613 = vadd.f32 %v1383, %v1597
        %v1614 = vadd.f32 %v1388, %v1598
        %v1615 = vadd.f32 %v1393, %v1599
        %v1616 = vadd.f32 %v1398, %v1600
        %v1617 = vadd.f32 %v1403, %v1601
        %v1618 = vadd.f32 %v1408, %v1602
        %v1619 = vadd.f32 %v1413, %v1603
        %v1620 = vadd.f32 %v1418, %v1604
        %v1621 = vadd.f32 %v1423, %v1605
        %v1622 = vadd.f32 %v1428, %v1606
        %v1623 = vadd.f32 %v1433, %v1607
        %v1624 = vadd.f32 %v1438, %v1608
        %v1625 = vadd.f32 %v1443, %v1609
        %v1626 = vadd.f32 %v1448, %v1610
        %v1627 = vld [vmem:[%s8] sm:$0xff]
        %v1628 = vld [vmem:[%s9] sm:$0x1]
        %1630 = vset.pattern.permute.xlu0 0
        %1631 = vperm.xlu0 %1630, %v1611
        %v1632 = vpop.permute.xlu0 %1631
        %1635 = vset.pattern.permute.xlu0 0
        %1636 = vperm.xlu0 %1635, %v1612
        %v1637 = vpop.permute.xlu0 %1636
        %1640 = vset.pattern.permute.xlu0 0
        %1641 = vperm.xlu0 %1640, %v1613
        %v1642 = vpop.permute.xlu0 %1641
        %1645 = vset.pattern.permute.xlu0 0
        %1646 = vperm.xlu0 %1645, %v1614
        %v1647 = vpop.permute.xlu0 %1646
        %1650 = vset.pattern.permute.xlu0 0
        %1651 = vperm.xlu0 %1650, %v1615
        %v1652 = vpop.permute.xlu0 %1651
        %1655 = vset.pattern.permute.xlu0 0
        %1656 = vperm.xlu0 %1655, %v1616
        %v1657 = vpop.permute.xlu0 %1656
        %1660 = vset.pattern.permute.xlu0 0
        %1661 = vperm.xlu0 %1660, %v1617
        %v1662 = vpop.permute.xlu0 %1661
        %1665 = vset.pattern.permute.xlu0 0
        %1666 = vperm.xlu0 %1665, %v1618
        %v1667 = vpop.permute.xlu0 %1666
        %1670 = vset.pattern.permute.xlu0 0
        %1671 = vperm.xlu0 %1670, %v1619
        %v1672 = vpop.permute.xlu0 %1671
        %1675 = vset.pattern.permute.xlu0 0
        %1676 = vperm.xlu0 %1675, %v1620
        %v1677 = vpop.permute.xlu0 %1676
        %1680 = vset.pattern.permute.xlu0 0
        %1681 = vperm.xlu0 %1680, %v1621
        %v1682 = vpop.permute.xlu0 %1681
        %1685 = vset.pattern.permute.xlu0 0
        %1686 = vperm.xlu0 %1685, %v1622
        %v1687 = vpop.permute.xlu0 %1686
        %1690 = vset.pattern.permute.xlu0 0
        %1691 = vperm.xlu0 %1690, %v1623
        %v1692 = vpop.permute.xlu0 %1691
        %1695 = vset.pattern.permute.xlu0 0
        %1696 = vperm.xlu0 %1695, %v1624
        %v1697 = vpop.permute.xlu0 %1696
        %1700 = vset.pattern.permute.xlu0 0
        %1701 = vperm.xlu0 %1700, %v1625
        %v1702 = vpop.permute.xlu0 %1701
        %1705 = vset.pattern.permute.xlu0 0
        %1706 = vperm.xlu0 %1705, %v1626
        %v1707 = vpop.permute.xlu0 %1706
        %v1709 = vlaneseq
        %v1710 = vshrl.u32 %v1709, 7
        %v1711 = vsub.s32 0, %v1710
        %v1712 = vrot.slane %v1627, %v1711
        %v1713 = vmul.f32 %v1632, %v1712
        %v1714 = vmul.f32 %v1637, %v1712
        %v1715 = vmul.f32 %v1642, %v1712
        %v1716 = vmul.f32 %v1647, %v1712
        %v1717 = vmul.f32 %v1652, %v1712
        %v1718 = vmul.f32 %v1657, %v1712
        %v1719 = vmul.f32 %v1662, %v1712
        %v1720 = vmul.f32 %v1667, %v1712
        %v1721 = vmul.f32 %v1672, %v1712
        %v1722 = vmul.f32 %v1677, %v1712
        %v1723 = vmul.f32 %v1682, %v1712
        %v1724 = vmul.f32 %v1687, %v1712
        %v1725 = vmul.f32 %v1692, %v1712
        %v1726 = vmul.f32 %v1697, %v1712
        %v1727 = vmul.f32 %v1702, %v1712
        %v1728 = vmul.f32 %v1707, %v1712
        %v1730 = vlaneseq
        %v1731 = vshrl.u32 %v1730, 7
        %v1732 = vsub.s32 0, %v1731
        %v1733 = vrot.slane %v1628, %v1732
        %v1735 = vadd.f32 %v1733, %v1713
        %v1736 = vadd.f32 %v1733, %v1714
        %v1737 = vadd.f32 %v1733, %v1715
        %v1738 = vadd.f32 %v1733, %v1716
        %v1739 = vadd.f32 %v1733, %v1717
        %v1740 = vadd.f32 %v1733, %v1718
        %v1741 = vadd.f32 %v1733, %v1719
        %v1742 = vadd.f32 %v1733, %v1720
        %v1743 = vadd.f32 %v1733, %v1721
        %v1744 = vadd.f32 %v1733, %v1722
        %v1745 = vadd.f32 %v1733, %v1723
        %v1746 = vadd.f32 %v1733, %v1724
        %v1747 = vadd.f32 %v1733, %v1725
        %v1748 = vadd.f32 %v1733, %v1726
        %v1749 = vadd.f32 %v1733, %v1727
        %v1750 = vadd.f32 %v1733, %v1728
        %1751 = vset.pattern.permute.xlu0 1
        %1752 = vperm.xlu0 %1751, %v1611
        %v1753 = vpop.permute.xlu0 %1752
        %1755 = vset.pattern.permute.xlu0 1
        %1756 = vperm.xlu0 %1755, %v1612
        %v1757 = vpop.permute.xlu0 %1756
        %1759 = vset.pattern.permute.xlu0 1
        %1760 = vperm.xlu0 %1759, %v1613
        %v1761 = vpop.permute.xlu0 %1760
        %1763 = vset.pattern.permute.xlu0 1
        %1764 = vperm.xlu0 %1763, %v1614
        %v1765 = vpop.permute.xlu0 %1764
        %1767 = vset.pattern.permute.xlu0 1
        %1768 = vperm.xlu0 %1767, %v1615
        %v1769 = vpop.permute.xlu0 %1768
        %1771 = vset.pattern.permute.xlu0 1
        %1772 = vperm.xlu0 %1771, %v1616
        %v1773 = vpop.permute.xlu0 %1772
        %1775 = vset.pattern.permute.xlu0 1
        %1776 = vperm.xlu0 %1775, %v1617
        %v1777 = vpop.permute.xlu0 %1776
        %1779 = vset.pattern.permute.xlu0 1
        %1780 = vperm.xlu0 %1779, %v1618
        %v1781 = vpop.permute.xlu0 %1780
        %1783 = vset.pattern.permute.xlu0 1
        %1784 = vperm.xlu0 %1783, %v1619
        %v1785 = vpop.permute.xlu0 %1784
        %1787 = vset.pattern.permute.xlu0 1
        %1788 = vperm.xlu0 %1787, %v1620
        %v1789 = vpop.permute.xlu0 %1788
        %1791 = vset.pattern.permute.xlu0 1
        %1792 = vperm.xlu0 %1791, %v1621
        %v1793 = vpop.permute.xlu0 %1792
        %1795 = vset.pattern.permute.xlu0 1
        %1796 = vperm.xlu0 %1795, %v1622
        %v1797 = vpop.permute.xlu0 %1796
        %1799 = vset.pattern.permute.xlu0 1
        %1800 = vperm.xlu0 %1799, %v1623
        %v1801 = vpop.permute.xlu0 %1800
        %1803 = vset.pattern.permute.xlu0 1
        %1804 = vperm.xlu0 %1803, %v1624
        %v1805 = vpop.permute.xlu0 %1804
        %1807 = vset.pattern.permute.xlu0 1
        %1808 = vperm.xlu0 %1807, %v1625
        %v1809 = vpop.permute.xlu0 %1808
        %1811 = vset.pattern.permute.xlu0 1
        %1812 = vperm.xlu0 %1811, %v1626
        %v1813 = vpop.permute.xlu0 %1812
        %v1815 = vlaneseq
        %v1816 = vshrl.u32 %v1815, 7
        %v1817 = vsub.s32 1, %v1816
        %v1818 = vrot.slane %v1627, %v1817
        %v1819 = vmul.f32 %v1753, %v1818
        %v1820 = vmul.f32 %v1757, %v1818
        %v1821 = vmul.f32 %v1761, %v1818
        %v1822 = vmul.f32 %v1765, %v1818
        %v1823 = vmul.f32 %v1769, %v1818
        %v1824 = vmul.f32 %v1773, %v1818
        %v1825 = vmul.f32 %v1777, %v1818
        %v1826 = vmul.f32 %v1781, %v1818
        %v1827 = vmul.f32 %v1785, %v1818
        %v1828 = vmul.f32 %v1789, %v1818
        %v1829 = vmul.f32 %v1793, %v1818
        %v1830 = vmul.f32 %v1797, %v1818
        %v1831 = vmul.f32 %v1801, %v1818
        %v1832 = vmul.f32 %v1805, %v1818
        %v1833 = vmul.f32 %v1809, %v1818
        %v1834 = vmul.f32 %v1813, %v1818
        %v1835 = vadd.f32 %v1735, %v1819
        %v1836 = vadd.f32 %v1736, %v1820
        %v1837 = vadd.f32 %v1737, %v1821
        %v1838 = vadd.f32 %v1738, %v1822
        %v1839 = vadd.f32 %v1739, %v1823
        %v1840 = vadd.f32 %v1740, %v1824
        %v1841 = vadd.f32 %v1741, %v1825
        %v1842 = vadd.f32 %v1742, %v1826
        %v1843 = vadd.f32 %v1743, %v1827
        %v1844 = vadd.f32 %v1744, %v1828
        %v1845 = vadd.f32 %v1745, %v1829
        %v1846 = vadd.f32 %v1746, %v1830
        %v1847 = vadd.f32 %v1747, %v1831
        %v1848 = vadd.f32 %v1748, %v1832
        %v1849 = vadd.f32 %v1749, %v1833
        %v1850 = vadd.f32 %v1750, %v1834
        %1851 = vset.pattern.permute.xlu0 2
        %1852 = vperm.xlu0 %1851, %v1611
        %v1853 = vpop.permute.xlu0 %1852
        %1855 = vset.pattern.permute.xlu0 2
        %1856 = vperm.xlu0 %1855, %v1612
        %v1857 = vpop.permute.xlu0 %1856
        %1859 = vset.pattern.permute.xlu0 2
        %1860 = vperm.xlu0 %1859, %v1613
        %v1861 = vpop.permute.xlu0 %1860
        %1863 = vset.pattern.permute.xlu0 2
        %1864 = vperm.xlu0 %1863, %v1614
        %v1865 = vpop.permute.xlu0 %1864
        %1867 = vset.pattern.permute.xlu0 2
        %1868 = vperm.xlu0 %1867, %v1615
        %v1869 = vpop.permute.xlu0 %1868
        %1871 = vset.pattern.permute.xlu0 2
        %1872 = vperm.xlu0 %1871, %v1616
        %v1873 = vpop.permute.xlu0 %1872
        %1875 = vset.pattern.permute.xlu0 2
        %1876 = vperm.xlu0 %1875, %v1617
        %v1877 = vpop.permute.xlu0 %1876
        %1879 = vset.pattern.permute.xlu0 2
        %1880 = vperm.xlu0 %1879, %v1618
        %v1881 = vpop.permute.xlu0 %1880
        %1883 = vset.pattern.permute.xlu0 2
        %1884 = vperm.xlu0 %1883, %v1619
        %v1885 = vpop.permute.xlu0 %1884
        %1887 = vset.pattern.permute.xlu0 2
        %1888 = vperm.xlu0 %1887, %v1620
        %v1889 = vpop.permute.xlu0 %1888
        %1891 = vset.pattern.permute.xlu0 2
        %1892 = vperm.xlu0 %1891, %v1621
        %v1893 = vpop.permute.xlu0 %1892
        %1895 = vset.pattern.permute.xlu0 2
        %1896 = vperm.xlu0 %1895, %v1622
        %v1897 = vpop.permute.xlu0 %1896
        %1899 = vset.pattern.permute.xlu0 2
        %1900 = vperm.xlu0 %1899, %v1623
        %v1901 = vpop.permute.xlu0 %1900
        %1903 = vset.pattern.permute.xlu0 2
        %1904 = vperm.xlu0 %1903, %v1624
        %v1905 = vpop.permute.xlu0 %1904
        %1907 = vset.pattern.permute.xlu0 2
        %1908 = vperm.xlu0 %1907, %v1625
        %v1909 = vpop.permute.xlu0 %1908
        %1911 = vset.pattern.permute.xlu0 2
        %1912 = vperm.xlu0 %1911, %v1626
        %v1913 = vpop.permute.xlu0 %1912
        %v1915 = vlaneseq
        %v1916 = vshrl.u32 %v1915, 7
        %v1917 = vsub.s32 2, %v1916
        %v1918 = vrot.slane %v1627, %v1917
        %v1919 = vmul.f32 %v1853, %v1918
        %v1920 = vmul.f32 %v1857, %v1918
        %v1921 = vmul.f32 %v1861, %v1918
        %v1922 = vmul.f32 %v1865, %v1918
        %v1923 = vmul.f32 %v1869, %v1918
        %v1924 = vmul.f32 %v1873, %v1918
        %v1925 = vmul.f32 %v1877, %v1918
        %v1926 = vmul.f32 %v1881, %v1918
        %v1927 = vmul.f32 %v1885, %v1918
        %v1928 = vmul.f32 %v1889, %v1918
        %v1929 = vmul.f32 %v1893, %v1918
        %v1930 = vmul.f32 %v1897, %v1918
        %v1931 = vmul.f32 %v1901, %v1918
        %v1932 = vmul.f32 %v1905, %v1918
        %v1933 = vmul.f32 %v1909, %v1918
        %v1934 = vmul.f32 %v1913, %v1918
        %v1935 = vadd.f32 %v1835, %v1919
        %v1936 = vadd.f32 %v1836, %v1920
        %v1937 = vadd.f32 %v1837, %v1921
        %v1938 = vadd.f32 %v1838, %v1922
        %v1939 = vadd.f32 %v1839, %v1923
        %v1940 = vadd.f32 %v1840, %v1924
        %v1941 = vadd.f32 %v1841, %v1925
        %v1942 = vadd.f32 %v1842, %v1926
        %v1943 = vadd.f32 %v1843, %v1927
        %v1944 = vadd.f32 %v1844, %v1928
        %v1945 = vadd.f32 %v1845, %v1929
        %v1946 = vadd.f32 %v1846, %v1930
        %v1947 = vadd.f32 %v1847, %v1931
        %v1948 = vadd.f32 %v1848, %v1932
        %v1949 = vadd.f32 %v1849, %v1933
        %v1950 = vadd.f32 %v1850, %v1934
        %1951 = vset.pattern.permute.xlu0 3
        %1952 = vperm.xlu0 %1951, %v1611
        %v1953 = vpop.permute.xlu0 %1952
        %1955 = vset.pattern.permute.xlu0 3
        %1956 = vperm.xlu0 %1955, %v1612
        %v1957 = vpop.permute.xlu0 %1956
        %1959 = vset.pattern.permute.xlu0 3
        %1960 = vperm.xlu0 %1959, %v1613
        %v1961 = vpop.permute.xlu0 %1960
        %1963 = vset.pattern.permute.xlu0 3
        %1964 = vperm.xlu0 %1963, %v1614
        %v1965 = vpop.permute.xlu0 %1964
        %1967 = vset.pattern.permute.xlu0 3
        %1968 = vperm.xlu0 %1967, %v1615
        %v1969 = vpop.permute.xlu0 %1968
        %1971 = vset.pattern.permute.xlu0 3
        %1972 = vperm.xlu0 %1971, %v1616
        %v1973 = vpop.permute.xlu0 %1972
        %1975 = vset.pattern.permute.xlu0 3
        %1976 = vperm.xlu0 %1975, %v1617
        %v1977 = vpop.permute.xlu0 %1976
        %1979 = vset.pattern.permute.xlu0 3
        %1980 = vperm.xlu0 %1979, %v1618
        %v1981 = vpop.permute.xlu0 %1980
        %1983 = vset.pattern.permute.xlu0 3
        %1984 = vperm.xlu0 %1983, %v1619
        %v1985 = vpop.permute.xlu0 %1984
        %1987 = vset.pattern.permute.xlu0 3
        %1988 = vperm.xlu0 %1987, %v1620
        %v1989 = vpop.permute.xlu0 %1988
        %1991 = vset.pattern.permute.xlu0 3
        %1992 = vperm.xlu0 %1991, %v1621
        %v1993 = vpop.permute.xlu0 %1992
        %1995 = vset.pattern.permute.xlu0 3
        %1996 = vperm.xlu0 %1995, %v1622
        %v1997 = vpop.permute.xlu0 %1996
        %1999 = vset.pattern.permute.xlu0 3
        %2000 = vperm.xlu0 %1999, %v1623
        %v2001 = vpop.permute.xlu0 %2000
        %2003 = vset.pattern.permute.xlu0 3
        %2004 = vperm.xlu0 %2003, %v1624
        %v2005 = vpop.permute.xlu0 %2004
        %2007 = vset.pattern.permute.xlu0 3
        %2008 = vperm.xlu0 %2007, %v1625
        %v2009 = vpop.permute.xlu0 %2008
        %2011 = vset.pattern.permute.xlu0 3
        %2012 = vperm.xlu0 %2011, %v1626
        %v2013 = vpop.permute.xlu0 %2012
        %v2015 = vlaneseq
        %v2016 = vshrl.u32 %v2015, 7
        %v2017 = vsub.s32 3, %v2016
        %v2018 = vrot.slane %v1627, %v2017
        %v2019 = vmul.f32 %v1953, %v2018
        %v2020 = vmul.f32 %v1957, %v2018
        %v2021 = vmul.f32 %v1961, %v2018
        %v2022 = vmul.f32 %v1965, %v2018
        %v2023 = vmul.f32 %v1969, %v2018
        %v2024 = vmul.f32 %v1973, %v2018
        %v2025 = vmul.f32 %v1977, %v2018
        %v2026 = vmul.f32 %v1981, %v2018
        %v2027 = vmul.f32 %v1985, %v2018
        %v2028 = vmul.f32 %v1989, %v2018
        %v2029 = vmul.f32 %v1993, %v2018
        %v2030 = vmul.f32 %v1997, %v2018
        %v2031 = vmul.f32 %v2001, %v2018
        %v2032 = vmul.f32 %v2005, %v2018
        %v2033 = vmul.f32 %v2009, %v2018
        %v2034 = vmul.f32 %v2013, %v2018
        %v2035 = vadd.f32 %v1935, %v2019
        %v2036 = vadd.f32 %v1936, %v2020
        %v2037 = vadd.f32 %v1937, %v2021
        %v2038 = vadd.f32 %v1938, %v2022
        %v2039 = vadd.f32 %v1939, %v2023
        %v2040 = vadd.f32 %v1940, %v2024
        %v2041 = vadd.f32 %v1941, %v2025
        %v2042 = vadd.f32 %v1942, %v2026
        %v2043 = vadd.f32 %v1943, %v2027
        %v2044 = vadd.f32 %v1944, %v2028
        %v2045 = vadd.f32 %v1945, %v2029
        %v2046 = vadd.f32 %v1946, %v2030
        %v2047 = vadd.f32 %v1947, %v2031
        %v2048 = vadd.f32 %v1948, %v2032
        %v2049 = vadd.f32 %v1949, %v2033
        %v2050 = vadd.f32 %v1950, %v2034
        %2051 = vset.pattern.permute.xlu0 4
        %2052 = vperm.xlu0 %2051, %v1611
        %v2053 = vpop.permute.xlu0 %2052
        %2055 = vset.pattern.permute.xlu0 4
        %2056 = vperm.xlu0 %2055, %v1612
        %v2057 = vpop.permute.xlu0 %2056
        %2059 = vset.pattern.permute.xlu0 4
        %2060 = vperm.xlu0 %2059, %v1613
        %v2061 = vpop.permute.xlu0 %2060
        %2063 = vset.pattern.permute.xlu0 4
        %2064 = vperm.xlu0 %2063, %v1614
        %v2065 = vpop.permute.xlu0 %2064
        %2067 = vset.pattern.permute.xlu0 4
        %2068 = vperm.xlu0 %2067, %v1615
        %v2069 = vpop.permute.xlu0 %2068
        %2071 = vset.pattern.permute.xlu0 4
        %2072 = vperm.xlu0 %2071, %v1616
        %v2073 = vpop.permute.xlu0 %2072
        %2075 = vset.pattern.permute.xlu0 4
        %2076 = vperm.xlu0 %2075, %v1617
        %v2077 = vpop.permute.xlu0 %2076
        %2079 = vset.pattern.permute.xlu0 4
        %2080 = vperm.xlu0 %2079, %v1618
        %v2081 = vpop.permute.xlu0 %2080
        %2083 = vset.pattern.permute.xlu0 4
        %2084 = vperm.xlu0 %2083, %v1619
        %v2085 = vpop.permute.xlu0 %2084
        %2087 = vset.pattern.permute.xlu0 4
        %2088 = vperm.xlu0 %2087, %v1620
        %v2089 = vpop.permute.xlu0 %2088
        %2091 = vset.pattern.permute.xlu0 4
        %2092 = vperm.xlu0 %2091, %v1621
        %v2093 = vpop.permute.xlu0 %2092
        %2095 = vset.pattern.permute.xlu0 4
        %2096 = vperm.xlu0 %2095, %v1622
        %v2097 = vpop.permute.xlu0 %2096
        %2099 = vset.pattern.permute.xlu0 4
        %2100 = vperm.xlu0 %2099, %v1623
        %v2101 = vpop.permute.xlu0 %2100
        %2103 = vset.pattern.permute.xlu0 4
        %2104 = vperm.xlu0 %2103, %v1624
        %v2105 = vpop.permute.xlu0 %2104
        %2107 = vset.pattern.permute.xlu0 4
        %2108 = vperm.xlu0 %2107, %v1625
        %v2109 = vpop.permute.xlu0 %2108
        %2111 = vset.pattern.permute.xlu0 4
        %2112 = vperm.xlu0 %2111, %v1626
        %v2113 = vpop.permute.xlu0 %2112
        %v2115 = vlaneseq
        %v2116 = vshrl.u32 %v2115, 7
        %v2117 = vsub.s32 4, %v2116
        %v2118 = vrot.slane %v1627, %v2117
        %v2119 = vmul.f32 %v2053, %v2118
        %v2120 = vmul.f32 %v2057, %v2118
        %v2121 = vmul.f32 %v2061, %v2118
        %v2122 = vmul.f32 %v2065, %v2118
        %v2123 = vmul.f32 %v2069, %v2118
        %v2124 = vmul.f32 %v2073, %v2118
        %v2125 = vmul.f32 %v2077, %v2118
        %v2126 = vmul.f32 %v2081, %v2118
        %v2127 = vmul.f32 %v2085, %v2118
        %v2128 = vmul.f32 %v2089, %v2118
        %v2129 = vmul.f32 %v2093, %v2118
        %v2130 = vmul.f32 %v2097, %v2118
        %v2131 = vmul.f32 %v2101, %v2118
        %v2132 = vmul.f32 %v2105, %v2118
        %v2133 = vmul.f32 %v2109, %v2118
        %v2134 = vmul.f32 %v2113, %v2118
        %v2135 = vadd.f32 %v2035, %v2119
        %v2136 = vadd.f32 %v2036, %v2120
        %v2137 = vadd.f32 %v2037, %v2121
        %v2138 = vadd.f32 %v2038, %v2122
        %v2139 = vadd.f32 %v2039, %v2123
        %v2140 = vadd.f32 %v2040, %v2124
        %v2141 = vadd.f32 %v2041, %v2125
        %v2142 = vadd.f32 %v2042, %v2126
        %v2143 = vadd.f32 %v2043, %v2127
        %v2144 = vadd.f32 %v2044, %v2128
        %v2145 = vadd.f32 %v2045, %v2129
        %v2146 = vadd.f32 %v2046, %v2130
        %v2147 = vadd.f32 %v2047, %v2131
        %v2148 = vadd.f32 %v2048, %v2132
        %v2149 = vadd.f32 %v2049, %v2133
        %v2150 = vadd.f32 %v2050, %v2134
        %2151 = vset.pattern.permute.xlu0 5
        %2152 = vperm.xlu0 %2151, %v1611
        %v2153 = vpop.permute.xlu0 %2152
        %2155 = vset.pattern.permute.xlu0 5
        %2156 = vperm.xlu0 %2155, %v1612
        %v2157 = vpop.permute.xlu0 %2156
        %2159 = vset.pattern.permute.xlu0 5
        %2160 = vperm.xlu0 %2159, %v1613
        %v2161 = vpop.permute.xlu0 %2160
        %2163 = vset.pattern.permute.xlu0 5
        %2164 = vperm.xlu0 %2163, %v1614
        %v2165 = vpop.permute.xlu0 %2164
        %2167 = vset.pattern.permute.xlu0 5
        %2168 = vperm.xlu0 %2167, %v1615
        %v2169 = vpop.permute.xlu0 %2168
        %2171 = vset.pattern.permute.xlu0 5
        %2172 = vperm.xlu0 %2171, %v1616
        %v2173 = vpop.permute.xlu0 %2172
        %2175 = vset.pattern.permute.xlu0 5
        %2176 = vperm.xlu0 %2175, %v1617
        %v2177 = vpop.permute.xlu0 %2176
        %2179 = vset.pattern.permute.xlu0 5
        %2180 = vperm.xlu0 %2179, %v1618
        %v2181 = vpop.permute.xlu0 %2180
        %2183 = vset.pattern.permute.xlu0 5
        %2184 = vperm.xlu0 %2183, %v1619
        %v2185 = vpop.permute.xlu0 %2184
        %2187 = vset.pattern.permute.xlu0 5
        %2188 = vperm.xlu0 %2187, %v1620
        %v2189 = vpop.permute.xlu0 %2188
        %2191 = vset.pattern.permute.xlu0 5
        %2192 = vperm.xlu0 %2191, %v1621
        %v2193 = vpop.permute.xlu0 %2192
        %2195 = vset.pattern.permute.xlu0 5
        %2196 = vperm.xlu0 %2195, %v1622
        %v2197 = vpop.permute.xlu0 %2196
        %2199 = vset.pattern.permute.xlu0 5
        %2200 = vperm.xlu0 %2199, %v1623
        %v2201 = vpop.permute.xlu0 %2200
        %2203 = vset.pattern.permute.xlu0 5
        %2204 = vperm.xlu0 %2203, %v1624
        %v2205 = vpop.permute.xlu0 %2204
        %2207 = vset.pattern.permute.xlu0 5
        %2208 = vperm.xlu0 %2207, %v1625
        %v2209 = vpop.permute.xlu0 %2208
        %2211 = vset.pattern.permute.xlu0 5
        %2212 = vperm.xlu0 %2211, %v1626
        %v2213 = vpop.permute.xlu0 %2212
        %v2215 = vlaneseq
        %v2216 = vshrl.u32 %v2215, 7
        %v2217 = vsub.s32 5, %v2216
        %v2218 = vrot.slane %v1627, %v2217
        %v2219 = vmul.f32 %v2153, %v2218
        %v2220 = vmul.f32 %v2157, %v2218
        %v2221 = vmul.f32 %v2161, %v2218
        %v2222 = vmul.f32 %v2165, %v2218
        %v2223 = vmul.f32 %v2169, %v2218
        %v2224 = vmul.f32 %v2173, %v2218
        %v2225 = vmul.f32 %v2177, %v2218
        %v2226 = vmul.f32 %v2181, %v2218
        %v2227 = vmul.f32 %v2185, %v2218
        %v2228 = vmul.f32 %v2189, %v2218
        %v2229 = vmul.f32 %v2193, %v2218
        %v2230 = vmul.f32 %v2197, %v2218
        %v2231 = vmul.f32 %v2201, %v2218
        %v2232 = vmul.f32 %v2205, %v2218
        %v2233 = vmul.f32 %v2209, %v2218
        %v2234 = vmul.f32 %v2213, %v2218
        %v2235 = vadd.f32 %v2135, %v2219
        %v2236 = vadd.f32 %v2136, %v2220
        %v2237 = vadd.f32 %v2137, %v2221
        %v2238 = vadd.f32 %v2138, %v2222
        %v2239 = vadd.f32 %v2139, %v2223
        %v2240 = vadd.f32 %v2140, %v2224
        %v2241 = vadd.f32 %v2141, %v2225
        %v2242 = vadd.f32 %v2142, %v2226
        %v2243 = vadd.f32 %v2143, %v2227
        %v2244 = vadd.f32 %v2144, %v2228
        %v2245 = vadd.f32 %v2145, %v2229
        %v2246 = vadd.f32 %v2146, %v2230
        %v2247 = vadd.f32 %v2147, %v2231
        %v2248 = vadd.f32 %v2148, %v2232
        %v2249 = vadd.f32 %v2149, %v2233
        %v2250 = vadd.f32 %v2150, %v2234
        %2251 = vset.pattern.permute.xlu0 6
        %2252 = vperm.xlu0 %2251, %v1611
        %v2253 = vpop.permute.xlu0 %2252
        %2255 = vset.pattern.permute.xlu0 6
        %2256 = vperm.xlu0 %2255, %v1612
        %v2257 = vpop.permute.xlu0 %2256
        %2259 = vset.pattern.permute.xlu0 6
        %2260 = vperm.xlu0 %2259, %v1613
        %v2261 = vpop.permute.xlu0 %2260
        %2263 = vset.pattern.permute.xlu0 6
        %2264 = vperm.xlu0 %2263, %v1614
        %v2265 = vpop.permute.xlu0 %2264
        %2267 = vset.pattern.permute.xlu0 6
        %2268 = vperm.xlu0 %2267, %v1615
        %v2269 = vpop.permute.xlu0 %2268
        %2271 = vset.pattern.permute.xlu0 6
        %2272 = vperm.xlu0 %2271, %v1616
        %v2273 = vpop.permute.xlu0 %2272
        %2275 = vset.pattern.permute.xlu0 6
        %2276 = vperm.xlu0 %2275, %v1617
        %v2277 = vpop.permute.xlu0 %2276
        %2279 = vset.pattern.permute.xlu0 6
        %2280 = vperm.xlu0 %2279, %v1618
        %v2281 = vpop.permute.xlu0 %2280
        %2283 = vset.pattern.permute.xlu0 6
        %2284 = vperm.xlu0 %2283, %v1619
        %v2285 = vpop.permute.xlu0 %2284
        %2287 = vset.pattern.permute.xlu0 6
        %2288 = vperm.xlu0 %2287, %v1620
        %v2289 = vpop.permute.xlu0 %2288
        %2291 = vset.pattern.permute.xlu0 6
        %2292 = vperm.xlu0 %2291, %v1621
        %v2293 = vpop.permute.xlu0 %2292
        %2295 = vset.pattern.permute.xlu0 6
        %2296 = vperm.xlu0 %2295, %v1622
        %v2297 = vpop.permute.xlu0 %2296
        %2299 = vset.pattern.permute.xlu0 6
        %2300 = vperm.xlu0 %2299, %v1623
        %v2301 = vpop.permute.xlu0 %2300
        %2303 = vset.pattern.permute.xlu0 6
        %2304 = vperm.xlu0 %2303, %v1624
        %v2305 = vpop.permute.xlu0 %2304
        %2307 = vset.pattern.permute.xlu0 6
        %2308 = vperm.xlu0 %2307, %v1625
        %v2309 = vpop.permute.xlu0 %2308
        %2311 = vset.pattern.permute.xlu0 6
        %2312 = vperm.xlu0 %2311, %v1626
        %v2313 = vpop.permute.xlu0 %2312
        %v2315 = vlaneseq
        %v2316 = vshrl.u32 %v2315, 7
        %v2317 = vsub.s32 6, %v2316
        %v2318 = vrot.slane %v1627, %v2317
        %v2319 = vmul.f32 %v2253, %v2318
        %v2320 = vmul.f32 %v2257, %v2318
        %v2321 = vmul.f32 %v2261, %v2318
        %v2322 = vmul.f32 %v2265, %v2318
        %v2323 = vmul.f32 %v2269, %v2318
        %v2324 = vmul.f32 %v2273, %v2318
        %v2325 = vmul.f32 %v2277, %v2318
        %v2326 = vmul.f32 %v2281, %v2318
        %v2327 = vmul.f32 %v2285, %v2318
        %v2328 = vmul.f32 %v2289, %v2318
        %v2329 = vmul.f32 %v2293, %v2318
        %v2330 = vmul.f32 %v2297, %v2318
        %v2331 = vmul.f32 %v2301, %v2318
        %v2332 = vmul.f32 %v2305, %v2318
        %v2333 = vmul.f32 %v2309, %v2318
        %v2334 = vmul.f32 %v2313, %v2318
        %v2335 = vadd.f32 %v2235, %v2319
        %v2336 = vadd.f32 %v2236, %v2320
        %v2337 = vadd.f32 %v2237, %v2321
        %v2338 = vadd.f32 %v2238, %v2322
        %v2339 = vadd.f32 %v2239, %v2323
        %v2340 = vadd.f32 %v2240, %v2324
        %v2341 = vadd.f32 %v2241, %v2325
        %v2342 = vadd.f32 %v2242, %v2326
        %v2343 = vadd.f32 %v2243, %v2327
        %v2344 = vadd.f32 %v2244, %v2328
        %v2345 = vadd.f32 %v2245, %v2329
        %v2346 = vadd.f32 %v2246, %v2330
        %v2347 = vadd.f32 %v2247, %v2331
        %v2348 = vadd.f32 %v2248, %v2332
        %v2349 = vadd.f32 %v2249, %v2333
        %v2350 = vadd.f32 %v2250, %v2334
        %2351 = vset.pattern.permute.xlu0 7
        %2352 = vperm.xlu0 %2351, %v1611
        %v2353 = vpop.permute.xlu0 %2352
        %2355 = vset.pattern.permute.xlu0 7
        %2356 = vperm.xlu0 %2355, %v1612
        %v2357 = vpop.permute.xlu0 %2356
        %2359 = vset.pattern.permute.xlu0 7
        %2360 = vperm.xlu0 %2359, %v1613
        %v2361 = vpop.permute.xlu0 %2360
        %2363 = vset.pattern.permute.xlu0 7
        %2364 = vperm.xlu0 %2363, %v1614
        %v2365 = vpop.permute.xlu0 %2364
        %2367 = vset.pattern.permute.xlu0 7
        %2368 = vperm.xlu0 %2367, %v1615
        %v2369 = vpop.permute.xlu0 %2368
        %2371 = vset.pattern.permute.xlu0 7
        %2372 = vperm.xlu0 %2371, %v1616
        %v2373 = vpop.permute.xlu0 %2372
        %2375 = vset.pattern.permute.xlu0 7
        %2376 = vperm.xlu0 %2375, %v1617
        %v2377 = vpop.permute.xlu0 %2376
        %2379 = vset.pattern.permute.xlu0 7
        %2380 = vperm.xlu0 %2379, %v1618
        %v2381 = vpop.permute.xlu0 %2380
        %2383 = vset.pattern.permute.xlu0 7
        %2384 = vperm.xlu0 %2383, %v1619
        %v2385 = vpop.permute.xlu0 %2384
        %2387 = vset.pattern.permute.xlu0 7
        %2388 = vperm.xlu0 %2387, %v1620
        %v2389 = vpop.permute.xlu0 %2388
        %2391 = vset.pattern.permute.xlu0 7
        %2392 = vperm.xlu0 %2391, %v1621
        %v2393 = vpop.permute.xlu0 %2392
        %2395 = vset.pattern.permute.xlu0 7
        %2396 = vperm.xlu0 %2395, %v1622
        %v2397 = vpop.permute.xlu0 %2396
        %2399 = vset.pattern.permute.xlu0 7
        %2400 = vperm.xlu0 %2399, %v1623
        %v2401 = vpop.permute.xlu0 %2400
        %2403 = vset.pattern.permute.xlu0 7
        %2404 = vperm.xlu0 %2403, %v1624
        %v2405 = vpop.permute.xlu0 %2404
        %2407 = vset.pattern.permute.xlu0 7
        %2408 = vperm.xlu0 %2407, %v1625
        %v2409 = vpop.permute.xlu0 %2408
        %2411 = vset.pattern.permute.xlu0 7
        %2412 = vperm.xlu0 %2411, %v1626
        %v2413 = vpop.permute.xlu0 %2412
        %v2415 = vlaneseq
        %v2416 = vshrl.u32 %v2415, 7
        %v2417 = vsub.s32 7, %v2416
        %v2418 = vrot.slane %v1627, %v2417
        %v2419 = vmul.f32 %v2353, %v2418
        %v2420 = vmul.f32 %v2357, %v2418
        %v2421 = vmul.f32 %v2361, %v2418
        %v2422 = vmul.f32 %v2365, %v2418
        %v2423 = vmul.f32 %v2369, %v2418
        %v2424 = vmul.f32 %v2373, %v2418
        %v2425 = vmul.f32 %v2377, %v2418
        %v2426 = vmul.f32 %v2381, %v2418
        %v2427 = vmul.f32 %v2385, %v2418
        %v2428 = vmul.f32 %v2389, %v2418
        %v2429 = vmul.f32 %v2393, %v2418
        %v2430 = vmul.f32 %v2397, %v2418
        %v2431 = vmul.f32 %v2401, %v2418
        %v2432 = vmul.f32 %v2405, %v2418
        %v2433 = vmul.f32 %v2409, %v2418
        %v2434 = vmul.f32 %v2413, %v2418
        %v2435 = vadd.f32 %v2335, %v2419
        %v2436 = vadd.f32 %v2336, %v2420
        %v2437 = vadd.f32 %v2337, %v2421
        %v2438 = vadd.f32 %v2338, %v2422
        %v2439 = vadd.f32 %v2339, %v2423
        %v2440 = vadd.f32 %v2340, %v2424
        %v2441 = vadd.f32 %v2341, %v2425
        %v2442 = vadd.f32 %v2342, %v2426
        %v2443 = vadd.f32 %v2343, %v2427
        %v2444 = vadd.f32 %v2344, %v2428
        %v2445 = vadd.f32 %v2345, %v2429
        %v2446 = vadd.f32 %v2346, %v2430
        %v2447 = vadd.f32 %v2347, %v2431
        %v2448 = vadd.f32 %v2348, %v2432
        %v2449 = vadd.f32 %v2349, %v2433
        %v2450 = vadd.f32 %v2350, %v2434
        %v2451 = vmax.f32 %v2435, 0.0
        %v2452 = vmax.f32 %v2436, 0.0
        %v2453 = vmax.f32 %v2437, 0.0
        %v2454 = vmax.f32 %v2438, 0.0
        %v2455 = vmax.f32 %v2439, 0.0
        %v2456 = vmax.f32 %v2440, 0.0
        %v2457 = vmax.f32 %v2441, 0.0
        %v2458 = vmax.f32 %v2442, 0.0
        %v2459 = vmax.f32 %v2443, 0.0
        %v2460 = vmax.f32 %v2444, 0.0
        %v2461 = vmax.f32 %v2445, 0.0
        %v2462 = vmax.f32 %v2446, 0.0
        %v2463 = vmax.f32 %v2447, 0.0
        %v2464 = vmax.f32 %v2448, 0.0
        %v2465 = vmax.f32 %v2449, 0.0
        %v2466 = vmax.f32 %v2450, 0.0
        %v2467 = vld [vmem:[%s10] sm:$0xff]
        %v2468 = vld [vmem:[%s10 + $0x8] sm:$0xff]
        %v2469 = vld [vmem:[%s10 + $0x10] sm:$0xff]
        %v2470 = vld [vmem:[%s10 + $0x18] sm:$0xff]
        %v2471 = vld [vmem:[%s11] sm:$0x1]
        %v2473 = vlaneseq
        %v2474 = vshrl.u32 %v2473, 7
        %v2475 = vsub.s32 0, %v2474
        %v2476 = vrot.slane %v2471, %v2475
        %v2479 = vsel %vm828, %v2451, 0
        %v2482 = vsel %vm828, %v2452, 0
        %v2485 = vsel %vm828, %v2453, 0
        %v2488 = vsel %vm828, %v2454, 0
        %v2491 = vsel %vm828, %v2455, 0
        %v2494 = vsel %vm828, %v2456, 0
        %v2497 = vsel %vm828, %v2457, 0
        %v2500 = vsel %vm828, %v2458, 0
        %v2503 = vsel %vm828, %v2459, 0
        %v2506 = vsel %vm828, %v2460, 0
        %v2509 = vsel %vm828, %v2461, 0
        %v2512 = vsel %vm828, %v2462, 0
        %v2515 = vsel %vm828, %v2463, 0
        %v2518 = vsel %vm828, %v2464, 0
        %v2521 = vsel %vm828, %v2465, 0
        %v2524 = vsel %vm828, %v2466, 0
        %2526 = vmatprep.subr.mxu0 0.0
        %2527 = vmatpush1.msra.mxu0 %v2467
        %2528 = vmatprep.subr.mxu0 0.0
        %2529 = vmatpush1.msra.mxu0 %v2468
        %2530 = vmatprep.subr.mxu0 0.0
        %2531 = vmatpush1.msra.mxu0 %v2469
        %2532 = vmatprep.subr.mxu0 0.0
        %2533 = vmatpush1.msra.mxu0 %v2470
        %2534 = vmatprep.subr.mxu0 0.0
        %2535 = vmatpush1.msra.mxu0 0.0
        %2536 = vmatprep.subr.mxu0 0.0
        %2537 = vmatpush1.msra.mxu0 0.0
        %2538 = vmatprep.subr.mxu0 0.0
        %2539 = vmatpush1.msra.mxu0 0.0
        %2540 = vmatprep.subr.mxu0 0.0
        %2541 = vmatpush1.msra.mxu0 0.0
        %2542 = vmatprep.subr.mxu0 0.0
        %2543 = vmatpush1.msra.mxu0 0.0
        %2544 = vmatprep.subr.mxu0 0.0
        %2545 = vmatpush1.msra.mxu0 0.0
        %2546 = vmatprep.subr.mxu0 0.0
        %2547 = vmatpush1.msra.mxu0 0.0
        %2548 = vmatprep.subr.mxu0 0.0
        %2549 = vmatpush1.msra.mxu0 0.0
        %2550 = vmatprep.subr.mxu0 0.0
        %2551 = vmatpush1.msra.mxu0 0.0
        %2552 = vmatprep.subr.mxu0 0.0
        %2553 = vmatpush1.msra.mxu0 0.0
        %2554 = vmatprep.subr.mxu0 0.0
        %2555 = vmatpush1.msra.mxu0 0.0
        %2556 = vmatprep.subr.mxu0 0.0
        %2557 = vmatpush1.msra.mxu0 0.0
        %2558 = vmatprep.subr.mxu0 0.0
        %2559 = vmatpush1.msra.mxu0 0.0
        %2560 = vmatprep.subr.mxu0 0.0
        %2561 = vmatpush1.msra.mxu0 0.0
        %2562 = vmatprep.subr.mxu0 0.0
        %2563 = vmatpush1.msra.mxu0 0.0
        %2564 = vmatprep.subr.mxu0 0.0
        %2565 = vmatpush1.msra.mxu0 0.0
        %2566 = vmatprep.subr.mxu0 0.0
        %2567 = vmatpush1.msra.mxu0 0.0
        %2568 = vmatprep.subr.mxu0 0.0
        %2569 = vmatpush1.msra.mxu0 0.0
        %2570 = vmatprep.subr.mxu0 0.0
        %2571 = vmatpush1.msra.mxu0 0.0
        %2572 = vmatprep.subr.mxu0 0.0
        %2573 = vmatpush1.msra.mxu0 0.0
        %2574 = vmatprep.subr.mxu0 0.0
        %2575 = vmatpush1.msra.mxu0 0.0
        %2576 = vmatprep.subr.mxu0 0.0
        %2577 = vmatpush1.msra.mxu0 0.0
        %2578 = vmatprep.subr.mxu0 0.0
        %2579 = vmatpush1.msra.mxu0 0.0
        %2580 = vmatprep.subr.mxu0 0.0
        %2581 = vmatpush1.msra.mxu0 0.0
        %2582 = vmatprep.subr.mxu0 0.0
        %2583 = vmatpush1.msra.mxu0 0.0
        %2584 = vmatprep.subr.mxu0 0.0
        %2585 = vmatpush1.msra.mxu0 0.0
        %2586 = vmatprep.subr.mxu0 0.0
        %2587 = vmatpush1.msra.mxu0 0.0
        %2588 = vmatprep.subr.mxu0 0.0
        %2589 = vmatpush1.msra.mxu0 0.0
        %2590 = vmatprep.mubr.f32.mxu0 0.0
        %2591 = vmatmul.mubr.f32.gmra.mrb[0].mxu0 %v2479
        %v2592 = vpop.f32.mrb[0].mxu0
        %v2593 = vadd.f32 %v2476, %v2592
        %v2594 = vpop.f32.mrb[0].mxu0
        %2595 = vmatprep.mubr.f32.mxu0 0.0
        %2596 = vmatmul.mubr.f32.gmra.mrb[0].mxu0 %v2482
        %v2597 = vpop.f32.mrb[0].mxu0
        %v2598 = vadd.f32 %v2476, %v2597
        %v2599 = vpop.f32.mrb[0].mxu0
        %2600 = vmatprep.mubr.f32.mxu0 0.0
        %2601 = vmatmul.mubr.f32.gmra.mrb[0].mxu0 %v2485
        %v2602 = vpop.f32.mrb[0].mxu0
        %v2603 = vadd.f32 %v2476, %v2602
        %v2604 = vpop.f32.mrb[0].mxu0
        %2605 = vmatprep.mubr.f32.mxu0 0.0
        %2606 = vmatmul.mubr.f32.gmra.mrb[0].mxu0 %v2488
        %v2607 = vpop.f32.mrb[0].mxu0
        %v2608 = vadd.f32 %v2476, %v2607
        %v2609 = vpop.f32.mrb[0].mxu0
        %2610 = vmatprep.mubr.f32.mxu0 0.0
        %2611 = vmatmul.mubr.f32.gmra.mrb[0].mxu0 %v2491
        %v2612 = vpop.f32.mrb[0].mxu0
        %v2613 = vadd.f32 %v2476, %v2612
        %v2614 = vpop.f32.mrb[0].mxu0
        %2615 = vmatprep.mubr.f32.mxu0 0.0
        %2616 = vmatmul.mubr.f32.gmra.mrb[0].mxu0 %v2494
        %v2617 = vpop.f32.mrb[0].mxu0
        %v2618 = vadd.f32 %v2476, %v2617
        %v2619 = vpop.f32.mrb[0].mxu0
        %2620 = vmatprep.mubr.f32.mxu0 0.0
        %2621 = vmatmul.mubr.f32.gmra.mrb[0].mxu0 %v2497
        %v2622 = vpop.f32.mrb[0].mxu0
        %v2623 = vadd.f32 %v2476, %v2622
        %v2624 = vpop.f32.mrb[0].mxu0
        %2625 = vmatprep.mubr.f32.mxu0 0.0
        %2626 = vmatmul.mubr.f32.gmra.mrb[0].mxu0 %v2500
        %v2627 = vpop.f32.mrb[0].mxu0
        %v2628 = vadd.f32 %v2476, %v2627
        %v2629 = vpop.f32.mrb[0].mxu0
        %2630 = vmatprep.mubr.f32.mxu0 0.0
        %2631 = vmatmul.mubr.f32.gmra.mrb[0].mxu0 %v2503
        %v2632 = vpop.f32.mrb[0].mxu0
        %v2633 = vadd.f32 %v2476, %v2632
        %v2634 = vpop.f32.mrb[0].mxu0
        %2635 = vmatprep.mubr.f32.mxu0 0.0
        %2636 = vmatmul.mubr.f32.gmra.mrb[0].mxu0 %v2506
        %v2637 = vpop.f32.mrb[0].mxu0
        %v2638 = vadd.f32 %v2476, %v2637
        %v2639 = vpop.f32.mrb[0].mxu0
        %2640 = vmatprep.mubr.f32.mxu0 0.0
        %2641 = vmatmul.mubr.f32.gmra.mrb[0].mxu0 %v2509
        %v2642 = vpop.f32.mrb[0].mxu0
        %v2643 = vadd.f32 %v2476, %v2642
        %v2644 = vpop.f32.mrb[0].mxu0
        %2645 = vmatprep.mubr.f32.mxu0 0.0
        %2646 = vmatmul.mubr.f32.gmra.mrb[0].mxu0 %v2512
        %v2647 = vpop.f32.mrb[0].mxu0
        %v2648 = vadd.f32 %v2476, %v2647
        %v2649 = vpop.f32.mrb[0].mxu0
        %2650 = vmatprep.mubr.f32.mxu0 0.0
        %2651 = vmatmul.mubr.f32.gmra.mrb[0].mxu0 %v2515
        %v2652 = vpop.f32.mrb[0].mxu0
        %v2653 = vadd.f32 %v2476, %v2652
        %v2654 = vpop.f32.mrb[0].mxu0
        %2655 = vmatprep.mubr.f32.mxu0 0.0
        %2656 = vmatmul.mubr.f32.gmra.mrb[0].mxu0 %v2518
        %v2657 = vpop.f32.mrb[0].mxu0
        %v2658 = vadd.f32 %v2476, %v2657
        %v2659 = vpop.f32.mrb[0].mxu0
        %2660 = vmatprep.mubr.f32.mxu0 0.0
        %2661 = vmatmul.mubr.f32.gmra.mrb[0].mxu0 %v2521
        %v2662 = vpop.f32.mrb[0].mxu0
        %v2663 = vadd.f32 %v2476, %v2662
        %v2664 = vpop.f32.mrb[0].mxu0
        %2665 = vmatprep.mubr.f32.mxu0 0.0
        %2666 = vmatmul.mubr.f32.gmra.mrb[0].mxu0 %v2524
        %v2667 = vpop.f32.mrb[0].mxu0
        %v2668 = vadd.f32 %v2476, %v2667
        %v2669 = vpop.f32.mrb[0].mxu0
        %2670 = vdwg.mxu0
        %v2671 = vmax.f32 %v2593, 0.0
        %v2672 = vmax.f32 %v2598, 0.0
        %v2673 = vmax.f32 %v2603, 0.0
        %v2674 = vmax.f32 %v2608, 0.0
        %v2675 = vmax.f32 %v2613, 0.0
        %v2676 = vmax.f32 %v2618, 0.0
        %v2677 = vmax.f32 %v2623, 0.0
        %v2678 = vmax.f32 %v2628, 0.0
        %v2679 = vmax.f32 %v2633, 0.0
        %v2680 = vmax.f32 %v2638, 0.0
        %v2681 = vmax.f32 %v2643, 0.0
        %v2682 = vmax.f32 %v2648, 0.0
        %v2683 = vmax.f32 %v2653, 0.0
        %v2684 = vmax.f32 %v2658, 0.0
        %v2685 = vmax.f32 %v2663, 0.0
        %v2686 = vmax.f32 %v2668, 0.0
        %v2687 = vld [vmem:[%s12] sm:$0xff]
        %v2688 = vld [vmem:[%s12 + $0x8] sm:$0xff]
        %v2689 = vld [vmem:[%s12 + $0x10] sm:$0xff]
        %v2690 = vld [vmem:[%s12 + $0x18] sm:$0xff]
        %v2691 = vld [vmem:[%s13] sm:$0x1]
        %v2693 = vlaneseq
        %v2694 = vshrl.u32 %v2693, 7
        %v2695 = vsub.s32 0, %v2694
        %v2696 = vrot.slane %v2691, %v2695
        %v2699 = vsel %vm828, %v2671, 0
        %v2702 = vsel %vm828, %v2672, 0
        %v2705 = vsel %vm828, %v2673, 0
        %v2708 = vsel %vm828, %v2674, 0
        %v2711 = vsel %vm828, %v2675, 0
        %v2714 = vsel %vm828, %v2676, 0
        %v2717 = vsel %vm828, %v2677, 0
        %v2720 = vsel %vm828, %v2678, 0
        %v2723 = vsel %vm828, %v2679, 0
        %v2726 = vsel %vm828, %v2680, 0
        %v2729 = vsel %vm828, %v2681, 0
        %v2732 = vsel %vm828, %v2682, 0
        %v2735 = vsel %vm828, %v2683, 0
        %v2738 = vsel %vm828, %v2684, 0
        %v2741 = vsel %vm828, %v2685, 0
        %v2744 = vsel %vm828, %v2686, 0
        %2746 = vmatprep.subr.mxu0 0.0
        %2747 = vmatpush1.msra.mxu0 %v2687
        %2748 = vmatprep.subr.mxu0 0.0
        %2749 = vmatpush1.msra.mxu0 %v2688
        %2750 = vmatprep.subr.mxu0 0.0
        %2751 = vmatpush1.msra.mxu0 %v2689
        %2752 = vmatprep.subr.mxu0 0.0
        %2753 = vmatpush1.msra.mxu0 %v2690
        %2754 = vmatprep.subr.mxu0 0.0
        %2755 = vmatpush1.msra.mxu0 0.0
        %2756 = vmatprep.subr.mxu0 0.0
        %2757 = vmatpush1.msra.mxu0 0.0
        %2758 = vmatprep.subr.mxu0 0.0
        %2759 = vmatpush1.msra.mxu0 0.0
        %2760 = vmatprep.subr.mxu0 0.0
        %2761 = vmatpush1.msra.mxu0 0.0
        %2762 = vmatprep.subr.mxu0 0.0
        %2763 = vmatpush1.msra.mxu0 0.0
        %2764 = vmatprep.subr.mxu0 0.0
        %2765 = vmatpush1.msra.mxu0 0.0
        %2766 = vmatprep.subr.mxu0 0.0
        %2767 = vmatpush1.msra.mxu0 0.0
        %2768 = vmatprep.subr.mxu0 0.0
        %2769 = vmatpush1.msra.mxu0 0.0
        %2770 = vmatprep.subr.mxu0 0.0
        %2771 = vmatpush1.msra.mxu0 0.0
        %2772 = vmatprep.subr.mxu0 0.0
        %2773 = vmatpush1.msra.mxu0 0.0
        %2774 = vmatprep.subr.mxu0 0.0
        %2775 = vmatpush1.msra.mxu0 0.0
        %2776 = vmatprep.subr.mxu0 0.0
        %2777 = vmatpush1.msra.mxu0 0.0
        %2778 = vmatprep.subr.mxu0 0.0
        %2779 = vmatpush1.msra.mxu0 0.0
        %2780 = vmatprep.subr.mxu0 0.0
        %2781 = vmatpush1.msra.mxu0 0.0
        %2782 = vmatprep.subr.mxu0 0.0
        %2783 = vmatpush1.msra.mxu0 0.0
        %2784 = vmatprep.subr.mxu0 0.0
        %2785 = vmatpush1.msra.mxu0 0.0
        %2786 = vmatprep.subr.mxu0 0.0
        %2787 = vmatpush1.msra.mxu0 0.0
        %2788 = vmatprep.subr.mxu0 0.0
        %2789 = vmatpush1.msra.mxu0 0.0
        %2790 = vmatprep.subr.mxu0 0.0
        %2791 = vmatpush1.msra.mxu0 0.0
        %2792 = vmatprep.subr.mxu0 0.0
        %2793 = vmatpush1.msra.mxu0 0.0
        %2794 = vmatprep.subr.mxu0 0.0
        %2795 = vmatpush1.msra.mxu0 0.0
        %2796 = vmatprep.subr.mxu0 0.0
        %2797 = vmatpush1.msra.mxu0 0.0
        %2798 = vmatprep.subr.mxu0 0.0
        %2799 = vmatpush1.msra.mxu0 0.0
        %2800 = vmatprep.subr.mxu0 0.0
        %2801 = vmatpush1.msra.mxu0 0.0
        %2802 = vmatprep.subr.mxu0 0.0
        %2803 = vmatpush1.msra.mxu0 0.0
        %2804 = vmatprep.subr.mxu0 0.0
        %2805 = vmatpush1.msra.mxu0 0.0
        %2806 = vmatprep.subr.mxu0 0.0
        %2807 = vmatpush1.msra.mxu0 0.0
        %2808 = vmatprep.subr.mxu0 0.0
        %2809 = vmatpush1.msra.mxu0 0.0
        %2810 = vmatprep.mubr.f32.mxu0 0.0
        %2811 = vmatmul.mubr.f32.gmra.mrb[0].mxu0 %v2699
        %v2812 = vpop.f32.mrb[0].mxu0
        %v2813 = vadd.f32 %v2696, %v2812
        %v2814 = vpop.f32.mrb[0].mxu0
        %2815 = vmatprep.mubr.f32.mxu0 0.0
        %2816 = vmatmul.mubr.f32.gmra.mrb[0].mxu0 %v2702
        %v2817 = vpop.f32.mrb[0].mxu0
        %v2818 = vadd.f32 %v2696, %v2817
        %v2819 = vpop.f32.mrb[0].mxu0
        %2820 = vmatprep.mubr.f32.mxu0 0.0
        %2821 = vmatmul.mubr.f32.gmra.mrb[0].mxu0 %v2705
        %v2822 = vpop.f32.mrb[0].mxu0
        %v2823 = vadd.f32 %v2696, %v2822
        %v2824 = vpop.f32.mrb[0].mxu0
        %2825 = vmatprep.mubr.f32.mxu0 0.0
        %2826 = vmatmul.mubr.f32.gmra.mrb[0].mxu0 %v2708
        %v2827 = vpop.f32.mrb[0].mxu0
        %v2828 = vadd.f32 %v2696, %v2827
        %v2829 = vpop.f32.mrb[0].mxu0
        %2830 = vmatprep.mubr.f32.mxu0 0.0
        %2831 = vmatmul.mubr.f32.gmra.mrb[0].mxu0 %v2711
        %v2832 = vpop.f32.mrb[0].mxu0
        %v2833 = vadd.f32 %v2696, %v2832
        %v2834 = vpop.f32.mrb[0].mxu0
        %2835 = vmatprep.mubr.f32.mxu0 0.0
        %2836 = vmatmul.mubr.f32.gmra.mrb[0].mxu0 %v2714
        %v2837 = vpop.f32.mrb[0].mxu0
        %v2838 = vadd.f32 %v2696, %v2837
        %v2839 = vpop.f32.mrb[0].mxu0
        %2840 = vmatprep.mubr.f32.mxu0 0.0
        %2841 = vmatmul.mubr.f32.gmra.mrb[0].mxu0 %v2717
        %v2842 = vpop.f32.mrb[0].mxu0
        %v2843 = vadd.f32 %v2696, %v2842
        %v2844 = vpop.f32.mrb[0].mxu0
        %2845 = vmatprep.mubr.f32.mxu0 0.0
        %2846 = vmatmul.mubr.f32.gmra.mrb[0].mxu0 %v2720
        %v2847 = vpop.f32.mrb[0].mxu0
        %v2848 = vadd.f32 %v2696, %v2847
        %v2849 = vpop.f32.mrb[0].mxu0
        %2850 = vmatprep.mubr.f32.mxu0 0.0
        %2851 = vmatmul.mubr.f32.gmra.mrb[0].mxu0 %v2723
        %v2852 = vpop.f32.mrb[0].mxu0
        %v2853 = vadd.f32 %v2696, %v2852
        %v2854 = vpop.f32.mrb[0].mxu0
        %2855 = vmatprep.mubr.f32.mxu0 0.0
        %2856 = vmatmul.mubr.f32.gmra.mrb[0].mxu0 %v2726
        %v2857 = vpop.f32.mrb[0].mxu0
        %v2858 = vadd.f32 %v2696, %v2857
        %v2859 = vpop.f32.mrb[0].mxu0
        %2860 = vmatprep.mubr.f32.mxu0 0.0
        %2861 = vmatmul.mubr.f32.gmra.mrb[0].mxu0 %v2729
        %v2862 = vpop.f32.mrb[0].mxu0
        %v2863 = vadd.f32 %v2696, %v2862
        %v2864 = vpop.f32.mrb[0].mxu0
        %2865 = vmatprep.mubr.f32.mxu0 0.0
        %2866 = vmatmul.mubr.f32.gmra.mrb[0].mxu0 %v2732
        %v2867 = vpop.f32.mrb[0].mxu0
        %v2868 = vadd.f32 %v2696, %v2867
        %v2869 = vpop.f32.mrb[0].mxu0
        %2870 = vmatprep.mubr.f32.mxu0 0.0
        %2871 = vmatmul.mubr.f32.gmra.mrb[0].mxu0 %v2735
        %v2872 = vpop.f32.mrb[0].mxu0
        %v2873 = vadd.f32 %v2696, %v2872
        %v2874 = vpop.f32.mrb[0].mxu0
        %2875 = vmatprep.mubr.f32.mxu0 0.0
        %2876 = vmatmul.mubr.f32.gmra.mrb[0].mxu0 %v2738
        %v2877 = vpop.f32.mrb[0].mxu0
        %v2878 = vadd.f32 %v2696, %v2877
        %v2879 = vpop.f32.mrb[0].mxu0
        %2880 = vmatprep.mubr.f32.mxu0 0.0
        %2881 = vmatmul.mubr.f32.gmra.mrb[0].mxu0 %v2741
        %v2882 = vpop.f32.mrb[0].mxu0
        %v2883 = vadd.f32 %v2696, %v2882
        %v2884 = vpop.f32.mrb[0].mxu0
        %2885 = vmatprep.mubr.f32.mxu0 0.0
        %2886 = vmatmul.mubr.f32.gmra.mrb[0].mxu0 %v2744
        %v2887 = vpop.f32.mrb[0].mxu0
        %v2888 = vadd.f32 %v2696, %v2887
        %v2889 = vpop.f32.mrb[0].mxu0
        %2890 = vdwg.mxu0
        %v2891 = vmax.f32 %v2813, 0.0
        %v2892 = vmax.f32 %v2818, 0.0
        %v2893 = vmax.f32 %v2823, 0.0
        %v2894 = vmax.f32 %v2828, 0.0
        %v2895 = vmax.f32 %v2833, 0.0
        %v2896 = vmax.f32 %v2838, 0.0
        %v2897 = vmax.f32 %v2843, 0.0
        %v2898 = vmax.f32 %v2848, 0.0
        %v2899 = vmax.f32 %v2853, 0.0
        %v2900 = vmax.f32 %v2858, 0.0
        %v2901 = vmax.f32 %v2863, 0.0
        %v2902 = vmax.f32 %v2868, 0.0
        %v2903 = vmax.f32 %v2873, 0.0
        %v2904 = vmax.f32 %v2878, 0.0
        %v2905 = vmax.f32 %v2883, 0.0
        %v2906 = vmax.f32 %v2888, 0.0
        %v2907 = vld [vmem:[%s14] sm:$0xff]
        %v2908 = vld [vmem:[%s14 + $0x8] sm:$0xff]
        %v2909 = vld [vmem:[%s14 + $0x10] sm:$0xff]
        %v2910 = vld [vmem:[%s14 + $0x18] sm:$0xff]
        %v2911 = vld [vmem:[%s15] sm:$0x1]
        %v2913 = vlaneseq
        %v2914 = vshrl.u32 %v2913, 7
        %v2915 = vsub.s32 0, %v2914
        %v2916 = vrot.slane %v2911, %v2915
        %v2919 = vsel %vm828, %v2891, 0
        %v2922 = vsel %vm828, %v2892, 0
        %v2925 = vsel %vm828, %v2893, 0
        %v2928 = vsel %vm828, %v2894, 0
        %v2931 = vsel %vm828, %v2895, 0
        %v2934 = vsel %vm828, %v2896, 0
        %v2937 = vsel %vm828, %v2897, 0
        %v2940 = vsel %vm828, %v2898, 0
        %v2943 = vsel %vm828, %v2899, 0
        %v2946 = vsel %vm828, %v2900, 0
        %v2949 = vsel %vm828, %v2901, 0
        %v2952 = vsel %vm828, %v2902, 0
        %v2955 = vsel %vm828, %v2903, 0
        %v2958 = vsel %vm828, %v2904, 0
        %v2961 = vsel %vm828, %v2905, 0
        %v2964 = vsel %vm828, %v2906, 0
        %2966 = vmatprep.subr.mxu0 0.0
        %2967 = vmatpush1.msra.mxu0 %v2907
        %2968 = vmatprep.subr.mxu0 0.0
        %2969 = vmatpush1.msra.mxu0 %v2908
        %2970 = vmatprep.subr.mxu0 0.0
        %2971 = vmatpush1.msra.mxu0 %v2909
        %2972 = vmatprep.subr.mxu0 0.0
        %2973 = vmatpush1.msra.mxu0 %v2910
        %2974 = vmatprep.subr.mxu0 0.0
        %2975 = vmatpush1.msra.mxu0 0.0
        %2976 = vmatprep.subr.mxu0 0.0
        %2977 = vmatpush1.msra.mxu0 0.0
        %2978 = vmatprep.subr.mxu0 0.0
        %2979 = vmatpush1.msra.mxu0 0.0
        %2980 = vmatprep.subr.mxu0 0.0
        %2981 = vmatpush1.msra.mxu0 0.0
        %2982 = vmatprep.subr.mxu0 0.0
        %2983 = vmatpush1.msra.mxu0 0.0
        %2984 = vmatprep.subr.mxu0 0.0
        %2985 = vmatpush1.msra.mxu0 0.0
        %2986 = vmatprep.subr.mxu0 0.0
        %2987 = vmatpush1.msra.mxu0 0.0
        %2988 = vmatprep.subr.mxu0 0.0
        %2989 = vmatpush1.msra.mxu0 0.0
        %2990 = vmatprep.subr.mxu0 0.0
        %2991 = vmatpush1.msra.mxu0 0.0
        %2992 = vmatprep.subr.mxu0 0.0
        %2993 = vmatpush1.msra.mxu0 0.0
        %2994 = vmatprep.subr.mxu0 0.0
        %2995 = vmatpush1.msra.mxu0 0.0
        %2996 = vmatprep.subr.mxu0 0.0
        %2997 = vmatpush1.msra.mxu0 0.0
        %2998 = vmatprep.subr.mxu0 0.0
        %2999 = vmatpush1.msra.mxu0 0.0
        %3000 = vmatprep.subr.mxu0 0.0
        %3001 = vmatpush1.msra.mxu0 0.0
        %3002 = vmatprep.subr.mxu0 0.0
        %3003 = vmatpush1.msra.mxu0 0.0
        %3004 = vmatprep.subr.mxu0 0.0
        %3005 = vmatpush1.msra.mxu0 0.0
        %3006 = vmatprep.subr.mxu0 0.0
        %3007 = vmatpush1.msra.mxu0 0.0
        %3008 = vmatprep.subr.mxu0 0.0
        %3009 = vmatpush1.msra.mxu0 0.0
        %3010 = vmatprep.subr.mxu0 0.0
        %3011 = vmatpush1.msra.mxu0 0.0
        %3012 = vmatprep.subr.mxu0 0.0
        %3013 = vmatpush1.msra.mxu0 0.0
        %3014 = vmatprep.subr.mxu0 0.0
        %3015 = vmatpush1.msra.mxu0 0.0
        %3016 = vmatprep.subr.mxu0 0.0
        %3017 = vmatpush1.msra.mxu0 0.0
        %3018 = vmatprep.subr.mxu0 0.0
        %3019 = vmatpush1.msra.mxu0 0.0
        %3020 = vmatprep.subr.mxu0 0.0
        %3021 = vmatpush1.msra.mxu0 0.0
        %3022 = vmatprep.subr.mxu0 0.0
        %3023 = vmatpush1.msra.mxu0 0.0
        %3024 = vmatprep.subr.mxu0 0.0
        %3025 = vmatpush1.msra.mxu0 0.0
        %3026 = vmatprep.subr.mxu0 0.0
        %3027 = vmatpush1.msra.mxu0 0.0
        %3028 = vmatprep.subr.mxu0 0.0
        %3029 = vmatpush1.msra.mxu0 0.0
        %3030 = vmatprep.mubr.f32.mxu0 0.0
        %3031 = vmatmul.mubr.f32.gmra.mrb[0].mxu0 %v2919
        %v3032 = vpop.f32.mrb[0].mxu0
        %v3033 = vadd.f32 %v2916, %v3032
        %v3034 = vpop.f32.mrb[0].mxu0
        %3035 = vmatprep.mubr.f32.mxu0 0.0
        %3036 = vmatmul.mubr.f32.gmra.mrb[0].mxu0 %v2922
        %v3037 = vpop.f32.mrb[0].mxu0
        %v3038 = vadd.f32 %v2916, %v3037
        %v3039 = vpop.f32.mrb[0].mxu0
        %3040 = vmatprep.mubr.f32.mxu0 0.0
        %3041 = vmatmul.mubr.f32.gmra.mrb[0].mxu0 %v2925
        %v3042 = vpop.f32.mrb[0].mxu0
        %v3043 = vadd.f32 %v2916, %v3042
        %v3044 = vpop.f32.mrb[0].mxu0
        %3045 = vmatprep.mubr.f32.mxu0 0.0
        %3046 = vmatmul.mubr.f32.gmra.mrb[0].mxu0 %v2928
        %v3047 = vpop.f32.mrb[0].mxu0
        %v3048 = vadd.f32 %v2916, %v3047
        %v3049 = vpop.f32.mrb[0].mxu0
        %3050 = vmatprep.mubr.f32.mxu0 0.0
        %3051 = vmatmul.mubr.f32.gmra.mrb[0].mxu0 %v2931
        %v3052 = vpop.f32.mrb[0].mxu0
        %v3053 = vadd.f32 %v2916, %v3052
        %v3054 = vpop.f32.mrb[0].mxu0
        %3055 = vmatprep.mubr.f32.mxu0 0.0
        %3056 = vmatmul.mubr.f32.gmra.mrb[0].mxu0 %v2934
        %v3057 = vpop.f32.mrb[0].mxu0
        %v3058 = vadd.f32 %v2916, %v3057
        %v3059 = vpop.f32.mrb[0].mxu0
        %3060 = vmatprep.mubr.f32.mxu0 0.0
        %3061 = vmatmul.mubr.f32.gmra.mrb[0].mxu0 %v2937
        %v3062 = vpop.f32.mrb[0].mxu0
        %v3063 = vadd.f32 %v2916, %v3062
        %v3064 = vpop.f32.mrb[0].mxu0
        %3065 = vmatprep.mubr.f32.mxu0 0.0
        %3066 = vmatmul.mubr.f32.gmra.mrb[0].mxu0 %v2940
        %v3067 = vpop.f32.mrb[0].mxu0
        %v3068 = vadd.f32 %v2916, %v3067
        %v3069 = vpop.f32.mrb[0].mxu0
        %3070 = vmatprep.mubr.f32.mxu0 0.0
        %3071 = vmatmul.mubr.f32.gmra.mrb[0].mxu0 %v2943
        %v3072 = vpop.f32.mrb[0].mxu0
        %v3073 = vadd.f32 %v2916, %v3072
        %v3074 = vpop.f32.mrb[0].mxu0
        %3075 = vmatprep.mubr.f32.mxu0 0.0
        %3076 = vmatmul.mubr.f32.gmra.mrb[0].mxu0 %v2946
        %v3077 = vpop.f32.mrb[0].mxu0
        %v3078 = vadd.f32 %v2916, %v3077
        %v3079 = vpop.f32.mrb[0].mxu0
        %3080 = vmatprep.mubr.f32.mxu0 0.0
        %3081 = vmatmul.mubr.f32.gmra.mrb[0].mxu0 %v2949
        %v3082 = vpop.f32.mrb[0].mxu0
        %v3083 = vadd.f32 %v2916, %v3082
        %v3084 = vpop.f32.mrb[0].mxu0
        %3085 = vmatprep.mubr.f32.mxu0 0.0
        %3086 = vmatmul.mubr.f32.gmra.mrb[0].mxu0 %v2952
        %v3087 = vpop.f32.mrb[0].mxu0
        %v3088 = vadd.f32 %v2916, %v3087
        %v3089 = vpop.f32.mrb[0].mxu0
        %3090 = vmatprep.mubr.f32.mxu0 0.0
        %3091 = vmatmul.mubr.f32.gmra.mrb[0].mxu0 %v2955
        %v3092 = vpop.f32.mrb[0].mxu0
        %v3093 = vadd.f32 %v2916, %v3092
        %v3094 = vpop.f32.mrb[0].mxu0
        %3095 = vmatprep.mubr.f32.mxu0 0.0
        %3096 = vmatmul.mubr.f32.gmra.mrb[0].mxu0 %v2958
        %v3097 = vpop.f32.mrb[0].mxu0
        %v3098 = vadd.f32 %v2916, %v3097
        %v3099 = vpop.f32.mrb[0].mxu0
        %3100 = vmatprep.mubr.f32.mxu0 0.0
        %3101 = vmatmul.mubr.f32.gmra.mrb[0].mxu0 %v2961
        %v3102 = vpop.f32.mrb[0].mxu0
        %v3103 = vadd.f32 %v2916, %v3102
        %v3104 = vpop.f32.mrb[0].mxu0
        %3105 = vmatprep.mubr.f32.mxu0 0.0
        %3106 = vmatmul.mubr.f32.gmra.mrb[0].mxu0 %v2964
        %v3107 = vpop.f32.mrb[0].mxu0
        %v3108 = vadd.f32 %v2916, %v3107
        %v3109 = vpop.f32.mrb[0].mxu0
        %3110 = vdwg.mxu0
        %3127 = vrot.lane.b32.xlu0 %v1373, 2
        %v3128 = vpop.permute.xlu0 %3127
        %3129 = vrot.lane.b32.xlu0 %v1378, 2
        %v3130 = vpop.permute.xlu0 %3129
        %3131 = vrot.lane.b32.xlu0 %v1383, 2
        %v3132 = vpop.permute.xlu0 %3131
        %3133 = vrot.lane.b32.xlu0 %v1388, 2
        %v3134 = vpop.permute.xlu0 %3133
        %3135 = vrot.lane.b32.xlu0 %v1393, 2
        %v3136 = vpop.permute.xlu0 %3135
        %3137 = vrot.lane.b32.xlu0 %v1398, 2
        %v3138 = vpop.permute.xlu0 %3137
        %3139 = vrot.lane.b32.xlu0 %v1403, 2
        %v3140 = vpop.permute.xlu0 %3139
        %3141 = vrot.lane.b32.xlu0 %v1408, 2
        %v3142 = vpop.permute.xlu0 %3141
        %3143 = vrot.lane.b32.xlu0 %v1413, 2
        %v3144 = vpop.permute.xlu0 %3143
        %3145 = vrot.lane.b32.xlu0 %v1418, 2
        %v3146 = vpop.permute.xlu0 %3145
        %3147 = vrot.lane.b32.xlu0 %v1423, 2
        %v3148 = vpop.permute.xlu0 %3147
        %3149 = vrot.lane.b32.xlu0 %v1428, 2
        %v3150 = vpop.permute.xlu0 %3149
        %3151 = vrot.lane.b32.xlu0 %v1433, 2
        %v3152 = vpop.permute.xlu0 %3151
        %3153 = vrot.lane.b32.xlu0 %v1438, 2
        %v3154 = vpop.permute.xlu0 %3153
        %3155 = vrot.lane.b32.xlu0 %v1443, 2
        %v3156 = vpop.permute.xlu0 %3155
        %3157 = vrot.lane.b32.xlu0 %v1448, 2
        %v3158 = vpop.permute.xlu0 %3157
        %3191 = vrot.lane.b32.xlu0 %v1467, 2
        %v3192 = vpop.permute.xlu0 %3191
        %3193 = vrot.lane.b32.xlu0 %v1468, 2
        %v3194 = vpop.permute.xlu0 %3193
        %3195 = vrot.lane.b32.xlu0 %v1469, 2
        %v3196 = vpop.permute.xlu0 %3195
        %3197 = vrot.lane.b32.xlu0 %v1470, 2
        %v3198 = vpop.permute.xlu0 %3197
        %3199 = vrot.lane.b32.xlu0 %v1471, 2
        %v3200 = vpop.permute.xlu0 %3199
        %3201 = vrot.lane.b32.xlu0 %v1472, 2
        %v3202 = vpop.permute.xlu0 %3201
        %3203 = vrot.lane.b32.xlu0 %v1473, 2
        %v3204 = vpop.permute.xlu0 %3203
        %3205 = vrot.lane.b32.xlu0 %v1474, 2
        %v3206 = vpop.permute.xlu0 %3205
        %3207 = vrot.lane.b32.xlu0 %v1475, 2
        %v3208 = vpop.permute.xlu0 %3207
        %3209 = vrot.lane.b32.xlu0 %v1476, 2
        %v3210 = vpop.permute.xlu0 %3209
        %3211 = vrot.lane.b32.xlu0 %v1477, 2
        %v3212 = vpop.permute.xlu0 %3211
        %3213 = vrot.lane.b32.xlu0 %v1478, 2
        %v3214 = vpop.permute.xlu0 %3213
        %3215 = vrot.lane.b32.xlu0 %v1479, 2
        %v3216 = vpop.permute.xlu0 %3215
        %3217 = vrot.lane.b32.xlu0 %v1480, 2
        %v3218 = vpop.permute.xlu0 %3217
        %3219 = vrot.lane.b32.xlu0 %v1481, 2
        %v3220 = vpop.permute.xlu0 %3219
        %3221 = vrot.lane.b32.xlu0 %v1482, 2
        %v3222 = vpop.permute.xlu0 %3221
        %vm3239 = vcmask 15360
        %v3240 = vsel %vm3239, %v3033, %v3128
        %v3241 = vsel %vm3239, %v3038, %v3130
        %v3242 = vsel %vm3239, %v3043, %v3132
        %v3243 = vsel %vm3239, %v3048, %v3134
        %v3244 = vsel %vm3239, %v3053, %v3136
        %v3245 = vsel %vm3239, %v3058, %v3138
        %v3246 = vsel %vm3239, %v3063, %v3140
        %v3247 = vsel %vm3239, %v3068, %v3142
        %v3248 = vsel %vm3239, %v3073, %v3144
        %v3249 = vsel %vm3239, %v3078, %v3146
        %v3250 = vsel %vm3239, %v3083, %v3148
        %v3251 = vsel %vm3239, %v3088, %v3150
        %v3252 = vsel %vm3239, %v3093, %v3152
        %v3253 = vsel %vm3239, %v3098, %v3154
        %v3254 = vsel %vm3239, %v3103, %v3156
        %v3255 = vsel %vm3239, %v3108, %v3158
        %vm3256 = vcmask 80896
        %v3257 = vsel %vm3256, %v3240, %v3192
        %v3258 = vsel %vm3256, %v3241, %v3194
        %v3259 = vsel %vm3256, %v3242, %v3196
        %v3260 = vsel %vm3256, %v3243, %v3198
        %v3261 = vsel %vm3256, %v3244, %v3200
        %v3262 = vsel %vm3256, %v3245, %v3202
        %v3263 = vsel %vm3256, %v3246, %v3204
        %v3264 = vsel %vm3256, %v3247, %v3206
        %v3265 = vsel %vm3256, %v3248, %v3208
        %v3266 = vsel %vm3256, %v3249, %v3210
        %v3267 = vsel %vm3256, %v3250, %v3212
        %v3268 = vsel %vm3256, %v3251, %v3214
        %v3269 = vsel %vm3256, %v3252, %v3216
        %v3270 = vsel %vm3256, %v3253, %v3218
        %v3271 = vsel %vm3256, %v3254, %v3220
        %v3272 = vsel %vm3256, %v3255, %v3222
        %vm3273 = vcmask 146432
        %v3274 = vsel %vm3273, %v3257, 0.0
        %v3275 = vsel %vm3273, %v3258, 0.0
        %v3276 = vsel %vm3273, %v3259, 0.0
        %v3277 = vsel %vm3273, %v3260, 0.0
        %v3278 = vsel %vm3273, %v3261, 0.0
        %v3279 = vsel %vm3273, %v3262, 0.0
        %v3280 = vsel %vm3273, %v3263, 0.0
        %v3281 = vsel %vm3273, %v3264, 0.0
        %v3282 = vsel %vm3273, %v3265, 0.0
        %v3283 = vsel %vm3273, %v3266, 0.0
        %v3284 = vsel %vm3273, %v3267, 0.0
        %v3285 = vsel %vm3273, %v3268, 0.0
        %v3286 = vsel %vm3273, %v3269, 0.0
        %v3287 = vsel %vm3273, %v3270, 0.0
        %v3288 = vsel %vm3273, %v3271, 0.0
        %v3289 = vsel %vm3273, %v3272, 0.0
        %3290 = vst [vmem:[%s531] sm:$0xff] %v3274
        %3291 = vst [vmem:[%s531 + $0x8] sm:$0xff] %v3275
        %3292 = vst [vmem:[%s531 + $0x10] sm:$0xff] %v3276
        %3293 = vst [vmem:[%s531 + $0x18] sm:$0xff] %v3277
        %3294 = vst [vmem:[%s531 + $0x20] sm:$0xff] %v3278
        %3295 = vst [vmem:[%s531 + $0x28] sm:$0xff] %v3279
        %3296 = vst [vmem:[%s531 + $0x30] sm:$0xff] %v3280
        %3297 = vst [vmem:[%s531 + $0x38] sm:$0xff] %v3281
        %3298 = vst [vmem:[%s531 + $0x40] sm:$0xff] %v3282
        %3299 = vst [vmem:[%s531 + $0x48] sm:$0xff] %v3283
        %3300 = vst [vmem:[%s531 + $0x50] sm:$0xff] %v3284
        %3301 = vst [vmem:[%s531 + $0x58] sm:$0xff] %v3285
        %3302 = vst [vmem:[%s531 + $0x60] sm:$0xff] %v3286
        %3303 = vst [vmem:[%s531 + $0x68] sm:$0xff] %v3287
        %3304 = vst [vmem:[%s531 + $0x70] sm:$0xff] %v3288
        %3305 = vst [vmem:[%s531 + $0x78] sm:$0xff] %v3289
        %s3306 = sand.u32 %s384, 1
        %s3307 = scalar_lea.sflag [#allocation3], %s3306
        %s3308 = sand.u32 %s384, 1
        %s3309 = smul.addr %s3308, 128
        %s3310 = scalar_lea.vmem [#allocation2], %s3309
        // Predicated region
        $region85: #{tpu_custom_call.1} parent=83 // pred_check
          %p3311 = pneg %p394
        $region86: #{tpu_custom_call.1} parent=83 // pred_check_branch
          %3313 = sbr.rel (%p3311) target = $region88
        $region87: #{tpu_custom_call.1} parent=83 // pred_region
          %s3314 = smul.u32 16, %s30
          %s3316 = ssub.s32 2048, 2048
          %3317 = vsyncadd %s3307, %s3316
          %s3318 = smul.addr %s3314, 128
          %s3319 = scalar_lea.hbm %s16, %s3318
          %s3320 = sshll.u32 %s3310, 4
          %s3321 = int_to_ptr.vmem [resolvable:$true] %s3320
          %3326 = dma.vmem_to_hbm [thread:$0]  %s3321, 2048, %s3319, %s3307, 128, 128, 8
        $region88: #{tpu_custom_call.1} parent=83 // pred_fallthru
          _
      $region84: #{tpu_custom_call.1} parent=5 // pred_fallthru
        _
      %p3327 = scmp.le.s32.totalorder 2, %s25
      // Predicated region
      $region89: #{tpu_custom_call.1} parent=5 // pred_check
        %p3328 = pneg %p3327
      $region90: #{tpu_custom_call.1} parent=5 // pred_check_branch
        %3330 = sbr.rel (%p3328) target = $region92
      $region91: #{tpu_custom_call.1} parent=5 // pred_region
        %s3331 = ssub.s32 %s25, 2
        // Predicated region
        $region93: #{tpu_custom_call.1} parent=91 // pred_check
          %p3332 = pneg %p400
        $region94: #{tpu_custom_call.1} parent=91 // pred_check_branch
          %3334 = sbr.rel (%p3332) target = $region96
        $region95: #{tpu_custom_call.1} parent=91 // pred_region
          %s3335 = sand.u32 %s385, 1
          %s3336 = scalar_lea.sflag [#allocation3], %s3335
          %s3337 = sand.u32 %s385, 1
          %s3338 = smul.addr %s3337, 128
          %s3339 = scalar_lea.vmem [#allocation2], %s3338
          %3340 = dma.done %s3336, 2048
        $region96: #{tpu_custom_call.1} parent=91 // pred_fallthru
          _
      $region92: #{tpu_custom_call.1} parent=5 // pred_fallthru
        _
    $region6: #{tpu_custom_call.1} parent=1 // loop_footer
      %s29 = sadd.s32 1, %s25
    $region7: #{tpu_custom_call.1} parent=1 // loop_footer_branch
      %24 = sbr.rel target = $region3
    $region8: #{tpu_custom_call.1} parent=1 // loop_exit
      _
    %3341 = vsyncpa [#allocation3], 1
    %s3342 = scalar_lea.sflag [#allocation3], 1
    %3343 = vsyncpa %s3342, 1

</llo_original>
